<compile_context>
chip_gen: v6e
topology: v6e:2x2x1
jax: 0.10.0
libtpu: 0.0.40
codegen_flags: <defaults>
</compile_context>

<pallas_src>
import functools

import jax
import jax.numpy as jnp
from jax.experimental import pallas as pl
from jax.experimental.pallas import tpu as pltpu

_VMEM_LIMIT = 32 * 1024 * 1024  # explicit scoped-VMEM limit (above v5e default)


def conv_stats_kernel(xt_ref, xm_ref, xb_ref, w_ref, b_ref,
                      y_ref, sum_ref, sq_ref, *, H, W):
    """One (sample, output-depth) slice of the 3x3x3 conv + BN partial stats."""
    d = pl.program_id(1)
    cin = xt_ref.shape[-1]
    cout = y_ref.shape[-1]

    w_all = w_ref[...].astype(jnp.float32)            # (3, 3, 3, Cin, Cout)
    acc = jnp.zeros((H * W, cout), jnp.float32)
    x_slices = (xt_ref, xm_ref, xb_ref)               # padded depths d, d+1, d+2
    for kd in range(3):
        xs = x_slices[kd][0, 0].astype(jnp.float32)   # (H+2, W+2, Cin)
        for kh in range(3):
            for kw in range(3):
                patch = xs[kh:kh + H, kw:kw + W, :].reshape(H * W, cin)
                acc = acc + jnp.dot(patch, w_all[kd, kh, kw],
                                    preferred_element_type=jnp.float32)
    acc = acc + b_ref[...].astype(jnp.float32)        # (1, Cout) broadcast

    y_ref[...] = acc.reshape(y_ref.shape).astype(y_ref.dtype)

    # Per-sample partial sums for the batch-norm statistics, accumulated across
    # the innermost ("arbitrary") depth grid axis.
    @pl.when(d == 0)
    def _zero():
        sum_ref[...] = jnp.zeros_like(sum_ref)
        sq_ref[...] = jnp.zeros_like(sq_ref)

    sum_ref[...] += jnp.sum(acc, axis=0).reshape(sum_ref.shape)
    sq_ref[...] += jnp.sum(acc * acc, axis=0).reshape(sq_ref.shape)


def bn_act_kernel(y_ref, scale_ref, shift_ref, alpha_ref, o_ref, *, act):
    """Elementwise batch-norm apply + activation on a (rows, C_out) tile."""
    z = y_ref[...].astype(jnp.float32) * scale_ref[...] + shift_ref[...]
    if act == "relu":
        z = jnp.maximum(z, 0.0)
    elif act == "elu":
        z = jnp.where(z > 0, z, jnp.exp(z) - 1.0)
    elif act == "prelu":
        z = jnp.where(z > 0, z, alpha_ref[...] * z)
    else:
        raise ValueError(f"unsupported activation: {act}")
    o_ref[...] = z.astype(o_ref.dtype)


def _pick_row_tile(rows, cols, budget_bytes=4 * 1024 * 1024):
    """Largest multiple-of-8 row tile dividing `rows` within a VMEM budget
    (in + out f32 blocks, double-buffered)."""
    per_row = max(1, cols * 4 * 4)
    cap = min(rows, max(8, budget_bytes // per_row))
    t = (cap // 8) * 8
    while t >= 8:
        if rows % t == 0:
            return t
        t -= 8
    return rows


def luconv_forward(x, w, b, gamma, beta, alpha=None, act="relu", eps=1e-5):
    """x: (N, Cin, D, H, W) f32; w: (Cout, Cin, 3, 3, 3); b/gamma/beta/alpha: (Cout,).
    Returns (N, Cout, D, H, W), matching LUConv.forward."""
    N, Cin, D, H, W = x.shape
    Cout = w.shape[0]
    HW = H * W

    # Channels-last + zero halo padding (layout glue in plain JAX).
    x_cl = jnp.transpose(x, (0, 2, 3, 4, 1))                        # (N, D, H, W, Cin)
    x_pad = jnp.pad(x_cl, ((0, 0), (1, 1), (1, 1), (1, 1), (0, 0)))
    w_t = jnp.transpose(w, (2, 3, 4, 1, 0)).astype(jnp.float32)     # (3,3,3,Cin,Cout)
    b2 = b.reshape(1, Cout).astype(jnp.float32)

    def x_spec(shift):
        return pl.BlockSpec((1, 1, H + 2, W + 2, Cin),
                            lambda n, d, s=shift: (n, d + s, 0, 0, 0))

    y, s_sum, s_sq = pl.pallas_call(
        functools.partial(conv_stats_kernel, H=H, W=W),
        out_shape=(
            jax.ShapeDtypeStruct((N, D, HW, Cout), jnp.float32),    # conv output
            jax.ShapeDtypeStruct((N, 1, Cout), jnp.float32),        # per-n sum
            jax.ShapeDtypeStruct((N, 1, Cout), jnp.float32),        # per-n sum of sq
        ),
        grid_spec=pltpu.PrefetchScalarGridSpec(
            num_scalar_prefetch=0,
            grid=(N, D),
            in_specs=[
                x_spec(0), x_spec(1), x_spec(2),                    # depth halo slices
                pl.BlockSpec((3, 3, 3, Cin, Cout), lambda n, d: (0, 0, 0, 0, 0)),
                pl.BlockSpec((1, Cout), lambda n, d: (0, 0)),
            ],
            out_specs=(
                pl.BlockSpec((1, 1, HW, Cout), lambda n, d: (n, d, 0, 0)),
                pl.BlockSpec((1, 1, Cout), lambda n, d: (n, 0, 0)),
                pl.BlockSpec((1, 1, Cout), lambda n, d: (n, 0, 0)),
            ),
        ),
        compiler_params=pltpu.CompilerParams(
            dimension_semantics=("parallel", "arbitrary"),
            vmem_limit_bytes=_VMEM_LIMIT,
        ),
    )(x_pad, x_pad, x_pad, w_t, b2)

    # Finalize batch statistics (tiny, O(Cout)) and fold gamma/beta into one FMA.
    count = float(N * D * H * W)
    total = jnp.sum(s_sum, axis=(0, 1))
    total_sq = jnp.sum(s_sq, axis=(0, 1))
    mean = total / count
    var = jnp.maximum(total_sq / count - mean * mean, 0.0)  # biased, as F.batch_norm(training=True)
    inv = gamma.astype(jnp.float32) / jnp.sqrt(var + eps)
    scale = inv.reshape(1, Cout)
    shift = (beta.astype(jnp.float32) - mean * inv).reshape(1, Cout)
    if alpha is None:
        alpha = jnp.zeros((Cout,), jnp.float32)
    alpha2 = jnp.broadcast_to(alpha.astype(jnp.float32), (Cout,)).reshape(1, Cout)

    rows = N * D * HW
    y2 = y.reshape(rows, Cout)
    tr = _pick_row_tile(rows, Cout)

    out2 = pl.pallas_call(
        functools.partial(bn_act_kernel, act=act),
        out_shape=jax.ShapeDtypeStruct((rows, Cout), x.dtype),
        grid_spec=pltpu.PrefetchScalarGridSpec(
            num_scalar_prefetch=0,
            grid=(rows // tr,),
            in_specs=[
                pl.BlockSpec((tr, Cout), lambda i: (i, 0)),
                pl.BlockSpec((1, Cout), lambda i: (0, 0)),
                pl.BlockSpec((1, Cout), lambda i: (0, 0)),
                pl.BlockSpec((1, Cout), lambda i: (0, 0)),
            ],
            out_specs=pl.BlockSpec((tr, Cout), lambda i: (i, 0)),
        ),
        compiler_params=pltpu.CompilerParams(
            dimension_semantics=("parallel",),
            vmem_limit_bytes=_VMEM_LIMIT,
        ),
    )(y2, scale, shift, alpha2)

    out = out2.reshape(N, D, H, W, Cout)
    return jnp.transpose(out, (0, 4, 1, 2, 3))                      # back to NCDHW


def luconv_reference(x, w, b, gamma, beta, alpha, act, eps=1e-5):
    """Pure-JAX reference of LUConv.forward (batch-stat batch norm)."""
    conv = jax.lax.conv_general_dilated(
        x, w, window_strides=(1, 1, 1),
        padding=((1, 1), (1, 1), (1, 1)),
        dimension_numbers=("NCDHW", "OIDHW", "NCDHW"),
        precision=jax.lax.Precision.HIGHEST,
    ) + b.reshape(1, -1, 1, 1, 1)
    mean = jnp.mean(conv, axis=(0, 2, 3, 4), keepdims=True)
    var = jnp.mean((conv - mean) ** 2, axis=(0, 2, 3, 4), keepdims=True)
    z = (conv - mean) / jnp.sqrt(var + eps)
    z = z * gamma.reshape(1, -1, 1, 1, 1) + beta.reshape(1, -1, 1, 1, 1)
    if act == "relu":
        return jnp.maximum(z, 0.0)
    if act == "elu":
        return jnp.where(z > 0, z, jnp.exp(z) - 1.0)
    return jnp.where(z > 0, z, alpha.reshape(1, -1, 1, 1, 1) * z)


if __name__ == "__main__":
    key = jax.random.PRNGKey(0)
    kx, kw_, kb, kg, kbe = jax.random.split(key, 5)

    # Small shapes: LUConv(in_chan=8, out_chan=16, act='relu') on a (2,8,8,8,8) volume.
    N, Cin, Cout, D, H, W = 2, 8, 16, 8, 8, 8
    act = "relu"

    x = jax.random.normal(kx, (N, Cin, D, H, W), dtype=jnp.float32)
    lim = 1.0 / (Cin * 27) ** 0.5
    w = jax.random.uniform(kw_, (Cout, Cin, 3, 3, 3), jnp.float32, -lim, lim)
    b = jax.random.uniform(kb, (Cout,), jnp.float32, -lim, lim)
    gamma = 1.0 + 0.1 * jax.random.normal(kg, (Cout,), jnp.float32)
    beta = 0.1 * jax.random.normal(kbe, (Cout,), jnp.float32)
    alpha = jnp.full((Cout,), 0.25, jnp.float32)  # only used when act == 'prelu'

    out = luconv_forward(x, w, b, gamma, beta, alpha, act=act)
    out = jax.block_until_ready(out)

    ref = luconv_reference(x, w, b, gamma, beta, alpha, act)
    assert out.shape == (N, Cout, D, H, W)
    max_err = float(jnp.max(jnp.abs(out - ref)))
    assert jnp.allclose(out, ref, atol=2e-3, rtol=2e-3), f"mismatch vs reference: {max_err}"

    print("KERNEL_OK")
</pallas_src>

<mosaic_0001>
module attributes {stable_mosaic.version = 11 : i64} {
  func.func @conv_stats_kernel(%arg0: i32, %arg1: i32, %arg2: memref<1x1x10x10x8xf32, #tpu.memory_space<vmem>>, %arg3: memref<1x1x10x10x8xf32, #tpu.memory_space<vmem>>, %arg4: memref<1x1x10x10x8xf32, #tpu.memory_space<vmem>>, %arg5: memref<3x3x3x8x16xf32, #tpu.memory_space<vmem>>, %arg6: memref<1x16xf32, #tpu.memory_space<vmem>>, %arg7: memref<1x1x64x16xf32, #tpu.memory_space<vmem>>, %arg8: memref<1x1x16xf32, #tpu.memory_space<vmem>>, %arg9: memref<1x1x16xf32, #tpu.memory_space<vmem>>) attributes {dimension_semantics = [#tpu.dimension_semantics<parallel>, #tpu.dimension_semantics<arbitrary>], iteration_bounds = array<i64: 2, 8>, scalar_prefetch = 0 : i64, scratch_operands = 0 : i64, tpu.core_type = #tpu.core_type<tc>, window_params = [{transform_indices = @transform_0, window_bounds = array<i64: 1, 1, 10, 10, 8>}, {transform_indices = @transform_1, window_bounds = array<i64: 1, 1, 10, 10, 8>}, {transform_indices = @transform_2, window_bounds = array<i64: 1, 1, 10, 10, 8>}, {pipeline_mode = #tpu.pipeline_mode<synchronous>, transform_indices = @transform_3, window_bounds = array<i64: 3, 3, 3, 8, 16>}, {pipeline_mode = #tpu.pipeline_mode<synchronous>, transform_indices = @transform_4, window_bounds = array<i64: 1, 16>}, {transform_indices = @transform_5, window_bounds = array<i64: 1, 1, 64, 16>}, {transform_indices = @transform_6, window_bounds = array<i64: 1, 1, 16>}, {transform_indices = @transform_7, window_bounds = array<i64: 1, 1, 16>}]} {
    %c0 = arith.constant 0 : index
    %c0_0 = arith.constant 0 : index
    %c0_1 = arith.constant 0 : index
    %c0_2 = arith.constant 0 : index
    %c0_3 = arith.constant 0 : index
    %0 = vector.load %arg5[%c0, %c0_0, %c0_1, %c0_2, %c0_3] : memref<3x3x3x8x16xf32, #tpu.memory_space<vmem>>, vector<3x3x3x8x16xf32>
    %cst = arith.constant 0.000000e+00 : f32
    %1 = vector.broadcast %cst : f32 to vector<64x16xf32>
    %c0_4 = arith.constant 0 : index
    %c0_5 = arith.constant 0 : index
    %c0_6 = arith.constant 0 : index
    %c0_7 = arith.constant 0 : index
    %c0_8 = arith.constant 0 : index
    %2 = vector.load %arg2[%c0_4, %c0_5, %c0_6, %c0_7, %c0_8] : memref<1x1x10x10x8xf32, #tpu.memory_space<vmem>>, vector<1x1x10x10x8xf32>
    %3 = vector.shape_cast %2 : vector<1x1x10x10x8xf32> to vector<10x10x8xf32>
    %4 = vector.extract_strided_slice %3 {offsets = [0, 0, 0], sizes = [8, 8, 8], strides = [1, 1, 1]} : vector<10x10x8xf32> to vector<8x8x8xf32>
    %5 = vector.shape_cast %4 : vector<8x8x8xf32> to vector<64x8xf32>
    %6 = vector.extract_strided_slice %0 {offsets = [0, 0, 0, 0, 0], sizes = [1, 1, 1, 8, 16], strides = [1, 1, 1, 1, 1]} : vector<3x3x3x8x16xf32> to vector<1x1x1x8x16xf32>
    %7 = vector.shape_cast %6 : vector<1x1x1x8x16xf32> to vector<8x16xf32>
    %cst_9 = arith.constant dense<0.000000e+00> : vector<64x16xf32>
    %8 = tpu.matmul %5, %7, %cst_9 {dimension_numbers = #tpu.dot_dimension_numbers<[1], [0], [0], [1], [0, 0, 1, 1], [], []>} : vector<64x8xf32>, vector<8x16xf32>, vector<64x16xf32> -> vector<64x16xf32>
    %9 = arith.addf %1, %8 : vector<64x16xf32>
    %10 = vector.extract_strided_slice %3 {offsets = [0, 1, 0], sizes = [8, 8, 8], strides = [1, 1, 1]} : vector<10x10x8xf32> to vector<8x8x8xf32>
    %11 = vector.shape_cast %10 : vector<8x8x8xf32> to vector<64x8xf32>
    %12 = vector.extract_strided_slice %0 {offsets = [0, 0, 1, 0, 0], sizes = [1, 1, 1, 8, 16], strides = [1, 1, 1, 1, 1]} : vector<3x3x3x8x16xf32> to vector<1x1x1x8x16xf32>
    %13 = vector.shape_cast %12 : vector<1x1x1x8x16xf32> to vector<8x16xf32>
    %cst_10 = arith.constant dense<0.000000e+00> : vector<64x16xf32>
    %14 = tpu.matmul %11, %13, %cst_10 {dimension_numbers = #tpu.dot_dimension_numbers<[1], [0], [0], [1], [0, 0, 1, 1], [], []>} : vector<64x8xf32>, vector<8x16xf32>, vector<64x16xf32> -> vector<64x16xf32>
    %15 = arith.addf %9, %14 : vector<64x16xf32>
    %16 = vector.extract_strided_slice %3 {offsets = [0, 2, 0], sizes = [8, 8, 8], strides = [1, 1, 1]} : vector<10x10x8xf32> to vector<8x8x8xf32>
    %17 = vector.shape_cast %16 : vector<8x8x8xf32> to vector<64x8xf32>
    %18 = vector.extract_strided_slice %0 {offsets = [0, 0, 2, 0, 0], sizes = [1, 1, 1, 8, 16], strides = [1, 1, 1, 1, 1]} : vector<3x3x3x8x16xf32> to vector<1x1x1x8x16xf32>
    %19 = vector.shape_cast %18 : vector<1x1x1x8x16xf32> to vector<8x16xf32>
    %cst_11 = arith.constant dense<0.000000e+00> : vector<64x16xf32>
    %20 = tpu.matmul %17, %19, %cst_11 {dimension_numbers = #tpu.dot_dimension_numbers<[1], [0], [0], [1], [0, 0, 1, 1], [], []>} : vector<64x8xf32>, vector<8x16xf32>, vector<64x16xf32> -> vector<64x16xf32>
    %21 = arith.addf %15, %20 : vector<64x16xf32>
    %22 = vector.extract_strided_slice %3 {offsets = [1, 0, 0], sizes = [8, 8, 8], strides = [1, 1, 1]} : vector<10x10x8xf32> to vector<8x8x8xf32>
    %23 = vector.shape_cast %22 : vector<8x8x8xf32> to vector<64x8xf32>
    %24 = vector.extract_strided_slice %0 {offsets = [0, 1, 0, 0, 0], sizes = [1, 1, 1, 8, 16], strides = [1, 1, 1, 1, 1]} : vector<3x3x3x8x16xf32> to vector<1x1x1x8x16xf32>
    %25 = vector.shape_cast %24 : vector<1x1x1x8x16xf32> to vector<8x16xf32>
    %cst_12 = arith.constant dense<0.000000e+00> : vector<64x16xf32>
    %26 = tpu.matmul %23, %25, %cst_12 {dimension_numbers = #tpu.dot_dimension_numbers<[1], [0], [0], [1], [0, 0, 1, 1], [], []>} : vector<64x8xf32>, vector<8x16xf32>, vector<64x16xf32> -> vector<64x16xf32>
    %27 = arith.addf %21, %26 : vector<64x16xf32>
    %28 = vector.extract_strided_slice %3 {offsets = [1, 1, 0], sizes = [8, 8, 8], strides = [1, 1, 1]} : vector<10x10x8xf32> to vector<8x8x8xf32>
    %29 = vector.shape_cast %28 : vector<8x8x8xf32> to vector<64x8xf32>
    %30 = vector.extract_strided_slice %0 {offsets = [0, 1, 1, 0, 0], sizes = [1, 1, 1, 8, 16], strides = [1, 1, 1, 1, 1]} : vector<3x3x3x8x16xf32> to vector<1x1x1x8x16xf32>
    %31 = vector.shape_cast %30 : vector<1x1x1x8x16xf32> to vector<8x16xf32>
    %cst_13 = arith.constant dense<0.000000e+00> : vector<64x16xf32>
    %32 = tpu.matmul %29, %31, %cst_13 {dimension_numbers = #tpu.dot_dimension_numbers<[1], [0], [0], [1], [0, 0, 1, 1], [], []>} : vector<64x8xf32>, vector<8x16xf32>, vector<64x16xf32> -> vector<64x16xf32>
    %33 = arith.addf %27, %32 : vector<64x16xf32>
    %34 = vector.extract_strided_slice %3 {offsets = [1, 2, 0], sizes = [8, 8, 8], strides = [1, 1, 1]} : vector<10x10x8xf32> to vector<8x8x8xf32>
    %35 = vector.shape_cast %34 : vector<8x8x8xf32> to vector<64x8xf32>
    %36 = vector.extract_strided_slice %0 {offsets = [0, 1, 2, 0, 0], sizes = [1, 1, 1, 8, 16], strides = [1, 1, 1, 1, 1]} : vector<3x3x3x8x16xf32> to vector<1x1x1x8x16xf32>
    %37 = vector.shape_cast %36 : vector<1x1x1x8x16xf32> to vector<8x16xf32>
    %cst_14 = arith.constant dense<0.000000e+00> : vector<64x16xf32>
    %38 = tpu.matmul %35, %37, %cst_14 {dimension_numbers = #tpu.dot_dimension_numbers<[1], [0], [0], [1], [0, 0, 1, 1], [], []>} : vector<64x8xf32>, vector<8x16xf32>, vector<64x16xf32> -> vector<64x16xf32>
    %39 = arith.addf %33, %38 : vector<64x16xf32>
    %40 = vector.extract_strided_slice %3 {offsets = [2, 0, 0], sizes = [8, 8, 8], strides = [1, 1, 1]} : vector<10x10x8xf32> to vector<8x8x8xf32>
    %41 = vector.shape_cast %40 : vector<8x8x8xf32> to vector<64x8xf32>
    %42 = vector.extract_strided_slice %0 {offsets = [0, 2, 0, 0, 0], sizes = [1, 1, 1, 8, 16], strides = [1, 1, 1, 1, 1]} : vector<3x3x3x8x16xf32> to vector<1x1x1x8x16xf32>
    %43 = vector.shape_cast %42 : vector<1x1x1x8x16xf32> to vector<8x16xf32>
    %cst_15 = arith.constant dense<0.000000e+00> : vector<64x16xf32>
    %44 = tpu.matmul %41, %43, %cst_15 {dimension_numbers = #tpu.dot_dimension_numbers<[1], [0], [0], [1], [0, 0, 1, 1], [], []>} : vector<64x8xf32>, vector<8x16xf32>, vector<64x16xf32> -> vector<64x16xf32>
    %45 = arith.addf %39, %44 : vector<64x16xf32>
    %46 = vector.extract_strided_slice %3 {offsets = [2, 1, 0], sizes = [8, 8, 8], strides = [1, 1, 1]} : vector<10x10x8xf32> to vector<8x8x8xf32>
    %47 = vector.shape_cast %46 : vector<8x8x8xf32> to vector<64x8xf32>
    %48 = vector.extract_strided_slice %0 {offsets = [0, 2, 1, 0, 0], sizes = [1, 1, 1, 8, 16], strides = [1, 1, 1, 1, 1]} : vector<3x3x3x8x16xf32> to vector<1x1x1x8x16xf32>
    %49 = vector.shape_cast %48 : vector<1x1x1x8x16xf32> to vector<8x16xf32>
    %cst_16 = arith.constant dense<0.000000e+00> : vector<64x16xf32>
    %50 = tpu.matmul %47, %49, %cst_16 {dimension_numbers = #tpu.dot_dimension_numbers<[1], [0], [0], [1], [0, 0, 1, 1], [], []>} : vector<64x8xf32>, vector<8x16xf32>, vector<64x16xf32> -> vector<64x16xf32>
    %51 = arith.addf %45, %50 : vector<64x16xf32>
    %52 = vector.extract_strided_slice %3 {offsets = [2, 2, 0], sizes = [8, 8, 8], strides = [1, 1, 1]} : vector<10x10x8xf32> to vector<8x8x8xf32>
    %53 = vector.shape_cast %52 : vector<8x8x8xf32> to vector<64x8xf32>
    %54 = vector.extract_strided_slice %0 {offsets = [0, 2, 2, 0, 0], sizes = [1, 1, 1, 8, 16], strides = [1, 1, 1, 1, 1]} : vector<3x3x3x8x16xf32> to vector<1x1x1x8x16xf32>
    %55 = vector.shape_cast %54 : vector<1x1x1x8x16xf32> to vector<8x16xf32>
    %cst_17 = arith.constant dense<0.000000e+00> : vector<64x16xf32>
    %56 = tpu.matmul %53, %55, %cst_17 {dimension_numbers = #tpu.dot_dimension_numbers<[1], [0], [0], [1], [0, 0, 1, 1], [], []>} : vector<64x8xf32>, vector<8x16xf32>, vector<64x16xf32> -> vector<64x16xf32>
    %57 = arith.addf %51, %56 : vector<64x16xf32>
    %c0_18 = arith.constant 0 : index
    %c0_19 = arith.constant 0 : index
    %c0_20 = arith.constant 0 : index
    %c0_21 = arith.constant 0 : index
    %c0_22 = arith.constant 0 : index
    %58 = vector.load %arg3[%c0_18, %c0_19, %c0_20, %c0_21, %c0_22] : memref<1x1x10x10x8xf32, #tpu.memory_space<vmem>>, vector<1x1x10x10x8xf32>
    %59 = vector.shape_cast %58 : vector<1x1x10x10x8xf32> to vector<10x10x8xf32>
    %60 = vector.extract_strided_slice %59 {offsets = [0, 0, 0], sizes = [8, 8, 8], strides = [1, 1, 1]} : vector<10x10x8xf32> to vector<8x8x8xf32>
    %61 = vector.shape_cast %60 : vector<8x8x8xf32> to vector<64x8xf32>
    %62 = vector.extract_strided_slice %0 {offsets = [1, 0, 0, 0, 0], sizes = [1, 1, 1, 8, 16], strides = [1, 1, 1, 1, 1]} : vector<3x3x3x8x16xf32> to vector<1x1x1x8x16xf32>
    %63 = vector.shape_cast %62 : vector<1x1x1x8x16xf32> to vector<8x16xf32>
    %cst_23 = arith.constant dense<0.000000e+00> : vector<64x16xf32>
    %64 = tpu.matmul %61, %63, %cst_23 {dimension_numbers = #tpu.dot_dimension_numbers<[1], [0], [0], [1], [0, 0, 1, 1], [], []>} : vector<64x8xf32>, vector<8x16xf32>, vector<64x16xf32> -> vector<64x16xf32>
    %65 = arith.addf %57, %64 : vector<64x16xf32>
    %66 = vector.extract_strided_slice %59 {offsets = [0, 1, 0], sizes = [8, 8, 8], strides = [1, 1, 1]} : vector<10x10x8xf32> to vector<8x8x8xf32>
    %67 = vector.shape_cast %66 : vector<8x8x8xf32> to vector<64x8xf32>
    %68 = vector.extract_strided_slice %0 {offsets = [1, 0, 1, 0, 0], sizes = [1, 1, 1, 8, 16], strides = [1, 1, 1, 1, 1]} : vector<3x3x3x8x16xf32> to vector<1x1x1x8x16xf32>
    %69 = vector.shape_cast %68 : vector<1x1x1x8x16xf32> to vector<8x16xf32>
    %cst_24 = arith.constant dense<0.000000e+00> : vector<64x16xf32>
    %70 = tpu.matmul %67, %69, %cst_24 {dimension_numbers = #tpu.dot_dimension_numbers<[1], [0], [0], [1], [0, 0, 1, 1], [], []>} : vector<64x8xf32>, vector<8x16xf32>, vector<64x16xf32> -> vector<64x16xf32>
    %71 = arith.addf %65, %70 : vector<64x16xf32>
    %72 = vector.extract_strided_slice %59 {offsets = [0, 2, 0], sizes = [8, 8, 8], strides = [1, 1, 1]} : vector<10x10x8xf32> to vector<8x8x8xf32>
    %73 = vector.shape_cast %72 : vector<8x8x8xf32> to vector<64x8xf32>
    %74 = vector.extract_strided_slice %0 {offsets = [1, 0, 2, 0, 0], sizes = [1, 1, 1, 8, 16], strides = [1, 1, 1, 1, 1]} : vector<3x3x3x8x16xf32> to vector<1x1x1x8x16xf32>
    %75 = vector.shape_cast %74 : vector<1x1x1x8x16xf32> to vector<8x16xf32>
    %cst_25 = arith.constant dense<0.000000e+00> : vector<64x16xf32>
    %76 = tpu.matmul %73, %75, %cst_25 {dimension_numbers = #tpu.dot_dimension_numbers<[1], [0], [0], [1], [0, 0, 1, 1], [], []>} : vector<64x8xf32>, vector<8x16xf32>, vector<64x16xf32> -> vector<64x16xf32>
    %77 = arith.addf %71, %76 : vector<64x16xf32>
    %78 = vector.extract_strided_slice %59 {offsets = [1, 0, 0], sizes = [8, 8, 8], strides = [1, 1, 1]} : vector<10x10x8xf32> to vector<8x8x8xf32>
    %79 = vector.shape_cast %78 : vector<8x8x8xf32> to vector<64x8xf32>
    %80 = vector.extract_strided_slice %0 {offsets = [1, 1, 0, 0, 0], sizes = [1, 1, 1, 8, 16], strides = [1, 1, 1, 1, 1]} : vector<3x3x3x8x16xf32> to vector<1x1x1x8x16xf32>
    %81 = vector.shape_cast %80 : vector<1x1x1x8x16xf32> to vector<8x16xf32>
    %cst_26 = arith.constant dense<0.000000e+00> : vector<64x16xf32>
    %82 = tpu.matmul %79, %81, %cst_26 {dimension_numbers = #tpu.dot_dimension_numbers<[1], [0], [0], [1], [0, 0, 1, 1], [], []>} : vector<64x8xf32>, vector<8x16xf32>, vector<64x16xf32> -> vector<64x16xf32>
    %83 = arith.addf %77, %82 : vector<64x16xf32>
    %84 = vector.extract_strided_slice %59 {offsets = [1, 1, 0], sizes = [8, 8, 8], strides = [1, 1, 1]} : vector<10x10x8xf32> to vector<8x8x8xf32>
    %85 = vector.shape_cast %84 : vector<8x8x8xf32> to vector<64x8xf32>
    %86 = vector.extract_strided_slice %0 {offsets = [1, 1, 1, 0, 0], sizes = [1, 1, 1, 8, 16], strides = [1, 1, 1, 1, 1]} : vector<3x3x3x8x16xf32> to vector<1x1x1x8x16xf32>
    %87 = vector.shape_cast %86 : vector<1x1x1x8x16xf32> to vector<8x16xf32>
    %cst_27 = arith.constant dense<0.000000e+00> : vector<64x16xf32>
    %88 = tpu.matmul %85, %87, %cst_27 {dimension_numbers = #tpu.dot_dimension_numbers<[1], [0], [0], [1], [0, 0, 1, 1], [], []>} : vector<64x8xf32>, vector<8x16xf32>, vector<64x16xf32> -> vector<64x16xf32>
    %89 = arith.addf %83, %88 : vector<64x16xf32>
    %90 = vector.extract_strided_slice %59 {offsets = [1, 2, 0], sizes = [8, 8, 8], strides = [1, 1, 1]} : vector<10x10x8xf32> to vector<8x8x8xf32>
    %91 = vector.shape_cast %90 : vector<8x8x8xf32> to vector<64x8xf32>
    %92 = vector.extract_strided_slice %0 {offsets = [1, 1, 2, 0, 0], sizes = [1, 1, 1, 8, 16], strides = [1, 1, 1, 1, 1]} : vector<3x3x3x8x16xf32> to vector<1x1x1x8x16xf32>
    %93 = vector.shape_cast %92 : vector<1x1x1x8x16xf32> to vector<8x16xf32>
    %cst_28 = arith.constant dense<0.000000e+00> : vector<64x16xf32>
    %94 = tpu.matmul %91, %93, %cst_28 {dimension_numbers = #tpu.dot_dimension_numbers<[1], [0], [0], [1], [0, 0, 1, 1], [], []>} : vector<64x8xf32>, vector<8x16xf32>, vector<64x16xf32> -> vector<64x16xf32>
    %95 = arith.addf %89, %94 : vector<64x16xf32>
    %96 = vector.extract_strided_slice %59 {offsets = [2, 0, 0], sizes = [8, 8, 8], strides = [1, 1, 1]} : vector<10x10x8xf32> to vector<8x8x8xf32>
    %97 = vector.shape_cast %96 : vector<8x8x8xf32> to vector<64x8xf32>
    %98 = vector.extract_strided_slice %0 {offsets = [1, 2, 0, 0, 0], sizes = [1, 1, 1, 8, 16], strides = [1, 1, 1, 1, 1]} : vector<3x3x3x8x16xf32> to vector<1x1x1x8x16xf32>
    %99 = vector.shape_cast %98 : vector<1x1x1x8x16xf32> to vector<8x16xf32>
    %cst_29 = arith.constant dense<0.000000e+00> : vector<64x16xf32>
    %100 = tpu.matmul %97, %99, %cst_29 {dimension_numbers = #tpu.dot_dimension_numbers<[1], [0], [0], [1], [0, 0, 1, 1], [], []>} : vector<64x8xf32>, vector<8x16xf32>, vector<64x16xf32> -> vector<64x16xf32>
    %101 = arith.addf %95, %100 : vector<64x16xf32>
    %102 = vector.extract_strided_slice %59 {offsets = [2, 1, 0], sizes = [8, 8, 8], strides = [1, 1, 1]} : vector<10x10x8xf32> to vector<8x8x8xf32>
    %103 = vector.shape_cast %102 : vector<8x8x8xf32> to vector<64x8xf32>
    %104 = vector.extract_strided_slice %0 {offsets = [1, 2, 1, 0, 0], sizes = [1, 1, 1, 8, 16], strides = [1, 1, 1, 1, 1]} : vector<3x3x3x8x16xf32> to vector<1x1x1x8x16xf32>
    %105 = vector.shape_cast %104 : vector<1x1x1x8x16xf32> to vector<8x16xf32>
    %cst_30 = arith.constant dense<0.000000e+00> : vector<64x16xf32>
    %106 = tpu.matmul %103, %105, %cst_30 {dimension_numbers = #tpu.dot_dimension_numbers<[1], [0], [0], [1], [0, 0, 1, 1], [], []>} : vector<64x8xf32>, vector<8x16xf32>, vector<64x16xf32> -> vector<64x16xf32>
    %107 = arith.addf %101, %106 : vector<64x16xf32>
    %108 = vector.extract_strided_slice %59 {offsets = [2, 2, 0], sizes = [8, 8, 8], strides = [1, 1, 1]} : vector<10x10x8xf32> to vector<8x8x8xf32>
    %109 = vector.shape_cast %108 : vector<8x8x8xf32> to vector<64x8xf32>
    %110 = vector.extract_strided_slice %0 {offsets = [1, 2, 2, 0, 0], sizes = [1, 1, 1, 8, 16], strides = [1, 1, 1, 1, 1]} : vector<3x3x3x8x16xf32> to vector<1x1x1x8x16xf32>
    %111 = vector.shape_cast %110 : vector<1x1x1x8x16xf32> to vector<8x16xf32>
    %cst_31 = arith.constant dense<0.000000e+00> : vector<64x16xf32>
    %112 = tpu.matmul %109, %111, %cst_31 {dimension_numbers = #tpu.dot_dimension_numbers<[1], [0], [0], [1], [0, 0, 1, 1], [], []>} : vector<64x8xf32>, vector<8x16xf32>, vector<64x16xf32> -> vector<64x16xf32>
    %113 = arith.addf %107, %112 : vector<64x16xf32>
    %c0_32 = arith.constant 0 : index
    %c0_33 = arith.constant 0 : index
    %c0_34 = arith.constant 0 : index
    %c0_35 = arith.constant 0 : index
    %c0_36 = arith.constant 0 : index
    %114 = vector.load %arg4[%c0_32, %c0_33, %c0_34, %c0_35, %c0_36] : memref<1x1x10x10x8xf32, #tpu.memory_space<vmem>>, vector<1x1x10x10x8xf32>
    %115 = vector.shape_cast %114 : vector<1x1x10x10x8xf32> to vector<10x10x8xf32>
    %116 = vector.extract_strided_slice %115 {offsets = [0, 0, 0], sizes = [8, 8, 8], strides = [1, 1, 1]} : vector<10x10x8xf32> to vector<8x8x8xf32>
    %117 = vector.shape_cast %116 : vector<8x8x8xf32> to vector<64x8xf32>
    %118 = vector.extract_strided_slice %0 {offsets = [2, 0, 0, 0, 0], sizes = [1, 1, 1, 8, 16], strides = [1, 1, 1, 1, 1]} : vector<3x3x3x8x16xf32> to vector<1x1x1x8x16xf32>
    %119 = vector.shape_cast %118 : vector<1x1x1x8x16xf32> to vector<8x16xf32>
    %cst_37 = arith.constant dense<0.000000e+00> : vector<64x16xf32>
    %120 = tpu.matmul %117, %119, %cst_37 {dimension_numbers = #tpu.dot_dimension_numbers<[1], [0], [0], [1], [0, 0, 1, 1], [], []>} : vector<64x8xf32>, vector<8x16xf32>, vector<64x16xf32> -> vector<64x16xf32>
    %121 = arith.addf %113, %120 : vector<64x16xf32>
    %122 = vector.extract_strided_slice %115 {offsets = [0, 1, 0], sizes = [8, 8, 8], strides = [1, 1, 1]} : vector<10x10x8xf32> to vector<8x8x8xf32>
    %123 = vector.shape_cast %122 : vector<8x8x8xf32> to vector<64x8xf32>
    %124 = vector.extract_strided_slice %0 {offsets = [2, 0, 1, 0, 0], sizes = [1, 1, 1, 8, 16], strides = [1, 1, 1, 1, 1]} : vector<3x3x3x8x16xf32> to vector<1x1x1x8x16xf32>
    %125 = vector.shape_cast %124 : vector<1x1x1x8x16xf32> to vector<8x16xf32>
    %cst_38 = arith.constant dense<0.000000e+00> : vector<64x16xf32>
    %126 = tpu.matmul %123, %125, %cst_38 {dimension_numbers = #tpu.dot_dimension_numbers<[1], [0], [0], [1], [0, 0, 1, 1], [], []>} : vector<64x8xf32>, vector<8x16xf32>, vector<64x16xf32> -> vector<64x16xf32>
    %127 = arith.addf %121, %126 : vector<64x16xf32>
    %128 = vector.extract_strided_slice %115 {offsets = [0, 2, 0], sizes = [8, 8, 8], strides = [1, 1, 1]} : vector<10x10x8xf32> to vector<8x8x8xf32>
    %129 = vector.shape_cast %128 : vector<8x8x8xf32> to vector<64x8xf32>
    %130 = vector.extract_strided_slice %0 {offsets = [2, 0, 2, 0, 0], sizes = [1, 1, 1, 8, 16], strides = [1, 1, 1, 1, 1]} : vector<3x3x3x8x16xf32> to vector<1x1x1x8x16xf32>
    %131 = vector.shape_cast %130 : vector<1x1x1x8x16xf32> to vector<8x16xf32>
    %cst_39 = arith.constant dense<0.000000e+00> : vector<64x16xf32>
    %132 = tpu.matmul %129, %131, %cst_39 {dimension_numbers = #tpu.dot_dimension_numbers<[1], [0], [0], [1], [0, 0, 1, 1], [], []>} : vector<64x8xf32>, vector<8x16xf32>, vector<64x16xf32> -> vector<64x16xf32>
    %133 = arith.addf %127, %132 : vector<64x16xf32>
    %134 = vector.extract_strided_slice %115 {offsets = [1, 0, 0], sizes = [8, 8, 8], strides = [1, 1, 1]} : vector<10x10x8xf32> to vector<8x8x8xf32>
    %135 = vector.shape_cast %134 : vector<8x8x8xf32> to vector<64x8xf32>
    %136 = vector.extract_strided_slice %0 {offsets = [2, 1, 0, 0, 0], sizes = [1, 1, 1, 8, 16], strides = [1, 1, 1, 1, 1]} : vector<3x3x3x8x16xf32> to vector<1x1x1x8x16xf32>
    %137 = vector.shape_cast %136 : vector<1x1x1x8x16xf32> to vector<8x16xf32>
    %cst_40 = arith.constant dense<0.000000e+00> : vector<64x16xf32>
    %138 = tpu.matmul %135, %137, %cst_40 {dimension_numbers = #tpu.dot_dimension_numbers<[1], [0], [0], [1], [0, 0, 1, 1], [], []>} : vector<64x8xf32>, vector<8x16xf32>, vector<64x16xf32> -> vector<64x16xf32>
    %139 = arith.addf %133, %138 : vector<64x16xf32>
    %140 = vector.extract_strided_slice %115 {offsets = [1, 1, 0], sizes = [8, 8, 8], strides = [1, 1, 1]} : vector<10x10x8xf32> to vector<8x8x8xf32>
    %141 = vector.shape_cast %140 : vector<8x8x8xf32> to vector<64x8xf32>
    %142 = vector.extract_strided_slice %0 {offsets = [2, 1, 1, 0, 0], sizes = [1, 1, 1, 8, 16], strides = [1, 1, 1, 1, 1]} : vector<3x3x3x8x16xf32> to vector<1x1x1x8x16xf32>
    %143 = vector.shape_cast %142 : vector<1x1x1x8x16xf32> to vector<8x16xf32>
    %cst_41 = arith.constant dense<0.000000e+00> : vector<64x16xf32>
    %144 = tpu.matmul %141, %143, %cst_41 {dimension_numbers = #tpu.dot_dimension_numbers<[1], [0], [0], [1], [0, 0, 1, 1], [], []>} : vector<64x8xf32>, vector<8x16xf32>, vector<64x16xf32> -> vector<64x16xf32>
    %145 = arith.addf %139, %144 : vector<64x16xf32>
    %146 = vector.extract_strided_slice %115 {offsets = [1, 2, 0], sizes = [8, 8, 8], strides = [1, 1, 1]} : vector<10x10x8xf32> to vector<8x8x8xf32>
    %147 = vector.shape_cast %146 : vector<8x8x8xf32> to vector<64x8xf32>
    %148 = vector.extract_strided_slice %0 {offsets = [2, 1, 2, 0, 0], sizes = [1, 1, 1, 8, 16], strides = [1, 1, 1, 1, 1]} : vector<3x3x3x8x16xf32> to vector<1x1x1x8x16xf32>
    %149 = vector.shape_cast %148 : vector<1x1x1x8x16xf32> to vector<8x16xf32>
    %cst_42 = arith.constant dense<0.000000e+00> : vector<64x16xf32>
    %150 = tpu.matmul %147, %149, %cst_42 {dimension_numbers = #tpu.dot_dimension_numbers<[1], [0], [0], [1], [0, 0, 1, 1], [], []>} : vector<64x8xf32>, vector<8x16xf32>, vector<64x16xf32> -> vector<64x16xf32>
    %151 = arith.addf %145, %150 : vector<64x16xf32>
    %152 = vector.extract_strided_slice %115 {offsets = [2, 0, 0], sizes = [8, 8, 8], strides = [1, 1, 1]} : vector<10x10x8xf32> to vector<8x8x8xf32>
    %153 = vector.shape_cast %152 : vector<8x8x8xf32> to vector<64x8xf32>
    %154 = vector.extract_strided_slice %0 {offsets = [2, 2, 0, 0, 0], sizes = [1, 1, 1, 8, 16], strides = [1, 1, 1, 1, 1]} : vector<3x3x3x8x16xf32> to vector<1x1x1x8x16xf32>
    %155 = vector.shape_cast %154 : vector<1x1x1x8x16xf32> to vector<8x16xf32>
    %cst_43 = arith.constant dense<0.000000e+00> : vector<64x16xf32>
    %156 = tpu.matmul %153, %155, %cst_43 {dimension_numbers = #tpu.dot_dimension_numbers<[1], [0], [0], [1], [0, 0, 1, 1], [], []>} : vector<64x8xf32>, vector<8x16xf32>, vector<64x16xf32> -> vector<64x16xf32>
    %157 = arith.addf %151, %156 : vector<64x16xf32>
    %158 = vector.extract_strided_slice %115 {offsets = [2, 1, 0], sizes = [8, 8, 8], strides = [1, 1, 1]} : vector<10x10x8xf32> to vector<8x8x8xf32>
    %159 = vector.shape_cast %158 : vector<8x8x8xf32> to vector<64x8xf32>
    %160 = vector.extract_strided_slice %0 {offsets = [2, 2, 1, 0, 0], sizes = [1, 1, 1, 8, 16], strides = [1, 1, 1, 1, 1]} : vector<3x3x3x8x16xf32> to vector<1x1x1x8x16xf32>
    %161 = vector.shape_cast %160 : vector<1x1x1x8x16xf32> to vector<8x16xf32>
    %cst_44 = arith.constant dense<0.000000e+00> : vector<64x16xf32>
    %162 = tpu.matmul %159, %161, %cst_44 {dimension_numbers = #tpu.dot_dimension_numbers<[1], [0], [0], [1], [0, 0, 1, 1], [], []>} : vector<64x8xf32>, vector<8x16xf32>, vector<64x16xf32> -> vector<64x16xf32>
    %163 = arith.addf %157, %162 : vector<64x16xf32>
    %164 = vector.extract_strided_slice %115 {offsets = [2, 2, 0], sizes = [8, 8, 8], strides = [1, 1, 1]} : vector<10x10x8xf32> to vector<8x8x8xf32>
    %165 = vector.shape_cast %164 : vector<8x8x8xf32> to vector<64x8xf32>
    %166 = vector.extract_strided_slice %0 {offsets = [2, 2, 2, 0, 0], sizes = [1, 1, 1, 8, 16], strides = [1, 1, 1, 1, 1]} : vector<3x3x3x8x16xf32> to vector<1x1x1x8x16xf32>
    %167 = vector.shape_cast %166 : vector<1x1x1x8x16xf32> to vector<8x16xf32>
    %cst_45 = arith.constant dense<0.000000e+00> : vector<64x16xf32>
    %168 = tpu.matmul %165, %167, %cst_45 {dimension_numbers = #tpu.dot_dimension_numbers<[1], [0], [0], [1], [0, 0, 1, 1], [], []>} : vector<64x8xf32>, vector<8x16xf32>, vector<64x16xf32> -> vector<64x16xf32>
    %169 = arith.addf %163, %168 : vector<64x16xf32>
    %c0_46 = arith.constant 0 : index
    %c0_47 = arith.constant 0 : index
    %170 = vector.load %arg6[%c0_46, %c0_47] : memref<1x16xf32, #tpu.memory_space<vmem>>, vector<1x16xf32>
    %171 = vector.broadcast %170 : vector<1x16xf32> to vector<64x16xf32>
    %172 = arith.addf %169, %171 : vector<64x16xf32>
    %173 = vector.shape_cast %172 : vector<64x16xf32> to vector<1x1x64x16xf32>
    %c0_48 = arith.constant 0 : index
    %c0_49 = arith.constant 0 : index
    %c0_50 = arith.constant 0 : index
    %c0_51 = arith.constant 0 : index
    %174 = vector.load %arg7[%c0_48, %c0_49, %c0_50, %c0_51] : memref<1x1x64x16xf32, #tpu.memory_space<vmem>>, vector<1x1x64x16xf32>
    tpu.vector_store %arg7[%c0_48, %c0_49, %c0_50, %c0_51], %173 {strides = array<i32>} : memref<1x1x64x16xf32, #tpu.memory_space<vmem>>, vector<1x1x64x16xf32>,
    %c0_i32 = arith.constant 0 : i32
    %175 = arith.cmpi eq, %arg1, %c0_i32 : i32
    %176 = arith.extui %175 : i1 to i32
    %c0_i32_52 = arith.constant 0 : i32
    %177 = arith.cmpi ne, %176, %c0_i32_52 : i32
    scf.if %177 {
      %cst_67 = arith.constant 0.000000e+00 : f32
      %189 = vector.broadcast %cst_67 : f32 to vector<1x1x16xf32>
      %c0_68 = arith.constant 0 : index
      %c0_69 = arith.constant 0 : index
      %c0_70 = arith.constant 0 : index
      %190 = vector.load %arg8[%c0_68, %c0_69, %c0_70] : memref<1x1x16xf32, #tpu.memory_space<vmem>>, vector<1x1x16xf32>
      tpu.vector_store %arg8[%c0_68, %c0_69, %c0_70], %189 {strides = array<i32>} : memref<1x1x16xf32, #tpu.memory_space<vmem>>, vector<1x1x16xf32>,
      %cst_71 = arith.constant 0.000000e+00 : f32
      %191 = vector.broadcast %cst_71 : f32 to vector<1x1x16xf32>
      %c0_72 = arith.constant 0 : index
      %c0_73 = arith.constant 0 : index
      %c0_74 = arith.constant 0 : index
      %192 = vector.load %arg9[%c0_72, %c0_73, %c0_74] : memref<1x1x16xf32, #tpu.memory_space<vmem>>, vector<1x1x16xf32>
      tpu.vector_store %arg9[%c0_72, %c0_73, %c0_74], %191 {strides = array<i32>} : memref<1x1x16xf32, #tpu.memory_space<vmem>>, vector<1x1x16xf32>,
    } else {
    }
    %c0_53 = arith.constant 0 : index
    %c0_54 = arith.constant 0 : index
    %c0_55 = arith.constant 0 : index
    %178 = vector.load %arg8[%c0_53, %c0_54, %c0_55] : memref<1x1x16xf32, #tpu.memory_space<vmem>>, vector<1x1x16xf32>
    %cst_56 = arith.constant dense<0.000000e+00> : vector<16xf32>
    %179 = vector.multi_reduction <add>, %172, %cst_56 [0] : vector<64x16xf32> to vector<16xf32>
    %180 = vector.shape_cast %179 : vector<16xf32> to vector<1x1x16xf32>
    %181 = arith.addf %178, %180 : vector<1x1x16xf32>
    %c0_57 = arith.constant 0 : index
    %c0_58 = arith.constant 0 : index
    %c0_59 = arith.constant 0 : index
    %182 = vector.load %arg8[%c0_57, %c0_58, %c0_59] : memref<1x1x16xf32, #tpu.memory_space<vmem>>, vector<1x1x16xf32>
    tpu.vector_store %arg8[%c0_57, %c0_58, %c0_59], %181 {strides = array<i32>} : memref<1x1x16xf32, #tpu.memory_space<vmem>>, vector<1x1x16xf32>,
    %c0_60 = arith.constant 0 : index
    %c0_61 = arith.constant 0 : index
    %c0_62 = arith.constant 0 : index
    %183 = vector.load %arg9[%c0_60, %c0_61, %c0_62] : memref<1x1x16xf32, #tpu.memory_space<vmem>>, vector<1x1x16xf32>
    %184 = arith.mulf %172, %172 : vector<64x16xf32>
    %cst_63 = arith.constant dense<0.000000e+00> : vector<16xf32>
    %185 = vector.multi_reduction <add>, %184, %cst_63 [0] : vector<64x16xf32> to vector<16xf32>
    %186 = vector.shape_cast %185 : vector<16xf32> to vector<1x1x16xf32>
    %187 = arith.addf %183, %186 : vector<1x1x16xf32>
    %c0_64 = arith.constant 0 : index
    %c0_65 = arith.constant 0 : index
    %c0_66 = arith.constant 0 : index
    %188 = vector.load %arg9[%c0_64, %c0_65, %c0_66] : memref<1x1x16xf32, #tpu.memory_space<vmem>>, vector<1x1x16xf32>
    tpu.vector_store %arg9[%c0_64, %c0_65, %c0_66], %187 {strides = array<i32>} : memref<1x1x16xf32, #tpu.memory_space<vmem>>, vector<1x1x16xf32>,
    return
  }
  func.func @transform_0(%arg0: i32, %arg1: i32) -> (i32, i32, i32, i32, i32) {
    %c0_i32 = arith.constant 0 : i32
    %0 = arith.addi %arg1, %c0_i32 : i32
    %c0_i32_0 = arith.constant 0 : i32
    %c0_i32_1 = arith.constant 0 : i32
    %c0_i32_2 = arith.constant 0 : i32
    %c0_i32_3 = arith.constant 0 : i32
    return %arg0, %0, %c0_i32_0, %c0_i32_1, %c0_i32_2 : i32, i32, i32, i32, i32
  }
  func.func @transform_1(%arg0: i32, %arg1: i32) -> (i32, i32, i32, i32, i32) {
    %c1_i32 = arith.constant 1 : i32
    %0 = arith.addi %arg1, %c1_i32 : i32
    %c0_i32 = arith.constant 0 : i32
    %c0_i32_0 = arith.constant 0 : i32
    %c0_i32_1 = arith.constant 0 : i32
    %c0_i32_2 = arith.constant 0 : i32
    return %arg0, %0, %c0_i32, %c0_i32_0, %c0_i32_1 : i32, i32, i32, i32, i32
  }
  func.func @transform_2(%arg0: i32, %arg1: i32) -> (i32, i32, i32, i32, i32) {
    %c2_i32 = arith.constant 2 : i32
    %0 = arith.addi %arg1, %c2_i32 : i32
    %c0_i32 = arith.constant 0 : i32
    %c0_i32_0 = arith.constant 0 : i32
    %c0_i32_1 = arith.constant 0 : i32
    %c0_i32_2 = arith.constant 0 : i32
    return %arg0, %0, %c0_i32, %c0_i32_0, %c0_i32_1 : i32, i32, i32, i32, i32
  }
  func.func @transform_3(%arg0: i32, %arg1: i32) -> (i32, i32, i32, i32, i32) {
    %c0_i32 = arith.constant 0 : i32
    %c0_i32_0 = arith.constant 0 : i32
    %c0_i32_1 = arith.constant 0 : i32
    %c0_i32_2 = arith.constant 0 : i32
    %c0_i32_3 = arith.constant 0 : i32
    %c0_i32_4 = arith.constant 0 : i32
    return %c0_i32, %c0_i32_0, %c0_i32_1, %c0_i32_2, %c0_i32_3 : i32, i32, i32, i32, i32
  }
  func.func @transform_4(%arg0: i32, %arg1: i32) -> (i32, i32) {
    %c0_i32 = arith.constant 0 : i32
    %c0_i32_0 = arith.constant 0 : i32
    %c0_i32_1 = arith.constant 0 : i32
    return %c0_i32, %c0_i32_0 : i32, i32
  }
  func.func @transform_5(%arg0: i32, %arg1: i32) -> (i32, i32, i32, i32) {
    %c0_i32 = arith.constant 0 : i32
    %c0_i32_0 = arith.constant 0 : i32
    %c0_i32_1 = arith.constant 0 : i32
    return %arg0, %arg1, %c0_i32, %c0_i32_0 : i32, i32, i32, i32
  }
  func.func @transform_6(%arg0: i32, %arg1: i32) -> (i32, i32, i32) {
    %c0_i32 = arith.constant 0 : i32
    %c0_i32_0 = arith.constant 0 : i32
    %c0_i32_1 = arith.constant 0 : i32
    return %arg0, %c0_i32, %c0_i32_0 : i32, i32, i32
  }
  func.func @transform_7(%arg0: i32, %arg1: i32) -> (i32, i32, i32) {
    %c0_i32 = arith.constant 0 : i32
    %c0_i32_0 = arith.constant 0 : i32
    %c0_i32_1 = arith.constant 0 : i32
    return %arg0, %c0_i32, %c0_i32_0 : i32, i32, i32
  }
}

</mosaic_0001>

<llo_original>
// kernel: tpu_custom_call.1
$region0: #{tpu_custom_call.1}
  #allocation0 [shape = 'u32[]', space=smem, size = 0x4, offset = 0x4, fixed_abs, tag = 'smem constant byte address 0x4 - core index']
  #allocation1 [shape = 'u32[144,128]{1,0:T(1,128)}', space=vmem, size = 0x12000, scoped, tag = 'internal scratch']
  %s0 = inlined_call_operand.vmem [shape: f32[2,10,10,10,8], index: 0, kind: input, shape index: {}]
  %s1 = inlined_call_operand.vmem [shape: f32[2,10,10,10,8], index: 1, kind: input, shape index: {}]
  %s2 = inlined_call_operand.vmem [shape: f32[2,10,10,10,8], index: 2, kind: input, shape index: {}]
  %s3 = inlined_call_operand.vmem [shape: f32[3,3,3,8,16], index: 3, kind: input, shape index: {}]
  %s4 = inlined_call_operand.vmem [shape: f32[1,16], index: 4, kind: input, shape index: {}]
  %s5 = inlined_call_operand.vmem [shape: f32[2,8,64,16], index: 5, kind: output, shape index: {0}]
  %s6 = inlined_call_operand.hbm [shape: f32[2,1,16], index: 6, kind: output, shape index: {1}]
  %s7 = inlined_call_operand.hbm [shape: f32[2,1,16], index: 7, kind: output, shape index: {2}]
  %8 = xla_tuple %s5, %s6, %s7
  %s9 = sld [smem:[#allocation0]]
  $region73: #{tpu_custom_call.1} parent=0
    _
  %s11 = ssub.s32 1, %s9
  %s12 = scalar_select 0, %s11, %s9
  $region1: #{tpu_custom_call.1} parent=0
    #allocation2 [shape = 'u8[1024]{0}', space=vmem, size = 0x400, scoped, tag = 'output window, operand 1']
    #allocation3 [shape = 's32[2]{0}', space=sflag, size = 0x8, scoped, tag = 'scoped memory for tpu_custom_call.1']
    #allocation4 [shape = 'u8[1024]{0}', space=vmem, size = 0x400, scoped, tag = 'output window, operand 2']
    #allocation5 [shape = 's32[2]{0}', space=sflag, size = 0x8, scoped, tag = 'scoped memory for tpu_custom_call.1']
    %13 = vsyncpa [#allocation3], 0
    %s14 = scalar_lea.sflag [#allocation3], 1
    %15 = vsyncpa %s14, 0
    %16 = vsyncpa [#allocation5], 0
    %s17 = scalar_lea.sflag [#allocation5], 1
    %18 = vsyncpa %s17, 0
    loop: start=0, step=1, limit=18
    $region2: #{tpu_custom_call.1} parent=1 // loop_pre_header
      _
    $region3: #{tpu_custom_call.1} parent=1 // loop_header
      %s20 = sphi 0, %s24
      %p21 = scmp.ge.s32.totalorder %s20, 18
      %s27 = sphi 0, %s39
      %s28 = sphi 0, %s35
      %s29 = sphi 0, %s27
      %s30 = sphi 0, %s28
      %s31 = sphi 0, %s29
      %s32 = sphi 0, %s30
      %s44 = sphi 0, %s46
      %s47 = sphi 0, %s44
      %s48 = sphi 0, %s47
      %s64 = sphi 0, %s48
      %s74 = sphi 0, %s76
      %s77 = sphi 0, %s74
      %s78 = sphi 0, %s77
      %s94 = sphi 0, %s78
      %s104 = sphi 0, %s106
      %s107 = sphi 0, %s104
      %s108 = sphi 0, %s107
      %s124 = sphi 0, %s108
      %s128 = sphi 0, %s128
      %s130 = sphi 0, %s128
      %s131 = sphi 0, %s130
      %s145 = sphi 0, %s131
      %s149 = sphi 0, %s149
      %s151 = sphi 0, %s149
      %s152 = sphi 0, %s151
      %s166 = sphi 0, %s152
      %s174 = sphi 0, %s176
      %s177 = sphi 0, %s174
      %s178 = sphi 0, %s177
      %s194 = sphi 0, %s178
      %s200 = sphi 0, %s202
      %s203 = sphi 0, %s200
      %s204 = sphi 0, %s203
      %s220 = sphi 0, %s204
      %s226 = sphi 0, %s228
      %s229 = sphi 0, %s226
      %s230 = sphi 0, %s229
      %s246 = sphi 0, %s230
    $region4: #{tpu_custom_call.1} parent=1 // loop_header_branch
      %23 = sbr.rel (%p21) target = $region8
    $region5: #{tpu_custom_call.1} parent=1 // loop_body
      %s25 = ssub.s32 %s20, 1
      %s26 = ssub.s32 %s20, 2
      %s33 = sadd.s32 1, %s28
      %p34 = scmp.ge.s32.totalorder %s33, 8
      %s35 = scalar_select %p34, 0, %s33
      %s36 = sadd.s32 1, %s27
      %s37 = scalar_select %p34, %s36, %s27
      %p38 = scmp.ge.s32.totalorder %s37, 2
      %s39 = scalar_select %p38, 0, %s37
      %s40 = ssub.s32 %s27, %s39
      %s41 = ssub.s32 %s28, %s35
      %s42 = sor.u32 %s40, %s41
      %p43 = scmp.eq.s32.totalorder %s42, 0
      %s45 = sadd.s32 %s44, 1
      %s46 = scalar_select %p43, %s44, %s45
      %p49 = pneg %p43
      %p50 = scmp.eq.s32.totalorder %s20, 15
      %p51 = por %p49, %p50
      %p52 = scmp.ne.s32.totalorder %s44, %s47
      %p53 = scmp.eq.s32.totalorder %s20, 0
      %p54 = por %p52, %p53
      %p55 = scmp.ne.s32.totalorder %s44, %s47
      %p56 = scmp.eq.s32.totalorder %s25, 15
      %p57 = por %p55, %p56
      %p58 = scmp.ne.s32.totalorder %s47, %s48
      %p59 = scmp.eq.s32.totalorder %s25, 0
      %p60 = por %p58, %p59
      %p61 = scmp.ne.s32.totalorder %s47, %s48
      %p62 = scmp.eq.s32.totalorder %s26, 15
      %p63 = por %p61, %p62
      %p65 = scmp.ne.s32.totalorder %s48, %s64
      %p66 = scmp.eq.s32.totalorder %s26, 0
      %p67 = por %p65, %p66
      %s68 = sadd.s32 %s28, 1
      %s69 = sadd.s32 %s35, 1
      %s70 = ssub.s32 %s27, %s39
      %s71 = ssub.s32 %s68, %s69
      %s72 = sor.u32 %s70, %s71
      %p73 = scmp.eq.s32.totalorder %s72, 0
      %s75 = sadd.s32 %s74, 1
      %s76 = scalar_select %p73, %s74, %s75
      %p79 = pneg %p73
      %p80 = scmp.eq.s32.totalorder %s20, 15
      %p81 = por %p79, %p80
      %p82 = scmp.ne.s32.totalorder %s74, %s77
      %p83 = scmp.eq.s32.totalorder %s20, 0
      %p84 = por %p82, %p83
      %p85 = scmp.ne.s32.totalorder %s74, %s77
      %p86 = scmp.eq.s32.totalorder %s25, 15
      %p87 = por %p85, %p86
      %p88 = scmp.ne.s32.totalorder %s77, %s78
      %p89 = scmp.eq.s32.totalorder %s25, 0
      %p90 = por %p88, %p89
      %p91 = scmp.ne.s32.totalorder %s77, %s78
      %p92 = scmp.eq.s32.totalorder %s26, 15
      %p93 = por %p91, %p92
      %p95 = scmp.ne.s32.totalorder %s78, %s94
      %p96 = scmp.eq.s32.totalorder %s26, 0
      %p97 = por %p95, %p96
      %s98 = sadd.s32 %s28, 2
      %s99 = sadd.s32 %s35, 2
      %s100 = ssub.s32 %s27, %s39
      %s101 = ssub.s32 %s98, %s99
      %s102 = sor.u32 %s100, %s101
      %p103 = scmp.eq.s32.totalorder %s102, 0
      %s105 = sadd.s32 %s104, 1
      %s106 = scalar_select %p103, %s104, %s105
      %p109 = pneg %p103
      %p110 = scmp.eq.s32.totalorder %s20, 15
      %p111 = por %p109, %p110
      %p112 = scmp.ne.s32.totalorder %s104, %s107
      %p113 = scmp.eq.s32.totalorder %s20, 0
      %p114 = por %p112, %p113
      %p115 = scmp.ne.s32.totalorder %s104, %s107
      %p116 = scmp.eq.s32.totalorder %s25, 15
      %p117 = por %p115, %p116
      %p118 = scmp.ne.s32.totalorder %s107, %s108
      %p119 = scmp.eq.s32.totalorder %s25, 0
      %p120 = por %p118, %p119
      %p121 = scmp.ne.s32.totalorder %s107, %s108
      %p122 = scmp.eq.s32.totalorder %s26, 15
      %p123 = por %p121, %p122
      %p125 = scmp.ne.s32.totalorder %s108, %s124
      %p126 = scmp.eq.s32.totalorder %s26, 0
      %p127 = por %p125, %p126
      %s129 = sadd.s32 %s128, 1
      %p132 = scmp.eq.s32.totalorder %s20, 15
      %p133 = scmp.ne.s32.totalorder %s128, %s130
      %p134 = scmp.eq.s32.totalorder %s20, 0
      %p135 = por %p133, %p134
      %p136 = scmp.ne.s32.totalorder %s128, %s130
      %p137 = scmp.eq.s32.totalorder %s25, 15
      %p138 = por %p136, %p137
      %p139 = scmp.ne.s32.totalorder %s130, %s131
      %p140 = scmp.eq.s32.totalorder %s25, 0
      %p141 = por %p139, %p140
      %p142 = scmp.ne.s32.totalorder %s130, %s131
      %p143 = scmp.eq.s32.totalorder %s26, 15
      %p144 = por %p142, %p143
      %p146 = scmp.ne.s32.totalorder %s131, %s145
      %p147 = scmp.eq.s32.totalorder %s26, 0
      %p148 = por %p146, %p147
      %s150 = sadd.s32 %s149, 1
      %p153 = scmp.eq.s32.totalorder %s20, 15
      %p154 = scmp.ne.s32.totalorder %s149, %s151
      %p155 = scmp.eq.s32.totalorder %s20, 0
      %p156 = por %p154, %p155
      %p157 = scmp.ne.s32.totalorder %s149, %s151
      %p158 = scmp.eq.s32.totalorder %s25, 15
      %p159 = por %p157, %p158
      %p160 = scmp.ne.s32.totalorder %s151, %s152
      %p161 = scmp.eq.s32.totalorder %s25, 0
      %p162 = por %p160, %p161
      %p163 = scmp.ne.s32.totalorder %s151, %s152
      %p164 = scmp.eq.s32.totalorder %s26, 15
      %p165 = por %p163, %p164
      %p167 = scmp.ne.s32.totalorder %s152, %s166
      %p168 = scmp.eq.s32.totalorder %s26, 0
      %p169 = por %p167, %p168
      %s170 = ssub.s32 %s27, %s39
      %s171 = ssub.s32 %s28, %s35
      %s172 = sor.u32 %s170, %s171
      %p173 = scmp.eq.s32.totalorder %s172, 0
      %s175 = sadd.s32 %s174, 1
      %s176 = scalar_select %p173, %s174, %s175
      %p179 = pneg %p173
      %p180 = scmp.eq.s32.totalorder %s20, 15
      %p181 = por %p179, %p180
      %p182 = scmp.ne.s32.totalorder %s174, %s177
      %p183 = scmp.eq.s32.totalorder %s20, 0
      %p184 = por %p182, %p183
      %p185 = scmp.ne.s32.totalorder %s174, %s177
      %p186 = scmp.eq.s32.totalorder %s25, 15
      %p187 = por %p185, %p186
      %p188 = scmp.ne.s32.totalorder %s177, %s178
      %p189 = scmp.eq.s32.totalorder %s25, 0
      %p190 = por %p188, %p189
      %p191 = scmp.ne.s32.totalorder %s177, %s178
      %p192 = scmp.eq.s32.totalorder %s26, 15
      %p193 = por %p191, %p192
      %p195 = scmp.ne.s32.totalorder %s178, %s194
      %p196 = scmp.eq.s32.totalorder %s26, 0
      %p197 = por %p195, %p196
      %s198 = ssub.s32 %s27, %s39
      %p199 = scmp.eq.s32.totalorder %s198, 0
      %s201 = sadd.s32 %s200, 1
      %s202 = scalar_select %p199, %s200, %s201
      %p205 = pneg %p199
      %p206 = scmp.eq.s32.totalorder %s20, 15
      %p207 = por %p205, %p206
      %p208 = scmp.ne.s32.totalorder %s200, %s203
      %p209 = scmp.eq.s32.totalorder %s20, 0
      %p210 = por %p208, %p209
      %p211 = scmp.ne.s32.totalorder %s200, %s203
      %p212 = scmp.eq.s32.totalorder %s25, 15
      %p213 = por %p211, %p212
      %p214 = scmp.ne.s32.totalorder %s203, %s204
      %p215 = scmp.eq.s32.totalorder %s25, 0
      %p216 = por %p214, %p215
      %p217 = scmp.ne.s32.totalorder %s203, %s204
      %p218 = scmp.eq.s32.totalorder %s26, 15
      %p219 = por %p217, %p218
      %p221 = scmp.ne.s32.totalorder %s204, %s220
      %p222 = scmp.eq.s32.totalorder %s26, 0
      %p223 = por %p221, %p222
      %s224 = ssub.s32 %s27, %s39
      %p225 = scmp.eq.s32.totalorder %s224, 0
      %s227 = sadd.s32 %s226, 1
      %s228 = scalar_select %p225, %s226, %s227
      %p231 = pneg %p225
      %p232 = scmp.eq.s32.totalorder %s20, 15
      %p233 = por %p231, %p232
      %p234 = scmp.ne.s32.totalorder %s226, %s229
      %p235 = scmp.eq.s32.totalorder %s20, 0
      %p236 = por %p234, %p235
      %p237 = scmp.ne.s32.totalorder %s226, %s229
      %p238 = scmp.eq.s32.totalorder %s25, 15
      %p239 = por %p237, %p238
      %p240 = scmp.ne.s32.totalorder %s229, %s230
      %p241 = scmp.eq.s32.totalorder %s25, 0
      %p242 = por %p240, %p241
      %p243 = scmp.ne.s32.totalorder %s229, %s230
      %p244 = scmp.eq.s32.totalorder %s26, 15
      %p245 = por %p243, %p244
      %p247 = scmp.ne.s32.totalorder %s230, %s246
      %p248 = scmp.eq.s32.totalorder %s26, 0
      %p249 = por %p247, %p248
      %p250 = scmp.le.s32.totalorder 1, %s20
      %p251 = scmp.lt.s32.totalorder %s20, 17
      %p252 = pnand %p250, %p251
      %p253 = pneg %p252
      // Predicated region
      $region9: #{tpu_custom_call.1} parent=5 // pred_check
        _
      $region10: #{tpu_custom_call.1} parent=5 // pred_check_branch
        %255 = sbr.rel (%p252) target = $region12
      $region11: #{tpu_custom_call.1} parent=5 // pred_region
        %s256 = ssub.s32 %s20, 1
        // Predicated region
        $region13: #{tpu_custom_call.1} parent=11 // pred_check
          %p257 = pneg %p141
        $region14: #{tpu_custom_call.1} parent=11 // pred_check_branch
          %259 = sbr.rel (%p257) target = $region16
        $region15: #{tpu_custom_call.1} parent=11 // pred_region
          _
        $region16: #{tpu_custom_call.1} parent=11 // pred_fallthru
          _
        // Predicated region
        $region17: #{tpu_custom_call.1} parent=11 // pred_check
          %p260 = pneg %p162
        $region18: #{tpu_custom_call.1} parent=11 // pred_check_branch
          %262 = sbr.rel (%p260) target = $region20
        $region19: #{tpu_custom_call.1} parent=11 // pred_region
          _
        $region20: #{tpu_custom_call.1} parent=11 // pred_fallthru
          _
      $region12: #{tpu_custom_call.1} parent=5 // pred_fallthru
        _
      %p263 = scmp.lt.s32.totalorder %s20, 16
      // Predicated region
      $region21: #{tpu_custom_call.1} parent=5 // pred_check
        %p264 = pneg %p263
      $region22: #{tpu_custom_call.1} parent=5 // pred_check_branch
        %266 = sbr.rel (%p264) target = $region24
      $region23: #{tpu_custom_call.1} parent=5 // pred_region
        // Predicated region
        $region25: #{tpu_custom_call.1} parent=23 // pred_check
          %p267 = pneg %p54
        $region26: #{tpu_custom_call.1} parent=23 // pred_check_branch
          %269 = sbr.rel (%p267) target = $region28
        $region27: #{tpu_custom_call.1} parent=23 // pred_region
          %p270 = scmp.lt.s32.totalorder %s27, 1
          %s271 = scalar_select %p270, %s27, 1
          %p272 = scmp.lt.s32.totalorder %s28, 9
          %s273 = scalar_select %p272, %s28, 9
          %s274 = smul.addr %s273, 20
          %s275 = smul.addr %s271, 200
          %s276 = sadd.s32 %s274, %s275
          %s277 = smul.addr %s276, 8
          %s278 = scalar_lea.vmem %s0, %s277
        $region28: #{tpu_custom_call.1} parent=23 // pred_fallthru
          _
        // Predicated region
        $region29: #{tpu_custom_call.1} parent=23 // pred_check
          %p279 = pneg %p84
        $region30: #{tpu_custom_call.1} parent=23 // pred_check_branch
          %281 = sbr.rel (%p279) target = $region32
        $region31: #{tpu_custom_call.1} parent=23 // pred_region
          %s282 = sadd.s32 %s28, 1
          %p283 = scmp.lt.s32.totalorder %s27, 1
          %s284 = scalar_select %p283, %s27, 1
          %p285 = scmp.lt.s32.totalorder %s282, 9
          %s286 = scalar_select %p285, %s282, 9
          %s287 = smul.addr %s286, 20
          %s288 = smul.addr %s284, 200
          %s289 = sadd.s32 %s287, %s288
          %s290 = smul.addr %s289, 8
          %s291 = scalar_lea.vmem %s1, %s290
          %s292 = sadd.s32 %s28, 1
        $region32: #{tpu_custom_call.1} parent=23 // pred_fallthru
          _
        // Predicated region
        $region33: #{tpu_custom_call.1} parent=23 // pred_check
          %p293 = pneg %p114
        $region34: #{tpu_custom_call.1} parent=23 // pred_check_branch
          %295 = sbr.rel (%p293) target = $region36
        $region35: #{tpu_custom_call.1} parent=23 // pred_region
          %s296 = sadd.s32 %s28, 2
          %p297 = scmp.lt.s32.totalorder %s27, 1
          %s298 = scalar_select %p297, %s27, 1
          %p299 = scmp.lt.s32.totalorder %s296, 9
          %s300 = scalar_select %p299, %s296, 9
          %s301 = smul.addr %s300, 20
          %s302 = smul.addr %s298, 200
          %s303 = sadd.s32 %s301, %s302
          %s304 = smul.addr %s303, 8
          %s305 = scalar_lea.vmem %s2, %s304
          %s306 = sadd.s32 %s28, 2
        $region36: #{tpu_custom_call.1} parent=23 // pred_fallthru
          _
      $region24: #{tpu_custom_call.1} parent=5 // pred_fallthru
        _
      %p307 = scmp.le.s32.totalorder 1, %s20
      %p308 = scmp.lt.s32.totalorder %s20, 17
      %p309 = pnand %p307, %p308
      %p310 = pneg %p309
      // Predicated region
      $region37: #{tpu_custom_call.1} parent=5 // pred_check
        _
      $region38: #{tpu_custom_call.1} parent=5 // pred_check_branch
        %312 = sbr.rel (%p309) target = $region40
      $region39: #{tpu_custom_call.1} parent=5 // pred_region
        %s313 = ssub.s32 %s20, 1
        %p314 = scmp.lt.s32.totalorder %s29, 1
        %s315 = scalar_select %p314, %s29, 1
        %p316 = scmp.lt.s32.totalorder %s30, 9
        %s317 = scalar_select %p316, %s30, 9
        %s318 = smul.addr %s317, 20
        %s319 = smul.addr %s315, 200
        %s320 = sadd.s32 %s318, %s319
        %s321 = smul.addr %s320, 8
        %s322 = scalar_lea.vmem %s0, %s321
        %p323 = pneg %p60
        %p324 = pneg %p57
        %s325 = sadd.s32 %s30, 1
        %p326 = scmp.lt.s32.totalorder %s29, 1
        %s327 = scalar_select %p326, %s29, 1
        %p328 = scmp.lt.s32.totalorder %s325, 9
        %s329 = scalar_select %p328, %s325, 9
        %s330 = smul.addr %s329, 20
        %s331 = smul.addr %s327, 200
        %s332 = sadd.s32 %s330, %s331
        %s333 = smul.addr %s332, 8
        %s334 = scalar_lea.vmem %s1, %s333
        %p335 = pneg %p90
        %p336 = pneg %p87
        %s337 = sadd.s32 %s30, 2
        %p338 = scmp.lt.s32.totalorder %s29, 1
        %s339 = scalar_select %p338, %s29, 1
        %p340 = scmp.lt.s32.totalorder %s337, 9
        %s341 = scalar_select %p340, %s337, 9
        %s342 = smul.addr %s341, 20
        %s343 = smul.addr %s339, 200
        %s344 = sadd.s32 %s342, %s343
        %s345 = smul.addr %s344, 8
        %s346 = scalar_lea.vmem %s2, %s345
        %p347 = pneg %p120
        %p348 = pneg %p117
        %p349 = pneg %p141
        %p350 = pneg %p138
        %p351 = pneg %p162
        %p352 = pneg %p159
        %p353 = pneg %p190
        %p354 = pneg %p187
        %p355 = scmp.lt.s32.totalorder %s29, 1
        %s356 = scalar_select %p355, %s29, 1
        %p357 = scmp.lt.s32.totalorder %s30, 7
        %s358 = scalar_select %p357, %s30, 7
        %s359 = smul.addr %s358, 8
        %s360 = smul.addr %s356, 64
        %s361 = sadd.s32 %s359, %s360
        %s362 = smul.addr %s361, 8
        %s363 = scalar_lea.vmem %s5, %s362
        %p364 = pneg %p216
        %p365 = pneg %p213
        %s366 = sand.u32 %s203, 1
        %s367 = scalar_lea.sflag [#allocation3], %s366
        %s368 = sand.u32 %s203, 1
        %s369 = scalar_lea.vmem [#allocation2], %s368
        %p370 = pneg %p242
        %p371 = pneg %p239
        %s372 = sand.u32 %s229, 1
        %s373 = scalar_lea.sflag [#allocation5], %s372
        %s374 = sand.u32 %s229, 1
        %s375 = scalar_lea.vmem [#allocation4], %s374
        %p376 = scmp.lt.s32.totalorder %s29, 1
        %s377 = scalar_select %p376, %s29, 1
        %p378 = scmp.lt.s32.totalorder %s30, 9
        %s379 = scalar_select %p378, %s30, 9
        %s380 = smul.addr %s379, 20
        %s381 = smul.addr %s377, 200
        %s382 = sadd.s32 %s380, %s381
        %s383 = smul.addr %s382, 8
        %s384 = scalar_lea.vmem %s0, %s383
        %s385 = sadd.s32 %s30, 1
        %p386 = scmp.lt.s32.totalorder %s29, 1
        %s387 = scalar_select %p386, %s29, 1
        %p388 = scmp.lt.s32.totalorder %s385, 9
        %s389 = scalar_select %p388, %s385, 9
        %s390 = smul.addr %s389, 20
        %s391 = smul.addr %s387, 200
        %s392 = sadd.s32 %s390, %s391
        %s393 = smul.addr %s392, 8
        %s394 = scalar_lea.vmem %s1, %s393
        %s395 = sadd.s32 %s30, 1
        %s396 = sadd.s32 %s30, 2
        %p397 = scmp.lt.s32.totalorder %s29, 1
        %s398 = scalar_select %p397, %s29, 1
        %p399 = scmp.lt.s32.totalorder %s396, 9
        %s400 = scalar_select %p399, %s396, 9
        %s401 = smul.addr %s400, 20
        %s402 = smul.addr %s398, 200
        %s403 = sadd.s32 %s401, %s402
        %s404 = smul.addr %s403, 8
        %s405 = scalar_lea.vmem %s2, %s404
        %s406 = sadd.s32 %s30, 2
        %p407 = scmp.lt.s32.totalorder %s29, 1
        %s408 = scalar_select %p407, %s29, 1
        %p409 = scmp.lt.s32.totalorder %s30, 7
        %s410 = scalar_select %p409, %s30, 7
        %s411 = smul.addr %s410, 8
        %s412 = smul.addr %s408, 64
        %s413 = sadd.s32 %s411, %s412
        %s414 = smul.addr %s413, 8
        %s415 = scalar_lea.vmem %s5, %s414
        %v416 = vld [vmem:[%s3] sm:$0xff]
        %v417 = vld [vmem:[%s3 + $0x8] sm:$0xff]
        %v418 = vld [vmem:[%s3 + $0x10] sm:$0xff]
        %v419 = vld [vmem:[%s3 + $0x18] sm:$0xff]
        %v420 = vld [vmem:[%s3 + $0x20] sm:$0xff]
        %v421 = vld [vmem:[%s3 + $0x28] sm:$0xff]
        %v422 = vld [vmem:[%s3 + $0x30] sm:$0xff]
        %v423 = vld [vmem:[%s3 + $0x38] sm:$0xff]
        %v424 = vld [vmem:[%s3 + $0x40] sm:$0xff]
        %v425 = vld [vmem:[%s3 + $0x48] sm:$0xff]
        %v426 = vld [vmem:[%s3 + $0x50] sm:$0xff]
        %v427 = vld [vmem:[%s3 + $0x58] sm:$0xff]
        %v428 = vld [vmem:[%s3 + $0x60] sm:$0xff]
        %v429 = vld [vmem:[%s3 + $0x68] sm:$0xff]
        %v430 = vld [vmem:[%s3 + $0x70] sm:$0xff]
        %v431 = vld [vmem:[%s3 + $0x78] sm:$0xff]
        %v432 = vld [vmem:[%s3 + $0x80] sm:$0xff]
        %v433 = vld [vmem:[%s3 + $0x88] sm:$0xff]
        %v434 = vld [vmem:[%s3 + $0x90] sm:$0xff]
        %v435 = vld [vmem:[%s3 + $0x98] sm:$0xff]
        %v436 = vld [vmem:[%s3 + $0xa0] sm:$0xff]
        %v437 = vld [vmem:[%s3 + $0xa8] sm:$0xff]
        %v438 = vld [vmem:[%s3 + $0xb0] sm:$0xff]
        %v439 = vld [vmem:[%s3 + $0xb8] sm:$0xff]
        %v440 = vld [vmem:[%s3 + $0xc0] sm:$0xff]
        %v441 = vld [vmem:[%s3 + $0xc8] sm:$0xff]
        %v442 = vld [vmem:[%s3 + $0xd0] sm:$0xff]
        %v443 = vld [vmem:[%s384] sm:$0xff]
        %v444 = vld [vmem:[%s384 + $0x8] sm:$0x3]
        %v445 = vld [vmem:[%s384 + $0x10] sm:$0xff]
        %v446 = vld [vmem:[%s384 + $0x18] sm:$0x3]
        %v447 = vld [vmem:[%s384 + $0x20] sm:$0xff]
        %v448 = vld [vmem:[%s384 + $0x28] sm:$0x3]
        %v449 = vld [vmem:[%s384 + $0x30] sm:$0xff]
        %v450 = vld [vmem:[%s384 + $0x38] sm:$0x3]
        %v451 = vld [vmem:[%s384 + $0x40] sm:$0xff]
        %v452 = vld [vmem:[%s384 + $0x48] sm:$0x3]
        %v453 = vld [vmem:[%s384 + $0x50] sm:$0xff]
        %v454 = vld [vmem:[%s384 + $0x58] sm:$0x3]
        %v455 = vld [vmem:[%s384 + $0x60] sm:$0xff]
        %v456 = vld [vmem:[%s384 + $0x68] sm:$0x3]
        %v457 = vld [vmem:[%s384 + $0x70] sm:$0xff]
        %v458 = vld [vmem:[%s384 + $0x78] sm:$0x3]
        %v459 = vld [vmem:[%s384 + $0x80] sm:$0xff]
        %v460 = vld [vmem:[%s384 + $0x88] sm:$0x3]
        %v461 = vld [vmem:[%s384 + $0x90] sm:$0xff]
        %v462 = vld [vmem:[%s384 + $0x98] sm:$0x3]
        %vm479 = vcmask 1046528
        %v480 = vrot.slane %v443, 1
        %v481 = vrot.slane %v444, 1
        %v482 = vsel %vm479, %v480, %v481
        %v483 = vrot.slane %v445, 1
        %v484 = vrot.slane %v446, 1
        %v485 = vsel %vm479, %v483, %v484
        %v486 = vrot.slane %v447, 1
        %v487 = vrot.slane %v448, 1
        %v488 = vsel %vm479, %v486, %v487
        %v489 = vrot.slane %v449, 1
        %v490 = vrot.slane %v450, 1
        %v491 = vsel %vm479, %v489, %v490
        %v492 = vrot.slane %v451, 1
        %v493 = vrot.slane %v452, 1
        %v494 = vsel %vm479, %v492, %v493
        %v495 = vrot.slane %v453, 1
        %v496 = vrot.slane %v454, 1
        %v497 = vsel %vm479, %v495, %v496
        %v498 = vrot.slane %v455, 1
        %v499 = vrot.slane %v456, 1
        %v500 = vsel %vm479, %v498, %v499
        %v501 = vrot.slane %v457, 1
        %v502 = vrot.slane %v458, 1
        %v503 = vsel %vm479, %v501, %v502
        %vm504 = vcmask 64512
        %v505 = vsel %vm504, %v482, 0
        %v507 = vsel %vm504, %v485, 0
        %v509 = vsel %vm504, %v488, 0
        %v511 = vsel %vm504, %v491, 0
        %v513 = vsel %vm504, %v494, 0
        %v515 = vsel %vm504, %v497, 0
        %v517 = vsel %vm504, %v500, 0
        %v519 = vsel %vm504, %v503, 0
        %521 = vmatprep.subr.mxu0 0.0
        %522 = vmatpush1.msra.mxu0 0.0
        %523 = vmatprep.subr.mxu0 0.0
        %524 = vmatpush1.msra.mxu0 0.0
        %525 = vmatprep.subr.mxu0 0.0
        %526 = vmatpush1.msra.mxu0 0.0
        %527 = vmatprep.subr.mxu0 0.0
        %528 = vmatpush1.msra.mxu0 0.0
        %529 = vmatprep.subr.mxu0 0.0
        %530 = vmatpush1.msra.mxu0 0.0
        %531 = vmatprep.subr.mxu0 0.0
        %532 = vmatpush1.msra.mxu0 0.0
        %533 = vmatprep.subr.mxu0 0.0
        %534 = vmatpush1.msra.mxu0 0.0
        %535 = vmatprep.subr.mxu0 0.0
        %536 = vmatpush1.msra.mxu0 0.0
        %537 = vmatprep.subr.mxu0 0.0
        %538 = vmatpush1.msra.mxu0 0.0
        %539 = vmatprep.subr.mxu0 0.0
        %540 = vmatpush1.msra.mxu0 0.0
        %541 = vmatprep.subr.mxu0 0.0
        %542 = vmatpush1.msra.mxu0 0.0
        %543 = vmatprep.subr.mxu0 0.0
        %544 = vmatpush1.msra.mxu0 0.0
        %545 = vmatprep.subr.mxu0 0.0
        %546 = vmatpush1.msra.mxu0 0.0
        %547 = vmatprep.subr.mxu0 0.0
        %548 = vmatpush1.msra.mxu0 0.0
        %549 = vmatprep.subr.mxu0 0.0
        %550 = vmatpush1.msra.mxu0 0.0
        %551 = vmatprep.subr.mxu0 0.0
        %552 = vmatpush1.msra.mxu0 %v417
        %553 = vmatprep.subr.mxu0 0.0
        %554 = vmatpush2.msra.mxu0 0.0
        %555 = vmatprep.subr.mxu0 0.0
        %556 = vmatpush2.msra.mxu0 0.0
        %557 = vmatprep.subr.mxu0 0.0
        %558 = vmatpush2.msra.mxu0 0.0
        %559 = vmatprep.subr.mxu0 0.0
        %560 = vmatpush2.msra.mxu0 0.0
        %561 = vmatprep.subr.mxu0 0.0
        %562 = vmatpush2.msra.mxu0 0.0
        %563 = vmatprep.subr.mxu0 0.0
        %564 = vmatpush2.msra.mxu0 0.0
        %565 = vmatprep.subr.mxu0 0.0
        %566 = vmatpush2.msra.mxu0 0.0
        %567 = vmatprep.subr.mxu0 0.0
        %568 = vmatpush2.msra.mxu0 0.0
        %569 = vmatprep.subr.mxu0 0.0
        %570 = vmatpush2.msra.mxu0 0.0
        %571 = vmatprep.subr.mxu0 0.0
        %572 = vmatpush2.msra.mxu0 0.0
        %573 = vmatprep.subr.mxu0 0.0
        %574 = vmatpush2.msra.mxu0 0.0
        %575 = vmatprep.subr.mxu0 0.0
        %576 = vmatpush2.msra.mxu0 0.0
        %577 = vmatprep.subr.mxu0 0.0
        %578 = vmatpush2.msra.mxu0 0.0
        %579 = vmatprep.subr.mxu0 0.0
        %580 = vmatpush2.msra.mxu0 0.0
        %581 = vmatprep.subr.mxu0 0.0
        %582 = vmatpush2.msra.mxu0 0.0
        %583 = vmatprep.subr.mxu0 0.0
        %584 = vmatpush2.msra.mxu0 0.0
        %585 = vmatprep.mubr.f32.mxu0 0.0
        %586 = vmatmul.mubr.f32.gmra.mxu0 %v505
        %v587 = vpop.f32.mrf.mxu0
        %v588 = vadd.f32 0.0, %v587
        %v589 = vpop.f32.mrf.mxu0
        %590 = vmatprep.mubr.f32.mxu0 0.0
        %591 = vmatmul.mubr.f32.gmra.mxu0 %v507
        %v592 = vpop.f32.mrf.mxu0
        %v593 = vadd.f32 0.0, %v592
        %v594 = vpop.f32.mrf.mxu0
        %595 = vmatprep.mubr.f32.mxu0 0.0
        %596 = vmatmul.mubr.f32.gmra.mxu0 %v509
        %v597 = vpop.f32.mrf.mxu0
        %v598 = vadd.f32 0.0, %v597
        %v599 = vpop.f32.mrf.mxu0
        %600 = vmatprep.mubr.f32.mxu0 0.0
        %601 = vmatmul.mubr.f32.gmra.mxu0 %v511
        %v602 = vpop.f32.mrf.mxu0
        %v603 = vadd.f32 0.0, %v602
        %v604 = vpop.f32.mrf.mxu0
        %605 = vmatprep.mubr.f32.mxu0 0.0
        %606 = vmatmul.mubr.f32.gmra.mxu0 %v513
        %v607 = vpop.f32.mrf.mxu0
        %v608 = vadd.f32 0.0, %v607
        %v609 = vpop.f32.mrf.mxu0
        %610 = vmatprep.mubr.f32.mxu0 0.0
        %611 = vmatmul.mubr.f32.gmra.mxu0 %v515
        %v612 = vpop.f32.mrf.mxu0
        %v613 = vadd.f32 0.0, %v612
        %v614 = vpop.f32.mrf.mxu0
        %615 = vmatprep.mubr.f32.mxu0 0.0
        %616 = vmatmul.mubr.f32.gmra.mxu0 %v517
        %v617 = vpop.f32.mrf.mxu0
        %v618 = vadd.f32 0.0, %v617
        %v619 = vpop.f32.mrf.mxu0
        %620 = vmatprep.mubr.f32.mxu0 0.0
        %621 = vmatmul.mubr.f32.gmra.mxu0 %v519
        %v622 = vpop.f32.mrf.mxu0
        %v623 = vadd.f32 0.0, %v622
        %v624 = vpop.f32.mrf.mxu0
        %625 = vdwg.mxu0
        %v626 = vsel %vm504, %v443, 0
        %v628 = vsel %vm504, %v445, 0
        %v630 = vsel %vm504, %v447, 0
        %v632 = vsel %vm504, %v449, 0
        %v634 = vsel %vm504, %v451, 0
        %v636 = vsel %vm504, %v453, 0
        %v638 = vsel %vm504, %v455, 0
        %v640 = vsel %vm504, %v457, 0
        %642 = vmatprep.subr.mxu0 0.0
        %643 = vmatpush1.msra.mxu0 0.0
        %644 = vmatprep.subr.mxu0 0.0
        %645 = vmatpush1.msra.mxu0 0.0
        %646 = vmatprep.subr.mxu0 0.0
        %647 = vmatpush1.msra.mxu0 0.0
        %648 = vmatprep.subr.mxu0 0.0
        %649 = vmatpush1.msra.mxu0 0.0
        %650 = vmatprep.subr.mxu0 0.0
        %651 = vmatpush1.msra.mxu0 0.0
        %652 = vmatprep.subr.mxu0 0.0
        %653 = vmatpush1.msra.mxu0 0.0
        %654 = vmatprep.subr.mxu0 0.0
        %655 = vmatpush1.msra.mxu0 0.0
        %656 = vmatprep.subr.mxu0 0.0
        %657 = vmatpush1.msra.mxu0 0.0
        %658 = vmatprep.subr.mxu0 0.0
        %659 = vmatpush1.msra.mxu0 0.0
        %660 = vmatprep.subr.mxu0 0.0
        %661 = vmatpush1.msra.mxu0 0.0
        %662 = vmatprep.subr.mxu0 0.0
        %663 = vmatpush1.msra.mxu0 0.0
        %664 = vmatprep.subr.mxu0 0.0
        %665 = vmatpush1.msra.mxu0 0.0
        %666 = vmatprep.subr.mxu0 0.0
        %667 = vmatpush1.msra.mxu0 0.0
        %668 = vmatprep.subr.mxu0 0.0
        %669 = vmatpush1.msra.mxu0 0.0
        %670 = vmatprep.subr.mxu0 0.0
        %671 = vmatpush1.msra.mxu0 0.0
        %672 = vmatprep.subr.mxu0 0.0
        %673 = vmatpush1.msra.mxu0 %v416
        %674 = vmatprep.subr.mxu0 0.0
        %675 = vmatpush2.msra.mxu0 0.0
        %676 = vmatprep.subr.mxu0 0.0
        %677 = vmatpush2.msra.mxu0 0.0
        %678 = vmatprep.subr.mxu0 0.0
        %679 = vmatpush2.msra.mxu0 0.0
        %680 = vmatprep.subr.mxu0 0.0
        %681 = vmatpush2.msra.mxu0 0.0
        %682 = vmatprep.subr.mxu0 0.0
        %683 = vmatpush2.msra.mxu0 0.0
        %684 = vmatprep.subr.mxu0 0.0
        %685 = vmatpush2.msra.mxu0 0.0
        %686 = vmatprep.subr.mxu0 0.0
        %687 = vmatpush2.msra.mxu0 0.0
        %688 = vmatprep.subr.mxu0 0.0
        %689 = vmatpush2.msra.mxu0 0.0
        %690 = vmatprep.subr.mxu0 0.0
        %691 = vmatpush2.msra.mxu0 0.0
        %692 = vmatprep.subr.mxu0 0.0
        %693 = vmatpush2.msra.mxu0 0.0
        %694 = vmatprep.subr.mxu0 0.0
        %695 = vmatpush2.msra.mxu0 0.0
        %696 = vmatprep.subr.mxu0 0.0
        %697 = vmatpush2.msra.mxu0 0.0
        %698 = vmatprep.subr.mxu0 0.0
        %699 = vmatpush2.msra.mxu0 0.0
        %700 = vmatprep.subr.mxu0 0.0
        %701 = vmatpush2.msra.mxu0 0.0
        %702 = vmatprep.subr.mxu0 0.0
        %703 = vmatpush2.msra.mxu0 0.0
        %704 = vmatprep.subr.mxu0 0.0
        %705 = vmatpush2.msra.mxu0 0.0
        %706 = vmatprep.mubr.f32.mxu0 0.0
        %707 = vmatmul.mubr.f32.gmra.mxu0 %v626
        %v708 = vpop.f32.mrf.mxu0
        %v709 = vadd.f32 %v588, %v708
        %v710 = vpop.f32.mrf.mxu0
        %711 = vmatprep.mubr.f32.mxu0 0.0
        %712 = vmatmul.mubr.f32.gmra.mxu0 %v628
        %v713 = vpop.f32.mrf.mxu0
        %v714 = vadd.f32 %v593, %v713
        %v715 = vpop.f32.mrf.mxu0
        %716 = vmatprep.mubr.f32.mxu0 0.0
        %717 = vmatmul.mubr.f32.gmra.mxu0 %v630
        %v718 = vpop.f32.mrf.mxu0
        %v719 = vadd.f32 %v598, %v718
        %v720 = vpop.f32.mrf.mxu0
        %721 = vmatprep.mubr.f32.mxu0 0.0
        %722 = vmatmul.mubr.f32.gmra.mxu0 %v632
        %v723 = vpop.f32.mrf.mxu0
        %v724 = vadd.f32 %v603, %v723
        %v725 = vpop.f32.mrf.mxu0
        %726 = vmatprep.mubr.f32.mxu0 0.0
        %727 = vmatmul.mubr.f32.gmra.mxu0 %v634
        %v728 = vpop.f32.mrf.mxu0
        %v729 = vadd.f32 %v608, %v728
        %v730 = vpop.f32.mrf.mxu0
        %731 = vmatprep.mubr.f32.mxu0 0.0
        %732 = vmatmul.mubr.f32.gmra.mxu0 %v636
        %v733 = vpop.f32.mrf.mxu0
        %v734 = vadd.f32 %v613, %v733
        %v735 = vpop.f32.mrf.mxu0
        %736 = vmatprep.mubr.f32.mxu0 0.0
        %737 = vmatmul.mubr.f32.gmra.mxu0 %v638
        %v738 = vpop.f32.mrf.mxu0
        %v739 = vadd.f32 %v618, %v738
        %v740 = vpop.f32.mrf.mxu0
        %741 = vmatprep.mubr.f32.mxu0 0.0
        %742 = vmatmul.mubr.f32.gmra.mxu0 %v640
        %v743 = vpop.f32.mrf.mxu0
        %v744 = vadd.f32 %v623, %v743
        %v745 = vpop.f32.mrf.mxu0
        %746 = vdwg.mxu0
        %vm747 = vcmask 1045504
        %v748 = vrot.slane %v443, 2
        %v749 = vrot.slane %v444, 2
        %v750 = vsel %vm747, %v748, %v749
        %v751 = vrot.slane %v445, 2
        %v752 = vrot.slane %v446, 2
        %v753 = vsel %vm747, %v751, %v752
        %v754 = vrot.slane %v447, 2
        %v755 = vrot.slane %v448, 2
        %v756 = vsel %vm747, %v754, %v755
        %v757 = vrot.slane %v449, 2
        %v758 = vrot.slane %v450, 2
        %v759 = vsel %vm747, %v757, %v758
        %v760 = vrot.slane %v451, 2
        %v761 = vrot.slane %v452, 2
        %v762 = vsel %vm747, %v760, %v761
        %v763 = vrot.slane %v453, 2
        %v764 = vrot.slane %v454, 2
        %v765 = vsel %vm747, %v763, %v764
        %v766 = vrot.slane %v455, 2
        %v767 = vrot.slane %v456, 2
        %v768 = vsel %vm747, %v766, %v767
        %v769 = vrot.slane %v457, 2
        %v770 = vrot.slane %v458, 2
        %v771 = vsel %vm747, %v769, %v770
        %v772 = vsel %vm504, %v750, 0
        %v774 = vsel %vm504, %v753, 0
        %v776 = vsel %vm504, %v756, 0
        %v778 = vsel %vm504, %v759, 0
        %v780 = vsel %vm504, %v762, 0
        %v782 = vsel %vm504, %v765, 0
        %v784 = vsel %vm504, %v768, 0
        %v786 = vsel %vm504, %v771, 0
        %788 = vmatprep.subr.mxu0 0.0
        %789 = vmatpush1.msra.mxu0 0.0
        %790 = vmatprep.subr.mxu0 0.0
        %791 = vmatpush1.msra.mxu0 0.0
        %792 = vmatprep.subr.mxu0 0.0
        %793 = vmatpush1.msra.mxu0 0.0
        %794 = vmatprep.subr.mxu0 0.0
        %795 = vmatpush1.msra.mxu0 0.0
        %796 = vmatprep.subr.mxu0 0.0
        %797 = vmatpush1.msra.mxu0 0.0
        %798 = vmatprep.subr.mxu0 0.0
        %799 = vmatpush1.msra.mxu0 0.0
        %800 = vmatprep.subr.mxu0 0.0
        %801 = vmatpush1.msra.mxu0 0.0
        %802 = vmatprep.subr.mxu0 0.0
        %803 = vmatpush1.msra.mxu0 0.0
        %804 = vmatprep.subr.mxu0 0.0
        %805 = vmatpush1.msra.mxu0 0.0
        %806 = vmatprep.subr.mxu0 0.0
        %807 = vmatpush1.msra.mxu0 0.0
        %808 = vmatprep.subr.mxu0 0.0
        %809 = vmatpush1.msra.mxu0 0.0
        %810 = vmatprep.subr.mxu0 0.0
        %811 = vmatpush1.msra.mxu0 0.0
        %812 = vmatprep.subr.mxu0 0.0
        %813 = vmatpush1.msra.mxu0 0.0
        %814 = vmatprep.subr.mxu0 0.0
        %815 = vmatpush1.msra.mxu0 0.0
        %816 = vmatprep.subr.mxu0 0.0
        %817 = vmatpush1.msra.mxu0 0.0
        %818 = vmatprep.subr.mxu0 0.0
        %819 = vmatpush1.msra.mxu0 %v418
        %820 = vmatprep.subr.mxu0 0.0
        %821 = vmatpush2.msra.mxu0 0.0
        %822 = vmatprep.subr.mxu0 0.0
        %823 = vmatpush2.msra.mxu0 0.0
        %824 = vmatprep.subr.mxu0 0.0
        %825 = vmatpush2.msra.mxu0 0.0
        %826 = vmatprep.subr.mxu0 0.0
        %827 = vmatpush2.msra.mxu0 0.0
        %828 = vmatprep.subr.mxu0 0.0
        %829 = vmatpush2.msra.mxu0 0.0
        %830 = vmatprep.subr.mxu0 0.0
        %831 = vmatpush2.msra.mxu0 0.0
        %832 = vmatprep.subr.mxu0 0.0
        %833 = vmatpush2.msra.mxu0 0.0
        %834 = vmatprep.subr.mxu0 0.0
        %835 = vmatpush2.msra.mxu0 0.0
        %836 = vmatprep.subr.mxu0 0.0
        %837 = vmatpush2.msra.mxu0 0.0
        %838 = vmatprep.subr.mxu0 0.0
        %839 = vmatpush2.msra.mxu0 0.0
        %840 = vmatprep.subr.mxu0 0.0
        %841 = vmatpush2.msra.mxu0 0.0
        %842 = vmatprep.subr.mxu0 0.0
        %843 = vmatpush2.msra.mxu0 0.0
        %844 = vmatprep.subr.mxu0 0.0
        %845 = vmatpush2.msra.mxu0 0.0
        %846 = vmatprep.subr.mxu0 0.0
        %847 = vmatpush2.msra.mxu0 0.0
        %848 = vmatprep.subr.mxu0 0.0
        %849 = vmatpush2.msra.mxu0 0.0
        %850 = vmatprep.subr.mxu0 0.0
        %851 = vmatpush2.msra.mxu0 0.0
        %852 = vmatprep.mubr.f32.mxu0 0.0
        %853 = vmatmul.mubr.f32.gmra.mxu0 %v772
        %v854 = vpop.f32.mrf.mxu0
        %v855 = vadd.f32 0.0, %v854
        %v856 = vpop.f32.mrf.mxu0
        %857 = vmatprep.mubr.f32.mxu0 0.0
        %858 = vmatmul.mubr.f32.gmra.mxu0 %v774
        %v859 = vpop.f32.mrf.mxu0
        %v860 = vadd.f32 0.0, %v859
        %v861 = vpop.f32.mrf.mxu0
        %862 = vmatprep.mubr.f32.mxu0 0.0
        %863 = vmatmul.mubr.f32.gmra.mxu0 %v776
        %v864 = vpop.f32.mrf.mxu0
        %v865 = vadd.f32 0.0, %v864
        %v866 = vpop.f32.mrf.mxu0
        %867 = vmatprep.mubr.f32.mxu0 0.0
        %868 = vmatmul.mubr.f32.gmra.mxu0 %v778
        %v869 = vpop.f32.mrf.mxu0
        %v870 = vadd.f32 0.0, %v869
        %v871 = vpop.f32.mrf.mxu0
        %872 = vmatprep.mubr.f32.mxu0 0.0
        %873 = vmatmul.mubr.f32.gmra.mxu0 %v780
        %v874 = vpop.f32.mrf.mxu0
        %v875 = vadd.f32 0.0, %v874
        %v876 = vpop.f32.mrf.mxu0
        %877 = vmatprep.mubr.f32.mxu0 0.0
        %878 = vmatmul.mubr.f32.gmra.mxu0 %v782
        %v879 = vpop.f32.mrf.mxu0
        %v880 = vadd.f32 0.0, %v879
        %v881 = vpop.f32.mrf.mxu0
        %882 = vmatprep.mubr.f32.mxu0 0.0
        %883 = vmatmul.mubr.f32.gmra.mxu0 %v784
        %v884 = vpop.f32.mrf.mxu0
        %v885 = vadd.f32 0.0, %v884
        %v886 = vpop.f32.mrf.mxu0
        %887 = vmatprep.mubr.f32.mxu0 0.0
        %888 = vmatmul.mubr.f32.gmra.mxu0 %v786
        %v889 = vpop.f32.mrf.mxu0
        %v890 = vadd.f32 0.0, %v889
        %v891 = vpop.f32.mrf.mxu0
        %892 = vdwg.mxu0
        %v893 = vadd.f32 %v709, %v855
        %v894 = vadd.f32 %v714, %v860
        %v895 = vadd.f32 %v719, %v865
        %v896 = vadd.f32 %v724, %v870
        %v897 = vadd.f32 %v729, %v875
        %v898 = vadd.f32 %v734, %v880
        %v899 = vadd.f32 %v739, %v885
        %v900 = vadd.f32 %v744, %v890
        %v902 = vsel %vm504, %v459, 0
        %904 = vmatprep.subr.mxu0 0.0
        %905 = vmatpush1.msra.mxu0 0.0
        %906 = vmatprep.subr.mxu0 0.0
        %907 = vmatpush1.msra.mxu0 0.0
        %908 = vmatprep.subr.mxu0 0.0
        %909 = vmatpush1.msra.mxu0 0.0
        %910 = vmatprep.subr.mxu0 0.0
        %911 = vmatpush1.msra.mxu0 0.0
        %912 = vmatprep.subr.mxu0 0.0
        %913 = vmatpush1.msra.mxu0 0.0
        %914 = vmatprep.subr.mxu0 0.0
        %915 = vmatpush1.msra.mxu0 0.0
        %916 = vmatprep.subr.mxu0 0.0
        %917 = vmatpush1.msra.mxu0 0.0
        %918 = vmatprep.subr.mxu0 0.0
        %919 = vmatpush1.msra.mxu0 0.0
        %920 = vmatprep.subr.mxu0 0.0
        %921 = vmatpush1.msra.mxu0 0.0
        %922 = vmatprep.subr.mxu0 0.0
        %923 = vmatpush1.msra.mxu0 0.0
        %924 = vmatprep.subr.mxu0 0.0
        %925 = vmatpush1.msra.mxu0 0.0
        %926 = vmatprep.subr.mxu0 0.0
        %927 = vmatpush1.msra.mxu0 0.0
        %928 = vmatprep.subr.mxu0 0.0
        %929 = vmatpush1.msra.mxu0 0.0
        %930 = vmatprep.subr.mxu0 0.0
        %931 = vmatpush1.msra.mxu0 0.0
        %932 = vmatprep.subr.mxu0 0.0
        %933 = vmatpush1.msra.mxu0 0.0
        %934 = vmatprep.subr.mxu0 0.0
        %935 = vmatpush1.msra.mxu0 %v419
        %936 = vmatprep.subr.mxu0 0.0
        %937 = vmatpush2.msra.mxu0 0.0
        %938 = vmatprep.subr.mxu0 0.0
        %939 = vmatpush2.msra.mxu0 0.0
        %940 = vmatprep.subr.mxu0 0.0
        %941 = vmatpush2.msra.mxu0 0.0
        %942 = vmatprep.subr.mxu0 0.0
        %943 = vmatpush2.msra.mxu0 0.0
        %944 = vmatprep.subr.mxu0 0.0
        %945 = vmatpush2.msra.mxu0 0.0
        %946 = vmatprep.subr.mxu0 0.0
        %947 = vmatpush2.msra.mxu0 0.0
        %948 = vmatprep.subr.mxu0 0.0
        %949 = vmatpush2.msra.mxu0 0.0
        %950 = vmatprep.subr.mxu0 0.0
        %951 = vmatpush2.msra.mxu0 0.0
        %952 = vmatprep.subr.mxu0 0.0
        %953 = vmatpush2.msra.mxu0 0.0
        %954 = vmatprep.subr.mxu0 0.0
        %955 = vmatpush2.msra.mxu0 0.0
        %956 = vmatprep.subr.mxu0 0.0
        %957 = vmatpush2.msra.mxu0 0.0
        %958 = vmatprep.subr.mxu0 0.0
        %959 = vmatpush2.msra.mxu0 0.0
        %960 = vmatprep.subr.mxu0 0.0
        %961 = vmatpush2.msra.mxu0 0.0
        %962 = vmatprep.subr.mxu0 0.0
        %963 = vmatpush2.msra.mxu0 0.0
        %964 = vmatprep.subr.mxu0 0.0
        %965 = vmatpush2.msra.mxu0 0.0
        %966 = vmatprep.subr.mxu0 0.0
        %967 = vmatpush2.msra.mxu0 0.0
        %968 = vmatprep.mubr.f32.mxu0 0.0
        %969 = vmatmul.mubr.f32.gmra.mxu0 %v628
        %v970 = vpop.f32.mrf.mxu0
        %v971 = vadd.f32 0.0, %v970
        %v972 = vpop.f32.mrf.mxu0
        %973 = vmatprep.mubr.f32.mxu0 0.0
        %974 = vmatmul.mubr.f32.gmra.mxu0 %v630
        %v975 = vpop.f32.mrf.mxu0
        %v976 = vadd.f32 0.0, %v975
        %v977 = vpop.f32.mrf.mxu0
        %978 = vmatprep.mubr.f32.mxu0 0.0
        %979 = vmatmul.mubr.f32.gmra.mxu0 %v632
        %v980 = vpop.f32.mrf.mxu0
        %v981 = vadd.f32 0.0, %v980
        %v982 = vpop.f32.mrf.mxu0
        %983 = vmatprep.mubr.f32.mxu0 0.0
        %984 = vmatmul.mubr.f32.gmra.mxu0 %v634
        %v985 = vpop.f32.mrf.mxu0
        %v986 = vadd.f32 0.0, %v985
        %v987 = vpop.f32.mrf.mxu0
        %988 = vmatprep.mubr.f32.mxu0 0.0
        %989 = vmatmul.mubr.f32.gmra.mxu0 %v636
        %v990 = vpop.f32.mrf.mxu0
        %v991 = vadd.f32 0.0, %v990
        %v992 = vpop.f32.mrf.mxu0
        %993 = vmatprep.mubr.f32.mxu0 0.0
        %994 = vmatmul.mubr.f32.gmra.mxu0 %v638
        %v995 = vpop.f32.mrf.mxu0
        %v996 = vadd.f32 0.0, %v995
        %v997 = vpop.f32.mrf.mxu0
        %998 = vmatprep.mubr.f32.mxu0 0.0
        %999 = vmatmul.mubr.f32.gmra.mxu0 %v640
        %v1000 = vpop.f32.mrf.mxu0
        %v1001 = vadd.f32 0.0, %v1000
        %v1002 = vpop.f32.mrf.mxu0
        %1003 = vmatprep.mubr.f32.mxu0 0.0
        %1004 = vmatmul.mubr.f32.gmra.mxu0 %v902
        %v1005 = vpop.f32.mrf.mxu0
        %v1006 = vadd.f32 0.0, %v1005
        %v1007 = vpop.f32.mrf.mxu0
        %1008 = vdwg.mxu0
        %v1009 = vadd.f32 %v893, %v971
        %v1010 = vadd.f32 %v894, %v976
        %v1011 = vadd.f32 %v895, %v981
        %v1012 = vadd.f32 %v896, %v986
        %v1013 = vadd.f32 %v897, %v991
        %v1014 = vadd.f32 %v898, %v996
        %v1015 = vadd.f32 %v899, %v1001
        %v1016 = vadd.f32 %v900, %v1006
        %v1018 = vrot.slane %v459, 1
        %v1019 = vrot.slane %v460, 1
        %v1020 = vsel %vm479, %v1018, %v1019
        %v1021 = vsel %vm504, %v1020, 0
        %1023 = vmatprep.subr.mxu0 0.0
        %1024 = vmatpush1.msra.mxu0 0.0
        %1025 = vmatprep.subr.mxu0 0.0
        %1026 = vmatpush1.msra.mxu0 0.0
        %1027 = vmatprep.subr.mxu0 0.0
        %1028 = vmatpush1.msra.mxu0 0.0
        %1029 = vmatprep.subr.mxu0 0.0
        %1030 = vmatpush1.msra.mxu0 0.0
        %1031 = vmatprep.subr.mxu0 0.0
        %1032 = vmatpush1.msra.mxu0 0.0
        %1033 = vmatprep.subr.mxu0 0.0
        %1034 = vmatpush1.msra.mxu0 0.0
        %1035 = vmatprep.subr.mxu0 0.0
        %1036 = vmatpush1.msra.mxu0 0.0
        %1037 = vmatprep.subr.mxu0 0.0
        %1038 = vmatpush1.msra.mxu0 0.0
        %1039 = vmatprep.subr.mxu0 0.0
        %1040 = vmatpush1.msra.mxu0 0.0
        %1041 = vmatprep.subr.mxu0 0.0
        %1042 = vmatpush1.msra.mxu0 0.0
        %1043 = vmatprep.subr.mxu0 0.0
        %1044 = vmatpush1.msra.mxu0 0.0
        %1045 = vmatprep.subr.mxu0 0.0
        %1046 = vmatpush1.msra.mxu0 0.0
        %1047 = vmatprep.subr.mxu0 0.0
        %1048 = vmatpush1.msra.mxu0 0.0
        %1049 = vmatprep.subr.mxu0 0.0
        %1050 = vmatpush1.msra.mxu0 0.0
        %1051 = vmatprep.subr.mxu0 0.0
        %1052 = vmatpush1.msra.mxu0 0.0
        %1053 = vmatprep.subr.mxu0 0.0
        %1054 = vmatpush1.msra.mxu0 %v420
        %1055 = vmatprep.subr.mxu0 0.0
        %1056 = vmatpush2.msra.mxu0 0.0
        %1057 = vmatprep.subr.mxu0 0.0
        %1058 = vmatpush2.msra.mxu0 0.0
        %1059 = vmatprep.subr.mxu0 0.0
        %1060 = vmatpush2.msra.mxu0 0.0
        %1061 = vmatprep.subr.mxu0 0.0
        %1062 = vmatpush2.msra.mxu0 0.0
        %1063 = vmatprep.subr.mxu0 0.0
        %1064 = vmatpush2.msra.mxu0 0.0
        %1065 = vmatprep.subr.mxu0 0.0
        %1066 = vmatpush2.msra.mxu0 0.0
        %1067 = vmatprep.subr.mxu0 0.0
        %1068 = vmatpush2.msra.mxu0 0.0
        %1069 = vmatprep.subr.mxu0 0.0
        %1070 = vmatpush2.msra.mxu0 0.0
        %1071 = vmatprep.subr.mxu0 0.0
        %1072 = vmatpush2.msra.mxu0 0.0
        %1073 = vmatprep.subr.mxu0 0.0
        %1074 = vmatpush2.msra.mxu0 0.0
        %1075 = vmatprep.subr.mxu0 0.0
        %1076 = vmatpush2.msra.mxu0 0.0
        %1077 = vmatprep.subr.mxu0 0.0
        %1078 = vmatpush2.msra.mxu0 0.0
        %1079 = vmatprep.subr.mxu0 0.0
        %1080 = vmatpush2.msra.mxu0 0.0
        %1081 = vmatprep.subr.mxu0 0.0
        %1082 = vmatpush2.msra.mxu0 0.0
        %1083 = vmatprep.subr.mxu0 0.0
        %1084 = vmatpush2.msra.mxu0 0.0
        %1085 = vmatprep.subr.mxu0 0.0
        %1086 = vmatpush2.msra.mxu0 0.0
        %1087 = vmatprep.mubr.f32.mxu0 0.0
        %1088 = vmatmul.mubr.f32.gmra.mxu0 %v507
        %v1089 = vpop.f32.mrf.mxu0
        %v1090 = vadd.f32 0.0, %v1089
        %v1091 = vpop.f32.mrf.mxu0
        %1092 = vmatprep.mubr.f32.mxu0 0.0
        %1093 = vmatmul.mubr.f32.gmra.mxu0 %v509
        %v1094 = vpop.f32.mrf.mxu0
        %v1095 = vadd.f32 0.0, %v1094
        %v1096 = vpop.f32.mrf.mxu0
        %1097 = vmatprep.mubr.f32.mxu0 0.0
        %1098 = vmatmul.mubr.f32.gmra.mxu0 %v511
        %v1099 = vpop.f32.mrf.mxu0
        %v1100 = vadd.f32 0.0, %v1099
        %v1101 = vpop.f32.mrf.mxu0
        %1102 = vmatprep.mubr.f32.mxu0 0.0
        %1103 = vmatmul.mubr.f32.gmra.mxu0 %v513
        %v1104 = vpop.f32.mrf.mxu0
        %v1105 = vadd.f32 0.0, %v1104
        %v1106 = vpop.f32.mrf.mxu0
        %1107 = vmatprep.mubr.f32.mxu0 0.0
        %1108 = vmatmul.mubr.f32.gmra.mxu0 %v515
        %v1109 = vpop.f32.mrf.mxu0
        %v1110 = vadd.f32 0.0, %v1109
        %v1111 = vpop.f32.mrf.mxu0
        %1112 = vmatprep.mubr.f32.mxu0 0.0
        %1113 = vmatmul.mubr.f32.gmra.mxu0 %v517
        %v1114 = vpop.f32.mrf.mxu0
        %v1115 = vadd.f32 0.0, %v1114
        %v1116 = vpop.f32.mrf.mxu0
        %1117 = vmatprep.mubr.f32.mxu0 0.0
        %1118 = vmatmul.mubr.f32.gmra.mxu0 %v519
        %v1119 = vpop.f32.mrf.mxu0
        %v1120 = vadd.f32 0.0, %v1119
        %v1121 = vpop.f32.mrf.mxu0
        %1122 = vmatprep.mubr.f32.mxu0 0.0
        %1123 = vmatmul.mubr.f32.gmra.mxu0 %v1021
        %v1124 = vpop.f32.mrf.mxu0
        %v1125 = vadd.f32 0.0, %v1124
        %v1126 = vpop.f32.mrf.mxu0
        %1127 = vdwg.mxu0
        %v1128 = vadd.f32 %v1009, %v1090
        %v1129 = vadd.f32 %v1010, %v1095
        %v1130 = vadd.f32 %v1011, %v1100
        %v1131 = vadd.f32 %v1012, %v1105
        %v1132 = vadd.f32 %v1013, %v1110
        %v1133 = vadd.f32 %v1014, %v1115
        %v1134 = vadd.f32 %v1015, %v1120
        %v1135 = vadd.f32 %v1016, %v1125
        %v1136 = vrot.slane %v459, 2
        %v1137 = vrot.slane %v460, 2
        %v1138 = vsel %vm747, %v1136, %v1137
        %v1139 = vsel %vm504, %v1138, 0
        %1141 = vmatprep.subr.mxu0 0.0
        %1142 = vmatpush1.msra.mxu0 0.0
        %1143 = vmatprep.subr.mxu0 0.0
        %1144 = vmatpush1.msra.mxu0 0.0
        %1145 = vmatprep.subr.mxu0 0.0
        %1146 = vmatpush1.msra.mxu0 0.0
        %1147 = vmatprep.subr.mxu0 0.0
        %1148 = vmatpush1.msra.mxu0 0.0
        %1149 = vmatprep.subr.mxu0 0.0
        %1150 = vmatpush1.msra.mxu0 0.0
        %1151 = vmatprep.subr.mxu0 0.0
        %1152 = vmatpush1.msra.mxu0 0.0
        %1153 = vmatprep.subr.mxu0 0.0
        %1154 = vmatpush1.msra.mxu0 0.0
        %1155 = vmatprep.subr.mxu0 0.0
        %1156 = vmatpush1.msra.mxu0 0.0
        %1157 = vmatprep.subr.mxu0 0.0
        %1158 = vmatpush1.msra.mxu0 0.0
        %1159 = vmatprep.subr.mxu0 0.0
        %1160 = vmatpush1.msra.mxu0 0.0
        %1161 = vmatprep.subr.mxu0 0.0
        %1162 = vmatpush1.msra.mxu0 0.0
        %1163 = vmatprep.subr.mxu0 0.0
        %1164 = vmatpush1.msra.mxu0 0.0
        %1165 = vmatprep.subr.mxu0 0.0
        %1166 = vmatpush1.msra.mxu0 0.0
        %1167 = vmatprep.subr.mxu0 0.0
        %1168 = vmatpush1.msra.mxu0 0.0
        %1169 = vmatprep.subr.mxu0 0.0
        %1170 = vmatpush1.msra.mxu0 0.0
        %1171 = vmatprep.subr.mxu0 0.0
        %1172 = vmatpush1.msra.mxu0 %v421
        %1173 = vmatprep.subr.mxu0 0.0
        %1174 = vmatpush2.msra.mxu0 0.0
        %1175 = vmatprep.subr.mxu0 0.0
        %1176 = vmatpush2.msra.mxu0 0.0
        %1177 = vmatprep.subr.mxu0 0.0
        %1178 = vmatpush2.msra.mxu0 0.0
        %1179 = vmatprep.subr.mxu0 0.0
        %1180 = vmatpush2.msra.mxu0 0.0
        %1181 = vmatprep.subr.mxu0 0.0
        %1182 = vmatpush2.msra.mxu0 0.0
        %1183 = vmatprep.subr.mxu0 0.0
        %1184 = vmatpush2.msra.mxu0 0.0
        %1185 = vmatprep.subr.mxu0 0.0
        %1186 = vmatpush2.msra.mxu0 0.0
        %1187 = vmatprep.subr.mxu0 0.0
        %1188 = vmatpush2.msra.mxu0 0.0
        %1189 = vmatprep.subr.mxu0 0.0
        %1190 = vmatpush2.msra.mxu0 0.0
        %1191 = vmatprep.subr.mxu0 0.0
        %1192 = vmatpush2.msra.mxu0 0.0
        %1193 = vmatprep.subr.mxu0 0.0
        %1194 = vmatpush2.msra.mxu0 0.0
        %1195 = vmatprep.subr.mxu0 0.0
        %1196 = vmatpush2.msra.mxu0 0.0
        %1197 = vmatprep.subr.mxu0 0.0
        %1198 = vmatpush2.msra.mxu0 0.0
        %1199 = vmatprep.subr.mxu0 0.0
        %1200 = vmatpush2.msra.mxu0 0.0
        %1201 = vmatprep.subr.mxu0 0.0
        %1202 = vmatpush2.msra.mxu0 0.0
        %1203 = vmatprep.subr.mxu0 0.0
        %1204 = vmatpush2.msra.mxu0 0.0
        %1205 = vmatprep.mubr.f32.mxu0 0.0
        %1206 = vmatmul.mubr.f32.gmra.mxu0 %v774
        %v1207 = vpop.f32.mrf.mxu0
        %v1208 = vadd.f32 0.0, %v1207
        %v1209 = vpop.f32.mrf.mxu0
        %1210 = vmatprep.mubr.f32.mxu0 0.0
        %1211 = vmatmul.mubr.f32.gmra.mxu0 %v776
        %v1212 = vpop.f32.mrf.mxu0
        %v1213 = vadd.f32 0.0, %v1212
        %v1214 = vpop.f32.mrf.mxu0
        %1215 = vmatprep.mubr.f32.mxu0 0.0
        %1216 = vmatmul.mubr.f32.gmra.mxu0 %v778
        %v1217 = vpop.f32.mrf.mxu0
        %v1218 = vadd.f32 0.0, %v1217
        %v1219 = vpop.f32.mrf.mxu0
        %1220 = vmatprep.mubr.f32.mxu0 0.0
        %1221 = vmatmul.mubr.f32.gmra.mxu0 %v780
        %v1222 = vpop.f32.mrf.mxu0
        %v1223 = vadd.f32 0.0, %v1222
        %v1224 = vpop.f32.mrf.mxu0
        %1225 = vmatprep.mubr.f32.mxu0 0.0
        %1226 = vmatmul.mubr.f32.gmra.mxu0 %v782
        %v1227 = vpop.f32.mrf.mxu0
        %v1228 = vadd.f32 0.0, %v1227
        %v1229 = vpop.f32.mrf.mxu0
        %1230 = vmatprep.mubr.f32.mxu0 0.0
        %1231 = vmatmul.mubr.f32.gmra.mxu0 %v784
        %v1232 = vpop.f32.mrf.mxu0
        %v1233 = vadd.f32 0.0, %v1232
        %v1234 = vpop.f32.mrf.mxu0
        %1235 = vmatprep.mubr.f32.mxu0 0.0
        %1236 = vmatmul.mubr.f32.gmra.mxu0 %v786
        %v1237 = vpop.f32.mrf.mxu0
        %v1238 = vadd.f32 0.0, %v1237
        %v1239 = vpop.f32.mrf.mxu0
        %1240 = vmatprep.mubr.f32.mxu0 0.0
        %1241 = vmatmul.mubr.f32.gmra.mxu0 %v1139
        %v1242 = vpop.f32.mrf.mxu0
        %v1243 = vadd.f32 0.0, %v1242
        %v1244 = vpop.f32.mrf.mxu0
        %1245 = vdwg.mxu0
        %v1246 = vadd.f32 %v1128, %v1208
        %v1247 = vadd.f32 %v1129, %v1213
        %v1248 = vadd.f32 %v1130, %v1218
        %v1249 = vadd.f32 %v1131, %v1223
        %v1250 = vadd.f32 %v1132, %v1228
        %v1251 = vadd.f32 %v1133, %v1233
        %v1252 = vadd.f32 %v1134, %v1238
        %v1253 = vadd.f32 %v1135, %v1243
        %v1255 = vsel %vm504, %v461, 0
        %1257 = vmatprep.subr.mxu0 0.0
        %1258 = vmatpush1.msra.mxu0 0.0
        %1259 = vmatprep.subr.mxu0 0.0
        %1260 = vmatpush1.msra.mxu0 0.0
        %1261 = vmatprep.subr.mxu0 0.0
        %1262 = vmatpush1.msra.mxu0 0.0
        %1263 = vmatprep.subr.mxu0 0.0
        %1264 = vmatpush1.msra.mxu0 0.0
        %1265 = vmatprep.subr.mxu0 0.0
        %1266 = vmatpush1.msra.mxu0 0.0
        %1267 = vmatprep.subr.mxu0 0.0
        %1268 = vmatpush1.msra.mxu0 0.0
        %1269 = vmatprep.subr.mxu0 0.0
        %1270 = vmatpush1.msra.mxu0 0.0
        %1271 = vmatprep.subr.mxu0 0.0
        %1272 = vmatpush1.msra.mxu0 0.0
        %1273 = vmatprep.subr.mxu0 0.0
        %1274 = vmatpush1.msra.mxu0 0.0
        %1275 = vmatprep.subr.mxu0 0.0
        %1276 = vmatpush1.msra.mxu0 0.0
        %1277 = vmatprep.subr.mxu0 0.0
        %1278 = vmatpush1.msra.mxu0 0.0
        %1279 = vmatprep.subr.mxu0 0.0
        %1280 = vmatpush1.msra.mxu0 0.0
        %1281 = vmatprep.subr.mxu0 0.0
        %1282 = vmatpush1.msra.mxu0 0.0
        %1283 = vmatprep.subr.mxu0 0.0
        %1284 = vmatpush1.msra.mxu0 0.0
        %1285 = vmatprep.subr.mxu0 0.0
        %1286 = vmatpush1.msra.mxu0 0.0
        %1287 = vmatprep.subr.mxu0 0.0
        %1288 = vmatpush1.msra.mxu0 %v422
        %1289 = vmatprep.subr.mxu0 0.0
        %1290 = vmatpush2.msra.mxu0 0.0
        %1291 = vmatprep.subr.mxu0 0.0
        %1292 = vmatpush2.msra.mxu0 0.0
        %1293 = vmatprep.subr.mxu0 0.0
        %1294 = vmatpush2.msra.mxu0 0.0
        %1295 = vmatprep.subr.mxu0 0.0
        %1296 = vmatpush2.msra.mxu0 0.0
        %1297 = vmatprep.subr.mxu0 0.0
        %1298 = vmatpush2.msra.mxu0 0.0
        %1299 = vmatprep.subr.mxu0 0.0
        %1300 = vmatpush2.msra.mxu0 0.0
        %1301 = vmatprep.subr.mxu0 0.0
        %1302 = vmatpush2.msra.mxu0 0.0
        %1303 = vmatprep.subr.mxu0 0.0
        %1304 = vmatpush2.msra.mxu0 0.0
        %1305 = vmatprep.subr.mxu0 0.0
        %1306 = vmatpush2.msra.mxu0 0.0
        %1307 = vmatprep.subr.mxu0 0.0
        %1308 = vmatpush2.msra.mxu0 0.0
        %1309 = vmatprep.subr.mxu0 0.0
        %1310 = vmatpush2.msra.mxu0 0.0
        %1311 = vmatprep.subr.mxu0 0.0
        %1312 = vmatpush2.msra.mxu0 0.0
        %1313 = vmatprep.subr.mxu0 0.0
        %1314 = vmatpush2.msra.mxu0 0.0
        %1315 = vmatprep.subr.mxu0 0.0
        %1316 = vmatpush2.msra.mxu0 0.0
        %1317 = vmatprep.subr.mxu0 0.0
        %1318 = vmatpush2.msra.mxu0 0.0
        %1319 = vmatprep.subr.mxu0 0.0
        %1320 = vmatpush2.msra.mxu0 0.0
        %1321 = vmatprep.mubr.f32.mxu0 0.0
        %1322 = vmatmul.mubr.f32.gmra.mxu0 %v630
        %v1323 = vpop.f32.mrf.mxu0
        %v1324 = vadd.f32 0.0, %v1323
        %v1325 = vpop.f32.mrf.mxu0
        %1326 = vmatprep.mubr.f32.mxu0 0.0
        %1327 = vmatmul.mubr.f32.gmra.mxu0 %v632
        %v1328 = vpop.f32.mrf.mxu0
        %v1329 = vadd.f32 0.0, %v1328
        %v1330 = vpop.f32.mrf.mxu0
        %1331 = vmatprep.mubr.f32.mxu0 0.0
        %1332 = vmatmul.mubr.f32.gmra.mxu0 %v634
        %v1333 = vpop.f32.mrf.mxu0
        %v1334 = vadd.f32 0.0, %v1333
        %v1335 = vpop.f32.mrf.mxu0
        %1336 = vmatprep.mubr.f32.mxu0 0.0
        %1337 = vmatmul.mubr.f32.gmra.mxu0 %v636
        %v1338 = vpop.f32.mrf.mxu0
        %v1339 = vadd.f32 0.0, %v1338
        %v1340 = vpop.f32.mrf.mxu0
        %1341 = vmatprep.mubr.f32.mxu0 0.0
        %1342 = vmatmul.mubr.f32.gmra.mxu0 %v638
        %v1343 = vpop.f32.mrf.mxu0
        %v1344 = vadd.f32 0.0, %v1343
        %v1345 = vpop.f32.mrf.mxu0
        %1346 = vmatprep.mubr.f32.mxu0 0.0
        %1347 = vmatmul.mubr.f32.gmra.mxu0 %v640
        %v1348 = vpop.f32.mrf.mxu0
        %v1349 = vadd.f32 0.0, %v1348
        %v1350 = vpop.f32.mrf.mxu0
        %1351 = vmatprep.mubr.f32.mxu0 0.0
        %1352 = vmatmul.mubr.f32.gmra.mxu0 %v902
        %v1353 = vpop.f32.mrf.mxu0
        %v1354 = vadd.f32 0.0, %v1353
        %v1355 = vpop.f32.mrf.mxu0
        %1356 = vmatprep.mubr.f32.mxu0 0.0
        %1357 = vmatmul.mubr.f32.gmra.mxu0 %v1255
        %v1358 = vpop.f32.mrf.mxu0
        %v1359 = vadd.f32 0.0, %v1358
        %v1360 = vpop.f32.mrf.mxu0
        %1361 = vdwg.mxu0
        %v1362 = vadd.f32 %v1246, %v1324
        %v1363 = vadd.f32 %v1247, %v1329
        %v1364 = vadd.f32 %v1248, %v1334
        %v1365 = vadd.f32 %v1249, %v1339
        %v1366 = vadd.f32 %v1250, %v1344
        %v1367 = vadd.f32 %v1251, %v1349
        %v1368 = vadd.f32 %v1252, %v1354
        %v1369 = vadd.f32 %v1253, %v1359
        %v1371 = vrot.slane %v461, 1
        %v1372 = vrot.slane %v462, 1
        %v1373 = vsel %vm479, %v1371, %v1372
        %v1374 = vsel %vm504, %v1373, 0
        %1376 = vmatprep.subr.mxu0 0.0
        %1377 = vmatpush1.msra.mxu0 0.0
        %1378 = vmatprep.subr.mxu0 0.0
        %1379 = vmatpush1.msra.mxu0 0.0
        %1380 = vmatprep.subr.mxu0 0.0
        %1381 = vmatpush1.msra.mxu0 0.0
        %1382 = vmatprep.subr.mxu0 0.0
        %1383 = vmatpush1.msra.mxu0 0.0
        %1384 = vmatprep.subr.mxu0 0.0
        %1385 = vmatpush1.msra.mxu0 0.0
        %1386 = vmatprep.subr.mxu0 0.0
        %1387 = vmatpush1.msra.mxu0 0.0
        %1388 = vmatprep.subr.mxu0 0.0
        %1389 = vmatpush1.msra.mxu0 0.0
        %1390 = vmatprep.subr.mxu0 0.0
        %1391 = vmatpush1.msra.mxu0 0.0
        %1392 = vmatprep.subr.mxu0 0.0
        %1393 = vmatpush1.msra.mxu0 0.0
        %1394 = vmatprep.subr.mxu0 0.0
        %1395 = vmatpush1.msra.mxu0 0.0
        %1396 = vmatprep.subr.mxu0 0.0
        %1397 = vmatpush1.msra.mxu0 0.0
        %1398 = vmatprep.subr.mxu0 0.0
        %1399 = vmatpush1.msra.mxu0 0.0
        %1400 = vmatprep.subr.mxu0 0.0
        %1401 = vmatpush1.msra.mxu0 0.0
        %1402 = vmatprep.subr.mxu0 0.0
        %1403 = vmatpush1.msra.mxu0 0.0
        %1404 = vmatprep.subr.mxu0 0.0
        %1405 = vmatpush1.msra.mxu0 0.0
        %1406 = vmatprep.subr.mxu0 0.0
        %1407 = vmatpush1.msra.mxu0 %v423
        %1408 = vmatprep.subr.mxu0 0.0
        %1409 = vmatpush2.msra.mxu0 0.0
        %1410 = vmatprep.subr.mxu0 0.0
        %1411 = vmatpush2.msra.mxu0 0.0
        %1412 = vmatprep.subr.mxu0 0.0
        %1413 = vmatpush2.msra.mxu0 0.0
        %1414 = vmatprep.subr.mxu0 0.0
        %1415 = vmatpush2.msra.mxu0 0.0
        %1416 = vmatprep.subr.mxu0 0.0
        %1417 = vmatpush2.msra.mxu0 0.0
        %1418 = vmatprep.subr.mxu0 0.0
        %1419 = vmatpush2.msra.mxu0 0.0
        %1420 = vmatprep.subr.mxu0 0.0
        %1421 = vmatpush2.msra.mxu0 0.0
        %1422 = vmatprep.subr.mxu0 0.0
        %1423 = vmatpush2.msra.mxu0 0.0
        %1424 = vmatprep.subr.mxu0 0.0
        %1425 = vmatpush2.msra.mxu0 0.0
        %1426 = vmatprep.subr.mxu0 0.0
        %1427 = vmatpush2.msra.mxu0 0.0
        %1428 = vmatprep.subr.mxu0 0.0
        %1429 = vmatpush2.msra.mxu0 0.0
        %1430 = vmatprep.subr.mxu0 0.0
        %1431 = vmatpush2.msra.mxu0 0.0
        %1432 = vmatprep.subr.mxu0 0.0
        %1433 = vmatpush2.msra.mxu0 0.0
        %1434 = vmatprep.subr.mxu0 0.0
        %1435 = vmatpush2.msra.mxu0 0.0
        %1436 = vmatprep.subr.mxu0 0.0
        %1437 = vmatpush2.msra.mxu0 0.0
        %1438 = vmatprep.subr.mxu0 0.0
        %1439 = vmatpush2.msra.mxu0 0.0
        %1440 = vmatprep.mubr.f32.mxu0 0.0
        %1441 = vmatmul.mubr.f32.gmra.mxu0 %v509
        %v1442 = vpop.f32.mrf.mxu0
        %v1443 = vadd.f32 0.0, %v1442
        %v1444 = vpop.f32.mrf.mxu0
        %1445 = vmatprep.mubr.f32.mxu0 0.0
        %1446 = vmatmul.mubr.f32.gmra.mxu0 %v511
        %v1447 = vpop.f32.mrf.mxu0
        %v1448 = vadd.f32 0.0, %v1447
        %v1449 = vpop.f32.mrf.mxu0
        %1450 = vmatprep.mubr.f32.mxu0 0.0
        %1451 = vmatmul.mubr.f32.gmra.mxu0 %v513
        %v1452 = vpop.f32.mrf.mxu0
        %v1453 = vadd.f32 0.0, %v1452
        %v1454 = vpop.f32.mrf.mxu0
        %1455 = vmatprep.mubr.f32.mxu0 0.0
        %1456 = vmatmul.mubr.f32.gmra.mxu0 %v515
        %v1457 = vpop.f32.mrf.mxu0
        %v1458 = vadd.f32 0.0, %v1457
        %v1459 = vpop.f32.mrf.mxu0
        %1460 = vmatprep.mubr.f32.mxu0 0.0
        %1461 = vmatmul.mubr.f32.gmra.mxu0 %v517
        %v1462 = vpop.f32.mrf.mxu0
        %v1463 = vadd.f32 0.0, %v1462
        %v1464 = vpop.f32.mrf.mxu0
        %1465 = vmatprep.mubr.f32.mxu0 0.0
        %1466 = vmatmul.mubr.f32.gmra.mxu0 %v519
        %v1467 = vpop.f32.mrf.mxu0
        %v1468 = vadd.f32 0.0, %v1467
        %v1469 = vpop.f32.mrf.mxu0
        %1470 = vmatprep.mubr.f32.mxu0 0.0
        %1471 = vmatmul.mubr.f32.gmra.mxu0 %v1021
        %v1472 = vpop.f32.mrf.mxu0
        %v1473 = vadd.f32 0.0, %v1472
        %v1474 = vpop.f32.mrf.mxu0
        %1475 = vmatprep.mubr.f32.mxu0 0.0
        %1476 = vmatmul.mubr.f32.gmra.mxu0 %v1374
        %v1477 = vpop.f32.mrf.mxu0
        %v1478 = vadd.f32 0.0, %v1477
        %v1479 = vpop.f32.mrf.mxu0
        %1480 = vdwg.mxu0
        %v1481 = vadd.f32 %v1362, %v1443
        %v1482 = vadd.f32 %v1363, %v1448
        %v1483 = vadd.f32 %v1364, %v1453
        %v1484 = vadd.f32 %v1365, %v1458
        %v1485 = vadd.f32 %v1366, %v1463
        %v1486 = vadd.f32 %v1367, %v1468
        %v1487 = vadd.f32 %v1368, %v1473
        %v1488 = vadd.f32 %v1369, %v1478
        %v1489 = vrot.slane %v461, 2
        %v1490 = vrot.slane %v462, 2
        %v1491 = vsel %vm747, %v1489, %v1490
        %v1492 = vsel %vm504, %v1491, 0
        %1494 = vmatprep.subr.mxu0 0.0
        %1495 = vmatpush1.msra.mxu0 0.0
        %1496 = vmatprep.subr.mxu0 0.0
        %1497 = vmatpush1.msra.mxu0 0.0
        %1498 = vmatprep.subr.mxu0 0.0
        %1499 = vmatpush1.msra.mxu0 0.0
        %1500 = vmatprep.subr.mxu0 0.0
        %1501 = vmatpush1.msra.mxu0 0.0
        %1502 = vmatprep.subr.mxu0 0.0
        %1503 = vmatpush1.msra.mxu0 0.0
        %1504 = vmatprep.subr.mxu0 0.0
        %1505 = vmatpush1.msra.mxu0 0.0
        %1506 = vmatprep.subr.mxu0 0.0
        %1507 = vmatpush1.msra.mxu0 0.0
        %1508 = vmatprep.subr.mxu0 0.0
        %1509 = vmatpush1.msra.mxu0 0.0
        %1510 = vmatprep.subr.mxu0 0.0
        %1511 = vmatpush1.msra.mxu0 0.0
        %1512 = vmatprep.subr.mxu0 0.0
        %1513 = vmatpush1.msra.mxu0 0.0
        %1514 = vmatprep.subr.mxu0 0.0
        %1515 = vmatpush1.msra.mxu0 0.0
        %1516 = vmatprep.subr.mxu0 0.0
        %1517 = vmatpush1.msra.mxu0 0.0
        %1518 = vmatprep.subr.mxu0 0.0
        %1519 = vmatpush1.msra.mxu0 0.0
        %1520 = vmatprep.subr.mxu0 0.0
        %1521 = vmatpush1.msra.mxu0 0.0
        %1522 = vmatprep.subr.mxu0 0.0
        %1523 = vmatpush1.msra.mxu0 0.0
        %1524 = vmatprep.subr.mxu0 0.0
        %1525 = vmatpush1.msra.mxu0 %v424
        %1526 = vmatprep.subr.mxu0 0.0
        %1527 = vmatpush2.msra.mxu0 0.0
        %1528 = vmatprep.subr.mxu0 0.0
        %1529 = vmatpush2.msra.mxu0 0.0
        %1530 = vmatprep.subr.mxu0 0.0
        %1531 = vmatpush2.msra.mxu0 0.0
        %1532 = vmatprep.subr.mxu0 0.0
        %1533 = vmatpush2.msra.mxu0 0.0
        %1534 = vmatprep.subr.mxu0 0.0
        %1535 = vmatpush2.msra.mxu0 0.0
        %1536 = vmatprep.subr.mxu0 0.0
        %1537 = vmatpush2.msra.mxu0 0.0
        %1538 = vmatprep.subr.mxu0 0.0
        %1539 = vmatpush2.msra.mxu0 0.0
        %1540 = vmatprep.subr.mxu0 0.0
        %1541 = vmatpush2.msra.mxu0 0.0
        %1542 = vmatprep.subr.mxu0 0.0
        %1543 = vmatpush2.msra.mxu0 0.0
        %1544 = vmatprep.subr.mxu0 0.0
        %1545 = vmatpush2.msra.mxu0 0.0
        %1546 = vmatprep.subr.mxu0 0.0
        %1547 = vmatpush2.msra.mxu0 0.0
        %1548 = vmatprep.subr.mxu0 0.0
        %1549 = vmatpush2.msra.mxu0 0.0
        %1550 = vmatprep.subr.mxu0 0.0
        %1551 = vmatpush2.msra.mxu0 0.0
        %1552 = vmatprep.subr.mxu0 0.0
        %1553 = vmatpush2.msra.mxu0 0.0
        %1554 = vmatprep.subr.mxu0 0.0
        %1555 = vmatpush2.msra.mxu0 0.0
        %1556 = vmatprep.subr.mxu0 0.0
        %1557 = vmatpush2.msra.mxu0 0.0
        %1558 = vmatprep.mubr.f32.mxu0 0.0
        %1559 = vmatmul.mubr.f32.gmra.mxu0 %v776
        %v1560 = vpop.f32.mrf.mxu0
        %v1561 = vadd.f32 0.0, %v1560
        %v1562 = vpop.f32.mrf.mxu0
        %1563 = vmatprep.mubr.f32.mxu0 0.0
        %1564 = vmatmul.mubr.f32.gmra.mxu0 %v778
        %v1565 = vpop.f32.mrf.mxu0
        %v1566 = vadd.f32 0.0, %v1565
        %v1567 = vpop.f32.mrf.mxu0
        %1568 = vmatprep.mubr.f32.mxu0 0.0
        %1569 = vmatmul.mubr.f32.gmra.mxu0 %v780
        %v1570 = vpop.f32.mrf.mxu0
        %v1571 = vadd.f32 0.0, %v1570
        %v1572 = vpop.f32.mrf.mxu0
        %1573 = vmatprep.mubr.f32.mxu0 0.0
        %1574 = vmatmul.mubr.f32.gmra.mxu0 %v782
        %v1575 = vpop.f32.mrf.mxu0
        %v1576 = vadd.f32 0.0, %v1575
        %v1577 = vpop.f32.mrf.mxu0
        %1578 = vmatprep.mubr.f32.mxu0 0.0
        %1579 = vmatmul.mubr.f32.gmra.mxu0 %v784
        %v1580 = vpop.f32.mrf.mxu0
        %v1581 = vadd.f32 0.0, %v1580
        %v1582 = vpop.f32.mrf.mxu0
        %1583 = vmatprep.mubr.f32.mxu0 0.0
        %1584 = vmatmul.mubr.f32.gmra.mxu0 %v786
        %v1585 = vpop.f32.mrf.mxu0
        %v1586 = vadd.f32 0.0, %v1585
        %v1587 = vpop.f32.mrf.mxu0
        %1588 = vmatprep.mubr.f32.mxu0 0.0
        %1589 = vmatmul.mubr.f32.gmra.mxu0 %v1139
        %v1590 = vpop.f32.mrf.mxu0
        %v1591 = vadd.f32 0.0, %v1590
        %v1592 = vpop.f32.mrf.mxu0
        %1593 = vmatprep.mubr.f32.mxu0 0.0
        %1594 = vmatmul.mubr.f32.gmra.mxu0 %v1492
        %v1595 = vpop.f32.mrf.mxu0
        %v1596 = vadd.f32 0.0, %v1595
        %v1597 = vpop.f32.mrf.mxu0
        %1598 = vdwg.mxu0
        %v1599 = vadd.f32 %v1481, %v1561
        %v1600 = vadd.f32 %v1482, %v1566
        %v1601 = vadd.f32 %v1483, %v1571
        %v1602 = vadd.f32 %v1484, %v1576
        %v1603 = vadd.f32 %v1485, %v1581
        %v1604 = vadd.f32 %v1486, %v1586
        %v1605 = vadd.f32 %v1487, %v1591
        %v1606 = vadd.f32 %v1488, %v1596
        %v1607 = vld [vmem:[%s394] sm:$0xff]
        %v1608 = vld [vmem:[%s394 + $0x8] sm:$0x3]
        %v1609 = vld [vmem:[%s394 + $0x10] sm:$0xff]
        %v1610 = vld [vmem:[%s394 + $0x18] sm:$0x3]
        %v1611 = vld [vmem:[%s394 + $0x20] sm:$0xff]
        %v1612 = vld [vmem:[%s394 + $0x28] sm:$0x3]
        %v1613 = vld [vmem:[%s394 + $0x30] sm:$0xff]
        %v1614 = vld [vmem:[%s394 + $0x38] sm:$0x3]
        %v1615 = vld [vmem:[%s394 + $0x40] sm:$0xff]
        %v1616 = vld [vmem:[%s394 + $0x48] sm:$0x3]
        %v1617 = vld [vmem:[%s394 + $0x50] sm:$0xff]
        %v1618 = vld [vmem:[%s394 + $0x58] sm:$0x3]
        %v1619 = vld [vmem:[%s394 + $0x60] sm:$0xff]
        %v1620 = vld [vmem:[%s394 + $0x68] sm:$0x3]
        %v1621 = vld [vmem:[%s394 + $0x70] sm:$0xff]
        %v1622 = vld [vmem:[%s394 + $0x78] sm:$0x3]
        %v1623 = vld [vmem:[%s394 + $0x80] sm:$0xff]
        %v1624 = vld [vmem:[%s394 + $0x88] sm:$0x3]
        %v1625 = vld [vmem:[%s394 + $0x90] sm:$0xff]
        %v1626 = vld [vmem:[%s394 + $0x98] sm:$0x3]
        %v1628 = vsel %vm504, %v1607, 0
        %v1631 = vsel %vm504, %v1609, 0
        %v1634 = vsel %vm504, %v1611, 0
        %v1637 = vsel %vm504, %v1613, 0
        %v1640 = vsel %vm504, %v1615, 0
        %v1643 = vsel %vm504, %v1617, 0
        %v1646 = vsel %vm504, %v1619, 0
        %v1649 = vsel %vm504, %v1621, 0
        %1651 = vmatprep.subr.mxu0 0.0
        %1652 = vmatpush1.msra.mxu0 0.0
        %1653 = vmatprep.subr.mxu0 0.0
        %1654 = vmatpush1.msra.mxu0 0.0
        %1655 = vmatprep.subr.mxu0 0.0
        %1656 = vmatpush1.msra.mxu0 0.0
        %1657 = vmatprep.subr.mxu0 0.0
        %1658 = vmatpush1.msra.mxu0 0.0
        %1659 = vmatprep.subr.mxu0 0.0
        %1660 = vmatpush1.msra.mxu0 0.0
        %1661 = vmatprep.subr.mxu0 0.0
        %1662 = vmatpush1.msra.mxu0 0.0
        %1663 = vmatprep.subr.mxu0 0.0
        %1664 = vmatpush1.msra.mxu0 0.0
        %1665 = vmatprep.subr.mxu0 0.0
        %1666 = vmatpush1.msra.mxu0 0.0
        %1667 = vmatprep.subr.mxu0 0.0
        %1668 = vmatpush1.msra.mxu0 0.0
        %1669 = vmatprep.subr.mxu0 0.0
        %1670 = vmatpush1.msra.mxu0 0.0
        %1671 = vmatprep.subr.mxu0 0.0
        %1672 = vmatpush1.msra.mxu0 0.0
        %1673 = vmatprep.subr.mxu0 0.0
        %1674 = vmatpush1.msra.mxu0 0.0
        %1675 = vmatprep.subr.mxu0 0.0
        %1676 = vmatpush1.msra.mxu0 0.0
        %1677 = vmatprep.subr.mxu0 0.0
        %1678 = vmatpush1.msra.mxu0 0.0
        %1679 = vmatprep.subr.mxu0 0.0
        %1680 = vmatpush1.msra.mxu0 0.0
        %1681 = vmatprep.subr.mxu0 0.0
        %1682 = vmatpush1.msra.mxu0 %v425
        %1683 = vmatprep.subr.mxu0 0.0
        %1684 = vmatpush2.msra.mxu0 0.0
        %1685 = vmatprep.subr.mxu0 0.0
        %1686 = vmatpush2.msra.mxu0 0.0
        %1687 = vmatprep.subr.mxu0 0.0
        %1688 = vmatpush2.msra.mxu0 0.0
        %1689 = vmatprep.subr.mxu0 0.0
        %1690 = vmatpush2.msra.mxu0 0.0
        %1691 = vmatprep.subr.mxu0 0.0
        %1692 = vmatpush2.msra.mxu0 0.0
        %1693 = vmatprep.subr.mxu0 0.0
        %1694 = vmatpush2.msra.mxu0 0.0
        %1695 = vmatprep.subr.mxu0 0.0
        %1696 = vmatpush2.msra.mxu0 0.0
        %1697 = vmatprep.subr.mxu0 0.0
        %1698 = vmatpush2.msra.mxu0 0.0
        %1699 = vmatprep.subr.mxu0 0.0
        %1700 = vmatpush2.msra.mxu0 0.0
        %1701 = vmatprep.subr.mxu0 0.0
        %1702 = vmatpush2.msra.mxu0 0.0
        %1703 = vmatprep.subr.mxu0 0.0
        %1704 = vmatpush2.msra.mxu0 0.0
        %1705 = vmatprep.subr.mxu0 0.0
        %1706 = vmatpush2.msra.mxu0 0.0
        %1707 = vmatprep.subr.mxu0 0.0
        %1708 = vmatpush2.msra.mxu0 0.0
        %1709 = vmatprep.subr.mxu0 0.0
        %1710 = vmatpush2.msra.mxu0 0.0
        %1711 = vmatprep.subr.mxu0 0.0
        %1712 = vmatpush2.msra.mxu0 0.0
        %1713 = vmatprep.subr.mxu0 0.0
        %1714 = vmatpush2.msra.mxu0 0.0
        %1715 = vmatprep.mubr.f32.mxu0 0.0
        %1716 = vmatmul.mubr.f32.gmra.mxu0 %v1628
        %v1717 = vpop.f32.mrf.mxu0
        %v1718 = vadd.f32 0.0, %v1717
        %v1719 = vpop.f32.mrf.mxu0
        %1720 = vmatprep.mubr.f32.mxu0 0.0
        %1721 = vmatmul.mubr.f32.gmra.mxu0 %v1631
        %v1722 = vpop.f32.mrf.mxu0
        %v1723 = vadd.f32 0.0, %v1722
        %v1724 = vpop.f32.mrf.mxu0
        %1725 = vmatprep.mubr.f32.mxu0 0.0
        %1726 = vmatmul.mubr.f32.gmra.mxu0 %v1634
        %v1727 = vpop.f32.mrf.mxu0
        %v1728 = vadd.f32 0.0, %v1727
        %v1729 = vpop.f32.mrf.mxu0
        %1730 = vmatprep.mubr.f32.mxu0 0.0
        %1731 = vmatmul.mubr.f32.gmra.mxu0 %v1637
        %v1732 = vpop.f32.mrf.mxu0
        %v1733 = vadd.f32 0.0, %v1732
        %v1734 = vpop.f32.mrf.mxu0
        %1735 = vmatprep.mubr.f32.mxu0 0.0
        %1736 = vmatmul.mubr.f32.gmra.mxu0 %v1640
        %v1737 = vpop.f32.mrf.mxu0
        %v1738 = vadd.f32 0.0, %v1737
        %v1739 = vpop.f32.mrf.mxu0
        %1740 = vmatprep.mubr.f32.mxu0 0.0
        %1741 = vmatmul.mubr.f32.gmra.mxu0 %v1643
        %v1742 = vpop.f32.mrf.mxu0
        %v1743 = vadd.f32 0.0, %v1742
        %v1744 = vpop.f32.mrf.mxu0
        %1745 = vmatprep.mubr.f32.mxu0 0.0
        %1746 = vmatmul.mubr.f32.gmra.mxu0 %v1646
        %v1747 = vpop.f32.mrf.mxu0
        %v1748 = vadd.f32 0.0, %v1747
        %v1749 = vpop.f32.mrf.mxu0
        %1750 = vmatprep.mubr.f32.mxu0 0.0
        %1751 = vmatmul.mubr.f32.gmra.mxu0 %v1649
        %v1752 = vpop.f32.mrf.mxu0
        %v1753 = vadd.f32 0.0, %v1752
        %v1754 = vpop.f32.mrf.mxu0
        %1755 = vdwg.mxu0
        %v1756 = vadd.f32 %v1599, %v1718
        %v1757 = vadd.f32 %v1600, %v1723
        %v1758 = vadd.f32 %v1601, %v1728
        %v1759 = vadd.f32 %v1602, %v1733
        %v1760 = vadd.f32 %v1603, %v1738
        %v1761 = vadd.f32 %v1604, %v1743
        %v1762 = vadd.f32 %v1605, %v1748
        %v1763 = vadd.f32 %v1606, %v1753
        %v1772 = vrot.slane %v1607, 1
        %v1773 = vrot.slane %v1608, 1
        %v1774 = vsel %vm479, %v1772, %v1773
        %v1775 = vrot.slane %v1609, 1
        %v1776 = vrot.slane %v1610, 1
        %v1777 = vsel %vm479, %v1775, %v1776
        %v1778 = vrot.slane %v1611, 1
        %v1779 = vrot.slane %v1612, 1
        %v1780 = vsel %vm479, %v1778, %v1779
        %v1781 = vrot.slane %v1613, 1
        %v1782 = vrot.slane %v1614, 1
        %v1783 = vsel %vm479, %v1781, %v1782
        %v1784 = vrot.slane %v1615, 1
        %v1785 = vrot.slane %v1616, 1
        %v1786 = vsel %vm479, %v1784, %v1785
        %v1787 = vrot.slane %v1617, 1
        %v1788 = vrot.slane %v1618, 1
        %v1789 = vsel %vm479, %v1787, %v1788
        %v1790 = vrot.slane %v1619, 1
        %v1791 = vrot.slane %v1620, 1
        %v1792 = vsel %vm479, %v1790, %v1791
        %v1793 = vrot.slane %v1621, 1
        %v1794 = vrot.slane %v1622, 1
        %v1795 = vsel %vm479, %v1793, %v1794
        %v1796 = vsel %vm504, %v1774, 0
        %v1798 = vsel %vm504, %v1777, 0
        %v1800 = vsel %vm504, %v1780, 0
        %v1802 = vsel %vm504, %v1783, 0
        %v1804 = vsel %vm504, %v1786, 0
        %v1806 = vsel %vm504, %v1789, 0
        %v1808 = vsel %vm504, %v1792, 0
        %v1810 = vsel %vm504, %v1795, 0
        %1812 = vmatprep.subr.mxu0 0.0
        %1813 = vmatpush1.msra.mxu0 0.0
        %1814 = vmatprep.subr.mxu0 0.0
        %1815 = vmatpush1.msra.mxu0 0.0
        %1816 = vmatprep.subr.mxu0 0.0
        %1817 = vmatpush1.msra.mxu0 0.0
        %1818 = vmatprep.subr.mxu0 0.0
        %1819 = vmatpush1.msra.mxu0 0.0
        %1820 = vmatprep.subr.mxu0 0.0
        %1821 = vmatpush1.msra.mxu0 0.0
        %1822 = vmatprep.subr.mxu0 0.0
        %1823 = vmatpush1.msra.mxu0 0.0
        %1824 = vmatprep.subr.mxu0 0.0
        %1825 = vmatpush1.msra.mxu0 0.0
        %1826 = vmatprep.subr.mxu0 0.0
        %1827 = vmatpush1.msra.mxu0 0.0
        %1828 = vmatprep.subr.mxu0 0.0
        %1829 = vmatpush1.msra.mxu0 0.0
        %1830 = vmatprep.subr.mxu0 0.0
        %1831 = vmatpush1.msra.mxu0 0.0
        %1832 = vmatprep.subr.mxu0 0.0
        %1833 = vmatpush1.msra.mxu0 0.0
        %1834 = vmatprep.subr.mxu0 0.0
        %1835 = vmatpush1.msra.mxu0 0.0
        %1836 = vmatprep.subr.mxu0 0.0
        %1837 = vmatpush1.msra.mxu0 0.0
        %1838 = vmatprep.subr.mxu0 0.0
        %1839 = vmatpush1.msra.mxu0 0.0
        %1840 = vmatprep.subr.mxu0 0.0
        %1841 = vmatpush1.msra.mxu0 0.0
        %1842 = vmatprep.subr.mxu0 0.0
        %1843 = vmatpush1.msra.mxu0 %v426
        %1844 = vmatprep.subr.mxu0 0.0
        %1845 = vmatpush2.msra.mxu0 0.0
        %1846 = vmatprep.subr.mxu0 0.0
        %1847 = vmatpush2.msra.mxu0 0.0
        %1848 = vmatprep.subr.mxu0 0.0
        %1849 = vmatpush2.msra.mxu0 0.0
        %1850 = vmatprep.subr.mxu0 0.0
        %1851 = vmatpush2.msra.mxu0 0.0
        %1852 = vmatprep.subr.mxu0 0.0
        %1853 = vmatpush2.msra.mxu0 0.0
        %1854 = vmatprep.subr.mxu0 0.0
        %1855 = vmatpush2.msra.mxu0 0.0
        %1856 = vmatprep.subr.mxu0 0.0
        %1857 = vmatpush2.msra.mxu0 0.0
        %1858 = vmatprep.subr.mxu0 0.0
        %1859 = vmatpush2.msra.mxu0 0.0
        %1860 = vmatprep.subr.mxu0 0.0
        %1861 = vmatpush2.msra.mxu0 0.0
        %1862 = vmatprep.subr.mxu0 0.0
        %1863 = vmatpush2.msra.mxu0 0.0
        %1864 = vmatprep.subr.mxu0 0.0
        %1865 = vmatpush2.msra.mxu0 0.0
        %1866 = vmatprep.subr.mxu0 0.0
        %1867 = vmatpush2.msra.mxu0 0.0
        %1868 = vmatprep.subr.mxu0 0.0
        %1869 = vmatpush2.msra.mxu0 0.0
        %1870 = vmatprep.subr.mxu0 0.0
        %1871 = vmatpush2.msra.mxu0 0.0
        %1872 = vmatprep.subr.mxu0 0.0
        %1873 = vmatpush2.msra.mxu0 0.0
        %1874 = vmatprep.subr.mxu0 0.0
        %1875 = vmatpush2.msra.mxu0 0.0
        %1876 = vmatprep.mubr.f32.mxu0 0.0
        %1877 = vmatmul.mubr.f32.gmra.mxu0 %v1796
        %v1878 = vpop.f32.mrf.mxu0
        %v1879 = vadd.f32 0.0, %v1878
        %v1880 = vpop.f32.mrf.mxu0
        %1881 = vmatprep.mubr.f32.mxu0 0.0
        %1882 = vmatmul.mubr.f32.gmra.mxu0 %v1798
        %v1883 = vpop.f32.mrf.mxu0
        %v1884 = vadd.f32 0.0, %v1883
        %v1885 = vpop.f32.mrf.mxu0
        %1886 = vmatprep.mubr.f32.mxu0 0.0
        %1887 = vmatmul.mubr.f32.gmra.mxu0 %v1800
        %v1888 = vpop.f32.mrf.mxu0
        %v1889 = vadd.f32 0.0, %v1888
        %v1890 = vpop.f32.mrf.mxu0
        %1891 = vmatprep.mubr.f32.mxu0 0.0
        %1892 = vmatmul.mubr.f32.gmra.mxu0 %v1802
        %v1893 = vpop.f32.mrf.mxu0
        %v1894 = vadd.f32 0.0, %v1893
        %v1895 = vpop.f32.mrf.mxu0
        %1896 = vmatprep.mubr.f32.mxu0 0.0
        %1897 = vmatmul.mubr.f32.gmra.mxu0 %v1804
        %v1898 = vpop.f32.mrf.mxu0
        %v1899 = vadd.f32 0.0, %v1898
        %v1900 = vpop.f32.mrf.mxu0
        %1901 = vmatprep.mubr.f32.mxu0 0.0
        %1902 = vmatmul.mubr.f32.gmra.mxu0 %v1806
        %v1903 = vpop.f32.mrf.mxu0
        %v1904 = vadd.f32 0.0, %v1903
        %v1905 = vpop.f32.mrf.mxu0
        %1906 = vmatprep.mubr.f32.mxu0 0.0
        %1907 = vmatmul.mubr.f32.gmra.mxu0 %v1808
        %v1908 = vpop.f32.mrf.mxu0
        %v1909 = vadd.f32 0.0, %v1908
        %v1910 = vpop.f32.mrf.mxu0
        %1911 = vmatprep.mubr.f32.mxu0 0.0
        %1912 = vmatmul.mubr.f32.gmra.mxu0 %v1810
        %v1913 = vpop.f32.mrf.mxu0
        %v1914 = vadd.f32 0.0, %v1913
        %v1915 = vpop.f32.mrf.mxu0
        %1916 = vdwg.mxu0
        %v1917 = vadd.f32 %v1756, %v1879
        %v1918 = vadd.f32 %v1757, %v1884
        %v1919 = vadd.f32 %v1758, %v1889
        %v1920 = vadd.f32 %v1759, %v1894
        %v1921 = vadd.f32 %v1760, %v1899
        %v1922 = vadd.f32 %v1761, %v1904
        %v1923 = vadd.f32 %v1762, %v1909
        %v1924 = vadd.f32 %v1763, %v1914
        %v1925 = vrot.slane %v1607, 2
        %v1926 = vrot.slane %v1608, 2
        %v1927 = vsel %vm747, %v1925, %v1926
        %v1928 = vrot.slane %v1609, 2
        %v1929 = vrot.slane %v1610, 2
        %v1930 = vsel %vm747, %v1928, %v1929
        %v1931 = vrot.slane %v1611, 2
        %v1932 = vrot.slane %v1612, 2
        %v1933 = vsel %vm747, %v1931, %v1932
        %v1934 = vrot.slane %v1613, 2
        %v1935 = vrot.slane %v1614, 2
        %v1936 = vsel %vm747, %v1934, %v1935
        %v1937 = vrot.slane %v1615, 2
        %v1938 = vrot.slane %v1616, 2
        %v1939 = vsel %vm747, %v1937, %v1938
        %v1940 = vrot.slane %v1617, 2
        %v1941 = vrot.slane %v1618, 2
        %v1942 = vsel %vm747, %v1940, %v1941
        %v1943 = vrot.slane %v1619, 2
        %v1944 = vrot.slane %v1620, 2
        %v1945 = vsel %vm747, %v1943, %v1944
        %v1946 = vrot.slane %v1621, 2
        %v1947 = vrot.slane %v1622, 2
        %v1948 = vsel %vm747, %v1946, %v1947
        %v1949 = vsel %vm504, %v1927, 0
        %v1951 = vsel %vm504, %v1930, 0
        %v1953 = vsel %vm504, %v1933, 0
        %v1955 = vsel %vm504, %v1936, 0
        %v1957 = vsel %vm504, %v1939, 0
        %v1959 = vsel %vm504, %v1942, 0
        %v1961 = vsel %vm504, %v1945, 0
        %v1963 = vsel %vm504, %v1948, 0
        %1965 = vmatprep.subr.mxu0 0.0
        %1966 = vmatpush1.msra.mxu0 0.0
        %1967 = vmatprep.subr.mxu0 0.0
        %1968 = vmatpush1.msra.mxu0 0.0
        %1969 = vmatprep.subr.mxu0 0.0
        %1970 = vmatpush1.msra.mxu0 0.0
        %1971 = vmatprep.subr.mxu0 0.0
        %1972 = vmatpush1.msra.mxu0 0.0
        %1973 = vmatprep.subr.mxu0 0.0
        %1974 = vmatpush1.msra.mxu0 0.0
        %1975 = vmatprep.subr.mxu0 0.0
        %1976 = vmatpush1.msra.mxu0 0.0
        %1977 = vmatprep.subr.mxu0 0.0
        %1978 = vmatpush1.msra.mxu0 0.0
        %1979 = vmatprep.subr.mxu0 0.0
        %1980 = vmatpush1.msra.mxu0 0.0
        %1981 = vmatprep.subr.mxu0 0.0
        %1982 = vmatpush1.msra.mxu0 0.0
        %1983 = vmatprep.subr.mxu0 0.0
        %1984 = vmatpush1.msra.mxu0 0.0
        %1985 = vmatprep.subr.mxu0 0.0
        %1986 = vmatpush1.msra.mxu0 0.0
        %1987 = vmatprep.subr.mxu0 0.0
        %1988 = vmatpush1.msra.mxu0 0.0
        %1989 = vmatprep.subr.mxu0 0.0
        %1990 = vmatpush1.msra.mxu0 0.0
        %1991 = vmatprep.subr.mxu0 0.0
        %1992 = vmatpush1.msra.mxu0 0.0
        %1993 = vmatprep.subr.mxu0 0.0
        %1994 = vmatpush1.msra.mxu0 0.0
        %1995 = vmatprep.subr.mxu0 0.0
        %1996 = vmatpush1.msra.mxu0 %v427
        %1997 = vmatprep.subr.mxu0 0.0
        %1998 = vmatpush2.msra.mxu0 0.0
        %1999 = vmatprep.subr.mxu0 0.0
        %2000 = vmatpush2.msra.mxu0 0.0
        %2001 = vmatprep.subr.mxu0 0.0
        %2002 = vmatpush2.msra.mxu0 0.0
        %2003 = vmatprep.subr.mxu0 0.0
        %2004 = vmatpush2.msra.mxu0 0.0
        %2005 = vmatprep.subr.mxu0 0.0
        %2006 = vmatpush2.msra.mxu0 0.0
        %2007 = vmatprep.subr.mxu0 0.0
        %2008 = vmatpush2.msra.mxu0 0.0
        %2009 = vmatprep.subr.mxu0 0.0
        %2010 = vmatpush2.msra.mxu0 0.0
        %2011 = vmatprep.subr.mxu0 0.0
        %2012 = vmatpush2.msra.mxu0 0.0
        %2013 = vmatprep.subr.mxu0 0.0
        %2014 = vmatpush2.msra.mxu0 0.0
        %2015 = vmatprep.subr.mxu0 0.0
        %2016 = vmatpush2.msra.mxu0 0.0
        %2017 = vmatprep.subr.mxu0 0.0
        %2018 = vmatpush2.msra.mxu0 0.0
        %2019 = vmatprep.subr.mxu0 0.0
        %2020 = vmatpush2.msra.mxu0 0.0
        %2021 = vmatprep.subr.mxu0 0.0
        %2022 = vmatpush2.msra.mxu0 0.0
        %2023 = vmatprep.subr.mxu0 0.0
        %2024 = vmatpush2.msra.mxu0 0.0
        %2025 = vmatprep.subr.mxu0 0.0
        %2026 = vmatpush2.msra.mxu0 0.0
        %2027 = vmatprep.subr.mxu0 0.0
        %2028 = vmatpush2.msra.mxu0 0.0
        %2029 = vmatprep.mubr.f32.mxu0 0.0
        %2030 = vmatmul.mubr.f32.gmra.mxu0 %v1949
        %v2031 = vpop.f32.mrf.mxu0
        %v2032 = vadd.f32 0.0, %v2031
        %v2033 = vpop.f32.mrf.mxu0
        %2034 = vmatprep.mubr.f32.mxu0 0.0
        %2035 = vmatmul.mubr.f32.gmra.mxu0 %v1951
        %v2036 = vpop.f32.mrf.mxu0
        %v2037 = vadd.f32 0.0, %v2036
        %v2038 = vpop.f32.mrf.mxu0
        %2039 = vmatprep.mubr.f32.mxu0 0.0
        %2040 = vmatmul.mubr.f32.gmra.mxu0 %v1953
        %v2041 = vpop.f32.mrf.mxu0
        %v2042 = vadd.f32 0.0, %v2041
        %v2043 = vpop.f32.mrf.mxu0
        %2044 = vmatprep.mubr.f32.mxu0 0.0
        %2045 = vmatmul.mubr.f32.gmra.mxu0 %v1955
        %v2046 = vpop.f32.mrf.mxu0
        %v2047 = vadd.f32 0.0, %v2046
        %v2048 = vpop.f32.mrf.mxu0
        %2049 = vmatprep.mubr.f32.mxu0 0.0
        %2050 = vmatmul.mubr.f32.gmra.mxu0 %v1957
        %v2051 = vpop.f32.mrf.mxu0
        %v2052 = vadd.f32 0.0, %v2051
        %v2053 = vpop.f32.mrf.mxu0
        %2054 = vmatprep.mubr.f32.mxu0 0.0
        %2055 = vmatmul.mubr.f32.gmra.mxu0 %v1959
        %v2056 = vpop.f32.mrf.mxu0
        %v2057 = vadd.f32 0.0, %v2056
        %v2058 = vpop.f32.mrf.mxu0
        %2059 = vmatprep.mubr.f32.mxu0 0.0
        %2060 = vmatmul.mubr.f32.gmra.mxu0 %v1961
        %v2061 = vpop.f32.mrf.mxu0
        %v2062 = vadd.f32 0.0, %v2061
        %v2063 = vpop.f32.mrf.mxu0
        %2064 = vmatprep.mubr.f32.mxu0 0.0
        %2065 = vmatmul.mubr.f32.gmra.mxu0 %v1963
        %v2066 = vpop.f32.mrf.mxu0
        %v2067 = vadd.f32 0.0, %v2066
        %v2068 = vpop.f32.mrf.mxu0
        %2069 = vdwg.mxu0
        %v2070 = vadd.f32 %v1917, %v2032
        %v2071 = vadd.f32 %v1918, %v2037
        %v2072 = vadd.f32 %v1919, %v2042
        %v2073 = vadd.f32 %v1920, %v2047
        %v2074 = vadd.f32 %v1921, %v2052
        %v2075 = vadd.f32 %v1922, %v2057
        %v2076 = vadd.f32 %v1923, %v2062
        %v2077 = vadd.f32 %v1924, %v2067
        %v2079 = vsel %vm504, %v1623, 0
        %2081 = vmatprep.subr.mxu0 0.0
        %2082 = vmatpush1.msra.mxu0 0.0
        %2083 = vmatprep.subr.mxu0 0.0
        %2084 = vmatpush1.msra.mxu0 0.0
        %2085 = vmatprep.subr.mxu0 0.0
        %2086 = vmatpush1.msra.mxu0 0.0
        %2087 = vmatprep.subr.mxu0 0.0
        %2088 = vmatpush1.msra.mxu0 0.0
        %2089 = vmatprep.subr.mxu0 0.0
        %2090 = vmatpush1.msra.mxu0 0.0
        %2091 = vmatprep.subr.mxu0 0.0
        %2092 = vmatpush1.msra.mxu0 0.0
        %2093 = vmatprep.subr.mxu0 0.0
        %2094 = vmatpush1.msra.mxu0 0.0
        %2095 = vmatprep.subr.mxu0 0.0
        %2096 = vmatpush1.msra.mxu0 0.0
        %2097 = vmatprep.subr.mxu0 0.0
        %2098 = vmatpush1.msra.mxu0 0.0
        %2099 = vmatprep.subr.mxu0 0.0
        %2100 = vmatpush1.msra.mxu0 0.0
        %2101 = vmatprep.subr.mxu0 0.0
        %2102 = vmatpush1.msra.mxu0 0.0
        %2103 = vmatprep.subr.mxu0 0.0
        %2104 = vmatpush1.msra.mxu0 0.0
        %2105 = vmatprep.subr.mxu0 0.0
        %2106 = vmatpush1.msra.mxu0 0.0
        %2107 = vmatprep.subr.mxu0 0.0
        %2108 = vmatpush1.msra.mxu0 0.0
        %2109 = vmatprep.subr.mxu0 0.0
        %2110 = vmatpush1.msra.mxu0 0.0
        %2111 = vmatprep.subr.mxu0 0.0
        %2112 = vmatpush1.msra.mxu0 %v428
        %2113 = vmatprep.subr.mxu0 0.0
        %2114 = vmatpush2.msra.mxu0 0.0
        %2115 = vmatprep.subr.mxu0 0.0
        %2116 = vmatpush2.msra.mxu0 0.0
        %2117 = vmatprep.subr.mxu0 0.0
        %2118 = vmatpush2.msra.mxu0 0.0
        %2119 = vmatprep.subr.mxu0 0.0
        %2120 = vmatpush2.msra.mxu0 0.0
        %2121 = vmatprep.subr.mxu0 0.0
        %2122 = vmatpush2.msra.mxu0 0.0
        %2123 = vmatprep.subr.mxu0 0.0
        %2124 = vmatpush2.msra.mxu0 0.0
        %2125 = vmatprep.subr.mxu0 0.0
        %2126 = vmatpush2.msra.mxu0 0.0
        %2127 = vmatprep.subr.mxu0 0.0
        %2128 = vmatpush2.msra.mxu0 0.0
        %2129 = vmatprep.subr.mxu0 0.0
        %2130 = vmatpush2.msra.mxu0 0.0
        %2131 = vmatprep.subr.mxu0 0.0
        %2132 = vmatpush2.msra.mxu0 0.0
        %2133 = vmatprep.subr.mxu0 0.0
        %2134 = vmatpush2.msra.mxu0 0.0
        %2135 = vmatprep.subr.mxu0 0.0
        %2136 = vmatpush2.msra.mxu0 0.0
        %2137 = vmatprep.subr.mxu0 0.0
        %2138 = vmatpush2.msra.mxu0 0.0
        %2139 = vmatprep.subr.mxu0 0.0
        %2140 = vmatpush2.msra.mxu0 0.0
        %2141 = vmatprep.subr.mxu0 0.0
        %2142 = vmatpush2.msra.mxu0 0.0
        %2143 = vmatprep.subr.mxu0 0.0
        %2144 = vmatpush2.msra.mxu0 0.0
        %2145 = vmatprep.mubr.f32.mxu0 0.0
        %2146 = vmatmul.mubr.f32.gmra.mxu0 %v1631
        %v2147 = vpop.f32.mrf.mxu0
        %v2148 = vadd.f32 0.0, %v2147
        %v2149 = vpop.f32.mrf.mxu0
        %2150 = vmatprep.mubr.f32.mxu0 0.0
        %2151 = vmatmul.mubr.f32.gmra.mxu0 %v1634
        %v2152 = vpop.f32.mrf.mxu0
        %v2153 = vadd.f32 0.0, %v2152
        %v2154 = vpop.f32.mrf.mxu0
        %2155 = vmatprep.mubr.f32.mxu0 0.0
        %2156 = vmatmul.mubr.f32.gmra.mxu0 %v1637
        %v2157 = vpop.f32.mrf.mxu0
        %v2158 = vadd.f32 0.0, %v2157
        %v2159 = vpop.f32.mrf.mxu0
        %2160 = vmatprep.mubr.f32.mxu0 0.0
        %2161 = vmatmul.mubr.f32.gmra.mxu0 %v1640
        %v2162 = vpop.f32.mrf.mxu0
        %v2163 = vadd.f32 0.0, %v2162
        %v2164 = vpop.f32.mrf.mxu0
        %2165 = vmatprep.mubr.f32.mxu0 0.0
        %2166 = vmatmul.mubr.f32.gmra.mxu0 %v1643
        %v2167 = vpop.f32.mrf.mxu0
        %v2168 = vadd.f32 0.0, %v2167
        %v2169 = vpop.f32.mrf.mxu0
        %2170 = vmatprep.mubr.f32.mxu0 0.0
        %2171 = vmatmul.mubr.f32.gmra.mxu0 %v1646
        %v2172 = vpop.f32.mrf.mxu0
        %v2173 = vadd.f32 0.0, %v2172
        %v2174 = vpop.f32.mrf.mxu0
        %2175 = vmatprep.mubr.f32.mxu0 0.0
        %2176 = vmatmul.mubr.f32.gmra.mxu0 %v1649
        %v2177 = vpop.f32.mrf.mxu0
        %v2178 = vadd.f32 0.0, %v2177
        %v2179 = vpop.f32.mrf.mxu0
        %2180 = vmatprep.mubr.f32.mxu0 0.0
        %2181 = vmatmul.mubr.f32.gmra.mxu0 %v2079
        %v2182 = vpop.f32.mrf.mxu0
        %v2183 = vadd.f32 0.0, %v2182
        %v2184 = vpop.f32.mrf.mxu0
        %2185 = vdwg.mxu0
        %v2186 = vadd.f32 %v2070, %v2148
        %v2187 = vadd.f32 %v2071, %v2153
        %v2188 = vadd.f32 %v2072, %v2158
        %v2189 = vadd.f32 %v2073, %v2163
        %v2190 = vadd.f32 %v2074, %v2168
        %v2191 = vadd.f32 %v2075, %v2173
        %v2192 = vadd.f32 %v2076, %v2178
        %v2193 = vadd.f32 %v2077, %v2183
        %v2195 = vrot.slane %v1623, 1
        %v2196 = vrot.slane %v1624, 1
        %v2197 = vsel %vm479, %v2195, %v2196
        %v2198 = vsel %vm504, %v2197, 0
        %2200 = vmatprep.subr.mxu0 0.0
        %2201 = vmatpush1.msra.mxu0 0.0
        %2202 = vmatprep.subr.mxu0 0.0
        %2203 = vmatpush1.msra.mxu0 0.0
        %2204 = vmatprep.subr.mxu0 0.0
        %2205 = vmatpush1.msra.mxu0 0.0
        %2206 = vmatprep.subr.mxu0 0.0
        %2207 = vmatpush1.msra.mxu0 0.0
        %2208 = vmatprep.subr.mxu0 0.0
        %2209 = vmatpush1.msra.mxu0 0.0
        %2210 = vmatprep.subr.mxu0 0.0
        %2211 = vmatpush1.msra.mxu0 0.0
        %2212 = vmatprep.subr.mxu0 0.0
        %2213 = vmatpush1.msra.mxu0 0.0
        %2214 = vmatprep.subr.mxu0 0.0
        %2215 = vmatpush1.msra.mxu0 0.0
        %2216 = vmatprep.subr.mxu0 0.0
        %2217 = vmatpush1.msra.mxu0 0.0
        %2218 = vmatprep.subr.mxu0 0.0
        %2219 = vmatpush1.msra.mxu0 0.0
        %2220 = vmatprep.subr.mxu0 0.0
        %2221 = vmatpush1.msra.mxu0 0.0
        %2222 = vmatprep.subr.mxu0 0.0
        %2223 = vmatpush1.msra.mxu0 0.0
        %2224 = vmatprep.subr.mxu0 0.0
        %2225 = vmatpush1.msra.mxu0 0.0
        %2226 = vmatprep.subr.mxu0 0.0
        %2227 = vmatpush1.msra.mxu0 0.0
        %2228 = vmatprep.subr.mxu0 0.0
        %2229 = vmatpush1.msra.mxu0 0.0
        %2230 = vmatprep.subr.mxu0 0.0
        %2231 = vmatpush1.msra.mxu0 %v429
        %2232 = vmatprep.subr.mxu0 0.0
        %2233 = vmatpush2.msra.mxu0 0.0
        %2234 = vmatprep.subr.mxu0 0.0
        %2235 = vmatpush2.msra.mxu0 0.0
        %2236 = vmatprep.subr.mxu0 0.0
        %2237 = vmatpush2.msra.mxu0 0.0
        %2238 = vmatprep.subr.mxu0 0.0
        %2239 = vmatpush2.msra.mxu0 0.0
        %2240 = vmatprep.subr.mxu0 0.0
        %2241 = vmatpush2.msra.mxu0 0.0
        %2242 = vmatprep.subr.mxu0 0.0
        %2243 = vmatpush2.msra.mxu0 0.0
        %2244 = vmatprep.subr.mxu0 0.0
        %2245 = vmatpush2.msra.mxu0 0.0
        %2246 = vmatprep.subr.mxu0 0.0
        %2247 = vmatpush2.msra.mxu0 0.0
        %2248 = vmatprep.subr.mxu0 0.0
        %2249 = vmatpush2.msra.mxu0 0.0
        %2250 = vmatprep.subr.mxu0 0.0
        %2251 = vmatpush2.msra.mxu0 0.0
        %2252 = vmatprep.subr.mxu0 0.0
        %2253 = vmatpush2.msra.mxu0 0.0
        %2254 = vmatprep.subr.mxu0 0.0
        %2255 = vmatpush2.msra.mxu0 0.0
        %2256 = vmatprep.subr.mxu0 0.0
        %2257 = vmatpush2.msra.mxu0 0.0
        %2258 = vmatprep.subr.mxu0 0.0
        %2259 = vmatpush2.msra.mxu0 0.0
        %2260 = vmatprep.subr.mxu0 0.0
        %2261 = vmatpush2.msra.mxu0 0.0
        %2262 = vmatprep.subr.mxu0 0.0
        %2263 = vmatpush2.msra.mxu0 0.0
        %2264 = vmatprep.mubr.f32.mxu0 0.0
        %2265 = vmatmul.mubr.f32.gmra.mxu0 %v1798
        %v2266 = vpop.f32.mrf.mxu0
        %v2267 = vadd.f32 0.0, %v2266
        %v2268 = vpop.f32.mrf.mxu0
        %2269 = vmatprep.mubr.f32.mxu0 0.0
        %2270 = vmatmul.mubr.f32.gmra.mxu0 %v1800
        %v2271 = vpop.f32.mrf.mxu0
        %v2272 = vadd.f32 0.0, %v2271
        %v2273 = vpop.f32.mrf.mxu0
        %2274 = vmatprep.mubr.f32.mxu0 0.0
        %2275 = vmatmul.mubr.f32.gmra.mxu0 %v1802
        %v2276 = vpop.f32.mrf.mxu0
        %v2277 = vadd.f32 0.0, %v2276
        %v2278 = vpop.f32.mrf.mxu0
        %2279 = vmatprep.mubr.f32.mxu0 0.0
        %2280 = vmatmul.mubr.f32.gmra.mxu0 %v1804
        %v2281 = vpop.f32.mrf.mxu0
        %v2282 = vadd.f32 0.0, %v2281
        %v2283 = vpop.f32.mrf.mxu0
        %2284 = vmatprep.mubr.f32.mxu0 0.0
        %2285 = vmatmul.mubr.f32.gmra.mxu0 %v1806
        %v2286 = vpop.f32.mrf.mxu0
        %v2287 = vadd.f32 0.0, %v2286
        %v2288 = vpop.f32.mrf.mxu0
        %2289 = vmatprep.mubr.f32.mxu0 0.0
        %2290 = vmatmul.mubr.f32.gmra.mxu0 %v1808
        %v2291 = vpop.f32.mrf.mxu0
        %v2292 = vadd.f32 0.0, %v2291
        %v2293 = vpop.f32.mrf.mxu0
        %2294 = vmatprep.mubr.f32.mxu0 0.0
        %2295 = vmatmul.mubr.f32.gmra.mxu0 %v1810
        %v2296 = vpop.f32.mrf.mxu0
        %v2297 = vadd.f32 0.0, %v2296
        %v2298 = vpop.f32.mrf.mxu0
        %2299 = vmatprep.mubr.f32.mxu0 0.0
        %2300 = vmatmul.mubr.f32.gmra.mxu0 %v2198
        %v2301 = vpop.f32.mrf.mxu0
        %v2302 = vadd.f32 0.0, %v2301
        %v2303 = vpop.f32.mrf.mxu0
        %2304 = vdwg.mxu0
        %v2305 = vadd.f32 %v2186, %v2267
        %v2306 = vadd.f32 %v2187, %v2272
        %v2307 = vadd.f32 %v2188, %v2277
        %v2308 = vadd.f32 %v2189, %v2282
        %v2309 = vadd.f32 %v2190, %v2287
        %v2310 = vadd.f32 %v2191, %v2292
        %v2311 = vadd.f32 %v2192, %v2297
        %v2312 = vadd.f32 %v2193, %v2302
        %v2313 = vrot.slane %v1623, 2
        %v2314 = vrot.slane %v1624, 2
        %v2315 = vsel %vm747, %v2313, %v2314
        %v2316 = vsel %vm504, %v2315, 0
        %2318 = vmatprep.subr.mxu0 0.0
        %2319 = vmatpush1.msra.mxu0 0.0
        %2320 = vmatprep.subr.mxu0 0.0
        %2321 = vmatpush1.msra.mxu0 0.0
        %2322 = vmatprep.subr.mxu0 0.0
        %2323 = vmatpush1.msra.mxu0 0.0
        %2324 = vmatprep.subr.mxu0 0.0
        %2325 = vmatpush1.msra.mxu0 0.0
        %2326 = vmatprep.subr.mxu0 0.0
        %2327 = vmatpush1.msra.mxu0 0.0
        %2328 = vmatprep.subr.mxu0 0.0
        %2329 = vmatpush1.msra.mxu0 0.0
        %2330 = vmatprep.subr.mxu0 0.0
        %2331 = vmatpush1.msra.mxu0 0.0
        %2332 = vmatprep.subr.mxu0 0.0
        %2333 = vmatpush1.msra.mxu0 0.0
        %2334 = vmatprep.subr.mxu0 0.0
        %2335 = vmatpush1.msra.mxu0 0.0
        %2336 = vmatprep.subr.mxu0 0.0
        %2337 = vmatpush1.msra.mxu0 0.0
        %2338 = vmatprep.subr.mxu0 0.0
        %2339 = vmatpush1.msra.mxu0 0.0
        %2340 = vmatprep.subr.mxu0 0.0
        %2341 = vmatpush1.msra.mxu0 0.0
        %2342 = vmatprep.subr.mxu0 0.0
        %2343 = vmatpush1.msra.mxu0 0.0
        %2344 = vmatprep.subr.mxu0 0.0
        %2345 = vmatpush1.msra.mxu0 0.0
        %2346 = vmatprep.subr.mxu0 0.0
        %2347 = vmatpush1.msra.mxu0 0.0
        %2348 = vmatprep.subr.mxu0 0.0
        %2349 = vmatpush1.msra.mxu0 %v430
        %2350 = vmatprep.subr.mxu0 0.0
        %2351 = vmatpush2.msra.mxu0 0.0
        %2352 = vmatprep.subr.mxu0 0.0
        %2353 = vmatpush2.msra.mxu0 0.0
        %2354 = vmatprep.subr.mxu0 0.0
        %2355 = vmatpush2.msra.mxu0 0.0
        %2356 = vmatprep.subr.mxu0 0.0
        %2357 = vmatpush2.msra.mxu0 0.0
        %2358 = vmatprep.subr.mxu0 0.0
        %2359 = vmatpush2.msra.mxu0 0.0
        %2360 = vmatprep.subr.mxu0 0.0
        %2361 = vmatpush2.msra.mxu0 0.0
        %2362 = vmatprep.subr.mxu0 0.0
        %2363 = vmatpush2.msra.mxu0 0.0
        %2364 = vmatprep.subr.mxu0 0.0
        %2365 = vmatpush2.msra.mxu0 0.0
        %2366 = vmatprep.subr.mxu0 0.0
        %2367 = vmatpush2.msra.mxu0 0.0
        %2368 = vmatprep.subr.mxu0 0.0
        %2369 = vmatpush2.msra.mxu0 0.0
        %2370 = vmatprep.subr.mxu0 0.0
        %2371 = vmatpush2.msra.mxu0 0.0
        %2372 = vmatprep.subr.mxu0 0.0
        %2373 = vmatpush2.msra.mxu0 0.0
        %2374 = vmatprep.subr.mxu0 0.0
        %2375 = vmatpush2.msra.mxu0 0.0
        %2376 = vmatprep.subr.mxu0 0.0
        %2377 = vmatpush2.msra.mxu0 0.0
        %2378 = vmatprep.subr.mxu0 0.0
        %2379 = vmatpush2.msra.mxu0 0.0
        %2380 = vmatprep.subr.mxu0 0.0
        %2381 = vmatpush2.msra.mxu0 0.0
        %2382 = vmatprep.mubr.f32.mxu0 0.0
        %2383 = vmatmul.mubr.f32.gmra.mxu0 %v1951
        %v2384 = vpop.f32.mrf.mxu0
        %v2385 = vadd.f32 0.0, %v2384
        %v2386 = vpop.f32.mrf.mxu0
        %2387 = vmatprep.mubr.f32.mxu0 0.0
        %2388 = vmatmul.mubr.f32.gmra.mxu0 %v1953
        %v2389 = vpop.f32.mrf.mxu0
        %v2390 = vadd.f32 0.0, %v2389
        %v2391 = vpop.f32.mrf.mxu0
        %2392 = vmatprep.mubr.f32.mxu0 0.0
        %2393 = vmatmul.mubr.f32.gmra.mxu0 %v1955
        %v2394 = vpop.f32.mrf.mxu0
        %v2395 = vadd.f32 0.0, %v2394
        %v2396 = vpop.f32.mrf.mxu0
        %2397 = vmatprep.mubr.f32.mxu0 0.0
        %2398 = vmatmul.mubr.f32.gmra.mxu0 %v1957
        %v2399 = vpop.f32.mrf.mxu0
        %v2400 = vadd.f32 0.0, %v2399
        %v2401 = vpop.f32.mrf.mxu0
        %2402 = vmatprep.mubr.f32.mxu0 0.0
        %2403 = vmatmul.mubr.f32.gmra.mxu0 %v1959
        %v2404 = vpop.f32.mrf.mxu0
        %v2405 = vadd.f32 0.0, %v2404
        %v2406 = vpop.f32.mrf.mxu0
        %2407 = vmatprep.mubr.f32.mxu0 0.0
        %2408 = vmatmul.mubr.f32.gmra.mxu0 %v1961
        %v2409 = vpop.f32.mrf.mxu0
        %v2410 = vadd.f32 0.0, %v2409
        %v2411 = vpop.f32.mrf.mxu0
        %2412 = vmatprep.mubr.f32.mxu0 0.0
        %2413 = vmatmul.mubr.f32.gmra.mxu0 %v1963
        %v2414 = vpop.f32.mrf.mxu0
        %v2415 = vadd.f32 0.0, %v2414
        %v2416 = vpop.f32.mrf.mxu0
        %2417 = vmatprep.mubr.f32.mxu0 0.0
        %2418 = vmatmul.mubr.f32.gmra.mxu0 %v2316
        %v2419 = vpop.f32.mrf.mxu0
        %v2420 = vadd.f32 0.0, %v2419
        %v2421 = vpop.f32.mrf.mxu0
        %2422 = vdwg.mxu0
        %v2423 = vadd.f32 %v2305, %v2385
        %v2424 = vadd.f32 %v2306, %v2390
        %v2425 = vadd.f32 %v2307, %v2395
        %v2426 = vadd.f32 %v2308, %v2400
        %v2427 = vadd.f32 %v2309, %v2405
        %v2428 = vadd.f32 %v2310, %v2410
        %v2429 = vadd.f32 %v2311, %v2415
        %v2430 = vadd.f32 %v2312, %v2420
        %v2432 = vsel %vm504, %v1625, 0
        %2434 = vmatprep.subr.mxu0 0.0
        %2435 = vmatpush1.msra.mxu0 0.0
        %2436 = vmatprep.subr.mxu0 0.0
        %2437 = vmatpush1.msra.mxu0 0.0
        %2438 = vmatprep.subr.mxu0 0.0
        %2439 = vmatpush1.msra.mxu0 0.0
        %2440 = vmatprep.subr.mxu0 0.0
        %2441 = vmatpush1.msra.mxu0 0.0
        %2442 = vmatprep.subr.mxu0 0.0
        %2443 = vmatpush1.msra.mxu0 0.0
        %2444 = vmatprep.subr.mxu0 0.0
        %2445 = vmatpush1.msra.mxu0 0.0
        %2446 = vmatprep.subr.mxu0 0.0
        %2447 = vmatpush1.msra.mxu0 0.0
        %2448 = vmatprep.subr.mxu0 0.0
        %2449 = vmatpush1.msra.mxu0 0.0
        %2450 = vmatprep.subr.mxu0 0.0
        %2451 = vmatpush1.msra.mxu0 0.0
        %2452 = vmatprep.subr.mxu0 0.0
        %2453 = vmatpush1.msra.mxu0 0.0
        %2454 = vmatprep.subr.mxu0 0.0
        %2455 = vmatpush1.msra.mxu0 0.0
        %2456 = vmatprep.subr.mxu0 0.0
        %2457 = vmatpush1.msra.mxu0 0.0
        %2458 = vmatprep.subr.mxu0 0.0
        %2459 = vmatpush1.msra.mxu0 0.0
        %2460 = vmatprep.subr.mxu0 0.0
        %2461 = vmatpush1.msra.mxu0 0.0
        %2462 = vmatprep.subr.mxu0 0.0
        %2463 = vmatpush1.msra.mxu0 0.0
        %2464 = vmatprep.subr.mxu0 0.0
        %2465 = vmatpush1.msra.mxu0 %v431
        %2466 = vmatprep.subr.mxu0 0.0
        %2467 = vmatpush2.msra.mxu0 0.0
        %2468 = vmatprep.subr.mxu0 0.0
        %2469 = vmatpush2.msra.mxu0 0.0
        %2470 = vmatprep.subr.mxu0 0.0
        %2471 = vmatpush2.msra.mxu0 0.0
        %2472 = vmatprep.subr.mxu0 0.0
        %2473 = vmatpush2.msra.mxu0 0.0
        %2474 = vmatprep.subr.mxu0 0.0
        %2475 = vmatpush2.msra.mxu0 0.0
        %2476 = vmatprep.subr.mxu0 0.0
        %2477 = vmatpush2.msra.mxu0 0.0
        %2478 = vmatprep.subr.mxu0 0.0
        %2479 = vmatpush2.msra.mxu0 0.0
        %2480 = vmatprep.subr.mxu0 0.0
        %2481 = vmatpush2.msra.mxu0 0.0
        %2482 = vmatprep.subr.mxu0 0.0
        %2483 = vmatpush2.msra.mxu0 0.0
        %2484 = vmatprep.subr.mxu0 0.0
        %2485 = vmatpush2.msra.mxu0 0.0
        %2486 = vmatprep.subr.mxu0 0.0
        %2487 = vmatpush2.msra.mxu0 0.0
        %2488 = vmatprep.subr.mxu0 0.0
        %2489 = vmatpush2.msra.mxu0 0.0
        %2490 = vmatprep.subr.mxu0 0.0
        %2491 = vmatpush2.msra.mxu0 0.0
        %2492 = vmatprep.subr.mxu0 0.0
        %2493 = vmatpush2.msra.mxu0 0.0
        %2494 = vmatprep.subr.mxu0 0.0
        %2495 = vmatpush2.msra.mxu0 0.0
        %2496 = vmatprep.subr.mxu0 0.0
        %2497 = vmatpush2.msra.mxu0 0.0
        %2498 = vmatprep.mubr.f32.mxu0 0.0
        %2499 = vmatmul.mubr.f32.gmra.mxu0 %v1634
        %v2500 = vpop.f32.mrf.mxu0
        %v2501 = vadd.f32 0.0, %v2500
        %v2502 = vpop.f32.mrf.mxu0
        %2503 = vmatprep.mubr.f32.mxu0 0.0
        %2504 = vmatmul.mubr.f32.gmra.mxu0 %v1637
        %v2505 = vpop.f32.mrf.mxu0
        %v2506 = vadd.f32 0.0, %v2505
        %v2507 = vpop.f32.mrf.mxu0
        %2508 = vmatprep.mubr.f32.mxu0 0.0
        %2509 = vmatmul.mubr.f32.gmra.mxu0 %v1640
        %v2510 = vpop.f32.mrf.mxu0
        %v2511 = vadd.f32 0.0, %v2510
        %v2512 = vpop.f32.mrf.mxu0
        %2513 = vmatprep.mubr.f32.mxu0 0.0
        %2514 = vmatmul.mubr.f32.gmra.mxu0 %v1643
        %v2515 = vpop.f32.mrf.mxu0
        %v2516 = vadd.f32 0.0, %v2515
        %v2517 = vpop.f32.mrf.mxu0
        %2518 = vmatprep.mubr.f32.mxu0 0.0
        %2519 = vmatmul.mubr.f32.gmra.mxu0 %v1646
        %v2520 = vpop.f32.mrf.mxu0
        %v2521 = vadd.f32 0.0, %v2520
        %v2522 = vpop.f32.mrf.mxu0
        %2523 = vmatprep.mubr.f32.mxu0 0.0
        %2524 = vmatmul.mubr.f32.gmra.mxu0 %v1649
        %v2525 = vpop.f32.mrf.mxu0
        %v2526 = vadd.f32 0.0, %v2525
        %v2527 = vpop.f32.mrf.mxu0
        %2528 = vmatprep.mubr.f32.mxu0 0.0
        %2529 = vmatmul.mubr.f32.gmra.mxu0 %v2079
        %v2530 = vpop.f32.mrf.mxu0
        %v2531 = vadd.f32 0.0, %v2530
        %v2532 = vpop.f32.mrf.mxu0
        %2533 = vmatprep.mubr.f32.mxu0 0.0
        %2534 = vmatmul.mubr.f32.gmra.mxu0 %v2432
        %v2535 = vpop.f32.mrf.mxu0
        %v2536 = vadd.f32 0.0, %v2535
        %v2537 = vpop.f32.mrf.mxu0
        %2538 = vdwg.mxu0
        %v2539 = vadd.f32 %v2423, %v2501
        %v2540 = vadd.f32 %v2424, %v2506
        %v2541 = vadd.f32 %v2425, %v2511
        %v2542 = vadd.f32 %v2426, %v2516
        %v2543 = vadd.f32 %v2427, %v2521
        %v2544 = vadd.f32 %v2428, %v2526
        %v2545 = vadd.f32 %v2429, %v2531
        %v2546 = vadd.f32 %v2430, %v2536
        %v2548 = vrot.slane %v1625, 1
        %v2549 = vrot.slane %v1626, 1
        %v2550 = vsel %vm479, %v2548, %v2549
        %v2551 = vsel %vm504, %v2550, 0
        %2553 = vmatprep.subr.mxu0 0.0
        %2554 = vmatpush1.msra.mxu0 0.0
        %2555 = vmatprep.subr.mxu0 0.0
        %2556 = vmatpush1.msra.mxu0 0.0
        %2557 = vmatprep.subr.mxu0 0.0
        %2558 = vmatpush1.msra.mxu0 0.0
        %2559 = vmatprep.subr.mxu0 0.0
        %2560 = vmatpush1.msra.mxu0 0.0
        %2561 = vmatprep.subr.mxu0 0.0
        %2562 = vmatpush1.msra.mxu0 0.0
        %2563 = vmatprep.subr.mxu0 0.0
        %2564 = vmatpush1.msra.mxu0 0.0
        %2565 = vmatprep.subr.mxu0 0.0
        %2566 = vmatpush1.msra.mxu0 0.0
        %2567 = vmatprep.subr.mxu0 0.0
        %2568 = vmatpush1.msra.mxu0 0.0
        %2569 = vmatprep.subr.mxu0 0.0
        %2570 = vmatpush1.msra.mxu0 0.0
        %2571 = vmatprep.subr.mxu0 0.0
        %2572 = vmatpush1.msra.mxu0 0.0
        %2573 = vmatprep.subr.mxu0 0.0
        %2574 = vmatpush1.msra.mxu0 0.0
        %2575 = vmatprep.subr.mxu0 0.0
        %2576 = vmatpush1.msra.mxu0 0.0
        %2577 = vmatprep.subr.mxu0 0.0
        %2578 = vmatpush1.msra.mxu0 0.0
        %2579 = vmatprep.subr.mxu0 0.0
        %2580 = vmatpush1.msra.mxu0 0.0
        %2581 = vmatprep.subr.mxu0 0.0
        %2582 = vmatpush1.msra.mxu0 0.0
        %2583 = vmatprep.subr.mxu0 0.0
        %2584 = vmatpush1.msra.mxu0 %v432
        %2585 = vmatprep.subr.mxu0 0.0
        %2586 = vmatpush2.msra.mxu0 0.0
        %2587 = vmatprep.subr.mxu0 0.0
        %2588 = vmatpush2.msra.mxu0 0.0
        %2589 = vmatprep.subr.mxu0 0.0
        %2590 = vmatpush2.msra.mxu0 0.0
        %2591 = vmatprep.subr.mxu0 0.0
        %2592 = vmatpush2.msra.mxu0 0.0
        %2593 = vmatprep.subr.mxu0 0.0
        %2594 = vmatpush2.msra.mxu0 0.0
        %2595 = vmatprep.subr.mxu0 0.0
        %2596 = vmatpush2.msra.mxu0 0.0
        %2597 = vmatprep.subr.mxu0 0.0
        %2598 = vmatpush2.msra.mxu0 0.0
        %2599 = vmatprep.subr.mxu0 0.0
        %2600 = vmatpush2.msra.mxu0 0.0
        %2601 = vmatprep.subr.mxu0 0.0
        %2602 = vmatpush2.msra.mxu0 0.0
        %2603 = vmatprep.subr.mxu0 0.0
        %2604 = vmatpush2.msra.mxu0 0.0
        %2605 = vmatprep.subr.mxu0 0.0
        %2606 = vmatpush2.msra.mxu0 0.0
        %2607 = vmatprep.subr.mxu0 0.0
        %2608 = vmatpush2.msra.mxu0 0.0
        %2609 = vmatprep.subr.mxu0 0.0
        %2610 = vmatpush2.msra.mxu0 0.0
        %2611 = vmatprep.subr.mxu0 0.0
        %2612 = vmatpush2.msra.mxu0 0.0
        %2613 = vmatprep.subr.mxu0 0.0
        %2614 = vmatpush2.msra.mxu0 0.0
        %2615 = vmatprep.subr.mxu0 0.0
        %2616 = vmatpush2.msra.mxu0 0.0
        %2617 = vmatprep.mubr.f32.mxu0 0.0
        %2618 = vmatmul.mubr.f32.gmra.mxu0 %v1800
        %v2619 = vpop.f32.mrf.mxu0
        %v2620 = vadd.f32 0.0, %v2619
        %v2621 = vpop.f32.mrf.mxu0
        %2622 = vmatprep.mubr.f32.mxu0 0.0
        %2623 = vmatmul.mubr.f32.gmra.mxu0 %v1802
        %v2624 = vpop.f32.mrf.mxu0
        %v2625 = vadd.f32 0.0, %v2624
        %v2626 = vpop.f32.mrf.mxu0
        %2627 = vmatprep.mubr.f32.mxu0 0.0
        %2628 = vmatmul.mubr.f32.gmra.mxu0 %v1804
        %v2629 = vpop.f32.mrf.mxu0
        %v2630 = vadd.f32 0.0, %v2629
        %v2631 = vpop.f32.mrf.mxu0
        %2632 = vmatprep.mubr.f32.mxu0 0.0
        %2633 = vmatmul.mubr.f32.gmra.mxu0 %v1806
        %v2634 = vpop.f32.mrf.mxu0
        %v2635 = vadd.f32 0.0, %v2634
        %v2636 = vpop.f32.mrf.mxu0
        %2637 = vmatprep.mubr.f32.mxu0 0.0
        %2638 = vmatmul.mubr.f32.gmra.mxu0 %v1808
        %v2639 = vpop.f32.mrf.mxu0
        %v2640 = vadd.f32 0.0, %v2639
        %v2641 = vpop.f32.mrf.mxu0
        %2642 = vmatprep.mubr.f32.mxu0 0.0
        %2643 = vmatmul.mubr.f32.gmra.mxu0 %v1810
        %v2644 = vpop.f32.mrf.mxu0
        %v2645 = vadd.f32 0.0, %v2644
        %v2646 = vpop.f32.mrf.mxu0
        %2647 = vmatprep.mubr.f32.mxu0 0.0
        %2648 = vmatmul.mubr.f32.gmra.mxu0 %v2198
        %v2649 = vpop.f32.mrf.mxu0
        %v2650 = vadd.f32 0.0, %v2649
        %v2651 = vpop.f32.mrf.mxu0
        %2652 = vmatprep.mubr.f32.mxu0 0.0
        %2653 = vmatmul.mubr.f32.gmra.mxu0 %v2551
        %v2654 = vpop.f32.mrf.mxu0
        %v2655 = vadd.f32 0.0, %v2654
        %v2656 = vpop.f32.mrf.mxu0
        %2657 = vdwg.mxu0
        %v2658 = vadd.f32 %v2539, %v2620
        %v2659 = vadd.f32 %v2540, %v2625
        %v2660 = vadd.f32 %v2541, %v2630
        %v2661 = vadd.f32 %v2542, %v2635
        %v2662 = vadd.f32 %v2543, %v2640
        %v2663 = vadd.f32 %v2544, %v2645
        %v2664 = vadd.f32 %v2545, %v2650
        %v2665 = vadd.f32 %v2546, %v2655
        %v2666 = vrot.slane %v1625, 2
        %v2667 = vrot.slane %v1626, 2
        %v2668 = vsel %vm747, %v2666, %v2667
        %v2669 = vsel %vm504, %v2668, 0
        %2671 = vmatprep.subr.mxu0 0.0
        %2672 = vmatpush1.msra.mxu0 0.0
        %2673 = vmatprep.subr.mxu0 0.0
        %2674 = vmatpush1.msra.mxu0 0.0
        %2675 = vmatprep.subr.mxu0 0.0
        %2676 = vmatpush1.msra.mxu0 0.0
        %2677 = vmatprep.subr.mxu0 0.0
        %2678 = vmatpush1.msra.mxu0 0.0
        %2679 = vmatprep.subr.mxu0 0.0
        %2680 = vmatpush1.msra.mxu0 0.0
        %2681 = vmatprep.subr.mxu0 0.0
        %2682 = vmatpush1.msra.mxu0 0.0
        %2683 = vmatprep.subr.mxu0 0.0
        %2684 = vmatpush1.msra.mxu0 0.0
        %2685 = vmatprep.subr.mxu0 0.0
        %2686 = vmatpush1.msra.mxu0 0.0
        %2687 = vmatprep.subr.mxu0 0.0
        %2688 = vmatpush1.msra.mxu0 0.0
        %2689 = vmatprep.subr.mxu0 0.0
        %2690 = vmatpush1.msra.mxu0 0.0
        %2691 = vmatprep.subr.mxu0 0.0
        %2692 = vmatpush1.msra.mxu0 0.0
        %2693 = vmatprep.subr.mxu0 0.0
        %2694 = vmatpush1.msra.mxu0 0.0
        %2695 = vmatprep.subr.mxu0 0.0
        %2696 = vmatpush1.msra.mxu0 0.0
        %2697 = vmatprep.subr.mxu0 0.0
        %2698 = vmatpush1.msra.mxu0 0.0
        %2699 = vmatprep.subr.mxu0 0.0
        %2700 = vmatpush1.msra.mxu0 0.0
        %2701 = vmatprep.subr.mxu0 0.0
        %2702 = vmatpush1.msra.mxu0 %v433
        %2703 = vmatprep.subr.mxu0 0.0
        %2704 = vmatpush2.msra.mxu0 0.0
        %2705 = vmatprep.subr.mxu0 0.0
        %2706 = vmatpush2.msra.mxu0 0.0
        %2707 = vmatprep.subr.mxu0 0.0
        %2708 = vmatpush2.msra.mxu0 0.0
        %2709 = vmatprep.subr.mxu0 0.0
        %2710 = vmatpush2.msra.mxu0 0.0
        %2711 = vmatprep.subr.mxu0 0.0
        %2712 = vmatpush2.msra.mxu0 0.0
        %2713 = vmatprep.subr.mxu0 0.0
        %2714 = vmatpush2.msra.mxu0 0.0
        %2715 = vmatprep.subr.mxu0 0.0
        %2716 = vmatpush2.msra.mxu0 0.0
        %2717 = vmatprep.subr.mxu0 0.0
        %2718 = vmatpush2.msra.mxu0 0.0
        %2719 = vmatprep.subr.mxu0 0.0
        %2720 = vmatpush2.msra.mxu0 0.0
        %2721 = vmatprep.subr.mxu0 0.0
        %2722 = vmatpush2.msra.mxu0 0.0
        %2723 = vmatprep.subr.mxu0 0.0
        %2724 = vmatpush2.msra.mxu0 0.0
        %2725 = vmatprep.subr.mxu0 0.0
        %2726 = vmatpush2.msra.mxu0 0.0
        %2727 = vmatprep.subr.mxu0 0.0
        %2728 = vmatpush2.msra.mxu0 0.0
        %2729 = vmatprep.subr.mxu0 0.0
        %2730 = vmatpush2.msra.mxu0 0.0
        %2731 = vmatprep.subr.mxu0 0.0
        %2732 = vmatpush2.msra.mxu0 0.0
        %2733 = vmatprep.subr.mxu0 0.0
        %2734 = vmatpush2.msra.mxu0 0.0
        %2735 = vmatprep.mubr.f32.mxu0 0.0
        %2736 = vmatmul.mubr.f32.gmra.mxu0 %v1953
        %v2737 = vpop.f32.mrf.mxu0
        %v2738 = vadd.f32 0.0, %v2737
        %v2739 = vpop.f32.mrf.mxu0
        %2740 = vmatprep.mubr.f32.mxu0 0.0
        %2741 = vmatmul.mubr.f32.gmra.mxu0 %v1955
        %v2742 = vpop.f32.mrf.mxu0
        %v2743 = vadd.f32 0.0, %v2742
        %v2744 = vpop.f32.mrf.mxu0
        %2745 = vmatprep.mubr.f32.mxu0 0.0
        %2746 = vmatmul.mubr.f32.gmra.mxu0 %v1957
        %v2747 = vpop.f32.mrf.mxu0
        %v2748 = vadd.f32 0.0, %v2747
        %v2749 = vpop.f32.mrf.mxu0
        %2750 = vmatprep.mubr.f32.mxu0 0.0
        %2751 = vmatmul.mubr.f32.gmra.mxu0 %v1959
        %v2752 = vpop.f32.mrf.mxu0
        %v2753 = vadd.f32 0.0, %v2752
        %v2754 = vpop.f32.mrf.mxu0
        %2755 = vmatprep.mubr.f32.mxu0 0.0
        %2756 = vmatmul.mubr.f32.gmra.mxu0 %v1961
        %v2757 = vpop.f32.mrf.mxu0
        %v2758 = vadd.f32 0.0, %v2757
        %v2759 = vpop.f32.mrf.mxu0
        %2760 = vmatprep.mubr.f32.mxu0 0.0
        %2761 = vmatmul.mubr.f32.gmra.mxu0 %v1963
        %v2762 = vpop.f32.mrf.mxu0
        %v2763 = vadd.f32 0.0, %v2762
        %v2764 = vpop.f32.mrf.mxu0
        %2765 = vmatprep.mubr.f32.mxu0 0.0
        %2766 = vmatmul.mubr.f32.gmra.mxu0 %v2316
        %v2767 = vpop.f32.mrf.mxu0
        %v2768 = vadd.f32 0.0, %v2767
        %v2769 = vpop.f32.mrf.mxu0
        %2770 = vmatprep.mubr.f32.mxu0 0.0
        %2771 = vmatmul.mubr.f32.gmra.mxu0 %v2669
        %v2772 = vpop.f32.mrf.mxu0
        %v2773 = vadd.f32 0.0, %v2772
        %v2774 = vpop.f32.mrf.mxu0
        %2775 = vdwg.mxu0
        %v2776 = vadd.f32 %v2658, %v2738
        %v2777 = vadd.f32 %v2659, %v2743
        %v2778 = vadd.f32 %v2660, %v2748
        %v2779 = vadd.f32 %v2661, %v2753
        %v2780 = vadd.f32 %v2662, %v2758
        %v2781 = vadd.f32 %v2663, %v2763
        %v2782 = vadd.f32 %v2664, %v2768
        %v2783 = vadd.f32 %v2665, %v2773
        %v2784 = vld [vmem:[%s405] sm:$0xff]
        %v2785 = vld [vmem:[%s405 + $0x8] sm:$0x3]
        %v2786 = vld [vmem:[%s405 + $0x10] sm:$0xff]
        %v2787 = vld [vmem:[%s405 + $0x18] sm:$0x3]
        %v2788 = vld [vmem:[%s405 + $0x20] sm:$0xff]
        %v2789 = vld [vmem:[%s405 + $0x28] sm:$0x3]
        %v2790 = vld [vmem:[%s405 + $0x30] sm:$0xff]
        %v2791 = vld [vmem:[%s405 + $0x38] sm:$0x3]
        %v2792 = vld [vmem:[%s405 + $0x40] sm:$0xff]
        %v2793 = vld [vmem:[%s405 + $0x48] sm:$0x3]
        %v2794 = vld [vmem:[%s405 + $0x50] sm:$0xff]
        %v2795 = vld [vmem:[%s405 + $0x58] sm:$0x3]
        %v2796 = vld [vmem:[%s405 + $0x60] sm:$0xff]
        %v2797 = vld [vmem:[%s405 + $0x68] sm:$0x3]
        %v2798 = vld [vmem:[%s405 + $0x70] sm:$0xff]
        %v2799 = vld [vmem:[%s405 + $0x78] sm:$0x3]
        %v2800 = vld [vmem:[%s405 + $0x80] sm:$0xff]
        %v2801 = vld [vmem:[%s405 + $0x88] sm:$0x3]
        %v2802 = vld [vmem:[%s405 + $0x90] sm:$0xff]
        %v2803 = vld [vmem:[%s405 + $0x98] sm:$0x3]
        %v2805 = vsel %vm504, %v2784, 0
        %v2808 = vsel %vm504, %v2786, 0
        %v2811 = vsel %vm504, %v2788, 0
        %v2814 = vsel %vm504, %v2790, 0
        %v2817 = vsel %vm504, %v2792, 0
        %v2820 = vsel %vm504, %v2794, 0
        %v2823 = vsel %vm504, %v2796, 0
        %v2826 = vsel %vm504, %v2798, 0
        %2828 = vmatprep.subr.mxu0 0.0
        %2829 = vmatpush1.msra.mxu0 0.0
        %2830 = vmatprep.subr.mxu0 0.0
        %2831 = vmatpush1.msra.mxu0 0.0
        %2832 = vmatprep.subr.mxu0 0.0
        %2833 = vmatpush1.msra.mxu0 0.0
        %2834 = vmatprep.subr.mxu0 0.0
        %2835 = vmatpush1.msra.mxu0 0.0
        %2836 = vmatprep.subr.mxu0 0.0
        %2837 = vmatpush1.msra.mxu0 0.0
        %2838 = vmatprep.subr.mxu0 0.0
        %2839 = vmatpush1.msra.mxu0 0.0
        %2840 = vmatprep.subr.mxu0 0.0
        %2841 = vmatpush1.msra.mxu0 0.0
        %2842 = vmatprep.subr.mxu0 0.0
        %2843 = vmatpush1.msra.mxu0 0.0
        %2844 = vmatprep.subr.mxu0 0.0
        %2845 = vmatpush1.msra.mxu0 0.0
        %2846 = vmatprep.subr.mxu0 0.0
        %2847 = vmatpush1.msra.mxu0 0.0
        %2848 = vmatprep.subr.mxu0 0.0
        %2849 = vmatpush1.msra.mxu0 0.0
        %2850 = vmatprep.subr.mxu0 0.0
        %2851 = vmatpush1.msra.mxu0 0.0
        %2852 = vmatprep.subr.mxu0 0.0
        %2853 = vmatpush1.msra.mxu0 0.0
        %2854 = vmatprep.subr.mxu0 0.0
        %2855 = vmatpush1.msra.mxu0 0.0
        %2856 = vmatprep.subr.mxu0 0.0
        %2857 = vmatpush1.msra.mxu0 0.0
        %2858 = vmatprep.subr.mxu0 0.0
        %2859 = vmatpush1.msra.mxu0 %v434
        %2860 = vmatprep.subr.mxu0 0.0
        %2861 = vmatpush2.msra.mxu0 0.0
        %2862 = vmatprep.subr.mxu0 0.0
        %2863 = vmatpush2.msra.mxu0 0.0
        %2864 = vmatprep.subr.mxu0 0.0
        %2865 = vmatpush2.msra.mxu0 0.0
        %2866 = vmatprep.subr.mxu0 0.0
        %2867 = vmatpush2.msra.mxu0 0.0
        %2868 = vmatprep.subr.mxu0 0.0
        %2869 = vmatpush2.msra.mxu0 0.0
        %2870 = vmatprep.subr.mxu0 0.0
        %2871 = vmatpush2.msra.mxu0 0.0
        %2872 = vmatprep.subr.mxu0 0.0
        %2873 = vmatpush2.msra.mxu0 0.0
        %2874 = vmatprep.subr.mxu0 0.0
        %2875 = vmatpush2.msra.mxu0 0.0
        %2876 = vmatprep.subr.mxu0 0.0
        %2877 = vmatpush2.msra.mxu0 0.0
        %2878 = vmatprep.subr.mxu0 0.0
        %2879 = vmatpush2.msra.mxu0 0.0
        %2880 = vmatprep.subr.mxu0 0.0
        %2881 = vmatpush2.msra.mxu0 0.0
        %2882 = vmatprep.subr.mxu0 0.0
        %2883 = vmatpush2.msra.mxu0 0.0
        %2884 = vmatprep.subr.mxu0 0.0
        %2885 = vmatpush2.msra.mxu0 0.0
        %2886 = vmatprep.subr.mxu0 0.0
        %2887 = vmatpush2.msra.mxu0 0.0
        %2888 = vmatprep.subr.mxu0 0.0
        %2889 = vmatpush2.msra.mxu0 0.0
        %2890 = vmatprep.subr.mxu0 0.0
        %2891 = vmatpush2.msra.mxu0 0.0
        %2892 = vmatprep.mubr.f32.mxu0 0.0
        %2893 = vmatmul.mubr.f32.gmra.mxu0 %v2805
        %v2894 = vpop.f32.mrf.mxu0
        %v2895 = vadd.f32 0.0, %v2894
        %v2896 = vpop.f32.mrf.mxu0
        %2897 = vmatprep.mubr.f32.mxu0 0.0
        %2898 = vmatmul.mubr.f32.gmra.mxu0 %v2808
        %v2899 = vpop.f32.mrf.mxu0
        %v2900 = vadd.f32 0.0, %v2899
        %v2901 = vpop.f32.mrf.mxu0
        %2902 = vmatprep.mubr.f32.mxu0 0.0
        %2903 = vmatmul.mubr.f32.gmra.mxu0 %v2811
        %v2904 = vpop.f32.mrf.mxu0
        %v2905 = vadd.f32 0.0, %v2904
        %v2906 = vpop.f32.mrf.mxu0
        %2907 = vmatprep.mubr.f32.mxu0 0.0
        %2908 = vmatmul.mubr.f32.gmra.mxu0 %v2814
        %v2909 = vpop.f32.mrf.mxu0
        %v2910 = vadd.f32 0.0, %v2909
        %v2911 = vpop.f32.mrf.mxu0
        %2912 = vmatprep.mubr.f32.mxu0 0.0
        %2913 = vmatmul.mubr.f32.gmra.mxu0 %v2817
        %v2914 = vpop.f32.mrf.mxu0
        %v2915 = vadd.f32 0.0, %v2914
        %v2916 = vpop.f32.mrf.mxu0
        %2917 = vmatprep.mubr.f32.mxu0 0.0
        %2918 = vmatmul.mubr.f32.gmra.mxu0 %v2820
        %v2919 = vpop.f32.mrf.mxu0
        %v2920 = vadd.f32 0.0, %v2919
        %v2921 = vpop.f32.mrf.mxu0
        %2922 = vmatprep.mubr.f32.mxu0 0.0
        %2923 = vmatmul.mubr.f32.gmra.mxu0 %v2823
        %v2924 = vpop.f32.mrf.mxu0
        %v2925 = vadd.f32 0.0, %v2924
        %v2926 = vpop.f32.mrf.mxu0
        %2927 = vmatprep.mubr.f32.mxu0 0.0
        %2928 = vmatmul.mubr.f32.gmra.mxu0 %v2826
        %v2929 = vpop.f32.mrf.mxu0
        %v2930 = vadd.f32 0.0, %v2929
        %v2931 = vpop.f32.mrf.mxu0
        %2932 = vdwg.mxu0
        %v2933 = vadd.f32 %v2776, %v2895
        %v2934 = vadd.f32 %v2777, %v2900
        %v2935 = vadd.f32 %v2778, %v2905
        %v2936 = vadd.f32 %v2779, %v2910
        %v2937 = vadd.f32 %v2780, %v2915
        %v2938 = vadd.f32 %v2781, %v2920
        %v2939 = vadd.f32 %v2782, %v2925
        %v2940 = vadd.f32 %v2783, %v2930
        %v2949 = vrot.slane %v2784, 1
        %v2950 = vrot.slane %v2785, 1
        %v2951 = vsel %vm479, %v2949, %v2950
        %v2952 = vrot.slane %v2786, 1
        %v2953 = vrot.slane %v2787, 1
        %v2954 = vsel %vm479, %v2952, %v2953
        %v2955 = vrot.slane %v2788, 1
        %v2956 = vrot.slane %v2789, 1
        %v2957 = vsel %vm479, %v2955, %v2956
        %v2958 = vrot.slane %v2790, 1
        %v2959 = vrot.slane %v2791, 1
        %v2960 = vsel %vm479, %v2958, %v2959
        %v2961 = vrot.slane %v2792, 1
        %v2962 = vrot.slane %v2793, 1
        %v2963 = vsel %vm479, %v2961, %v2962
        %v2964 = vrot.slane %v2794, 1
        %v2965 = vrot.slane %v2795, 1
        %v2966 = vsel %vm479, %v2964, %v2965
        %v2967 = vrot.slane %v2796, 1
        %v2968 = vrot.slane %v2797, 1
        %v2969 = vsel %vm479, %v2967, %v2968
        %v2970 = vrot.slane %v2798, 1
        %v2971 = vrot.slane %v2799, 1
        %v2972 = vsel %vm479, %v2970, %v2971
        %v2973 = vsel %vm504, %v2951, 0
        %v2975 = vsel %vm504, %v2954, 0
        %v2977 = vsel %vm504, %v2957, 0
        %v2979 = vsel %vm504, %v2960, 0
        %v2981 = vsel %vm504, %v2963, 0
        %v2983 = vsel %vm504, %v2966, 0
        %v2985 = vsel %vm504, %v2969, 0
        %v2987 = vsel %vm504, %v2972, 0
        %2989 = vmatprep.subr.mxu0 0.0
        %2990 = vmatpush1.msra.mxu0 0.0
        %2991 = vmatprep.subr.mxu0 0.0
        %2992 = vmatpush1.msra.mxu0 0.0
        %2993 = vmatprep.subr.mxu0 0.0
        %2994 = vmatpush1.msra.mxu0 0.0
        %2995 = vmatprep.subr.mxu0 0.0
        %2996 = vmatpush1.msra.mxu0 0.0
        %2997 = vmatprep.subr.mxu0 0.0
        %2998 = vmatpush1.msra.mxu0 0.0
        %2999 = vmatprep.subr.mxu0 0.0
        %3000 = vmatpush1.msra.mxu0 0.0
        %3001 = vmatprep.subr.mxu0 0.0
        %3002 = vmatpush1.msra.mxu0 0.0
        %3003 = vmatprep.subr.mxu0 0.0
        %3004 = vmatpush1.msra.mxu0 0.0
        %3005 = vmatprep.subr.mxu0 0.0
        %3006 = vmatpush1.msra.mxu0 0.0
        %3007 = vmatprep.subr.mxu0 0.0
        %3008 = vmatpush1.msra.mxu0 0.0
        %3009 = vmatprep.subr.mxu0 0.0
        %3010 = vmatpush1.msra.mxu0 0.0
        %3011 = vmatprep.subr.mxu0 0.0
        %3012 = vmatpush1.msra.mxu0 0.0
        %3013 = vmatprep.subr.mxu0 0.0
        %3014 = vmatpush1.msra.mxu0 0.0
        %3015 = vmatprep.subr.mxu0 0.0
        %3016 = vmatpush1.msra.mxu0 0.0
        %3017 = vmatprep.subr.mxu0 0.0
        %3018 = vmatpush1.msra.mxu0 0.0
        %3019 = vmatprep.subr.mxu0 0.0
        %3020 = vmatpush1.msra.mxu0 %v435
        %3021 = vmatprep.subr.mxu0 0.0
        %3022 = vmatpush2.msra.mxu0 0.0
        %3023 = vmatprep.subr.mxu0 0.0
        %3024 = vmatpush2.msra.mxu0 0.0
        %3025 = vmatprep.subr.mxu0 0.0
        %3026 = vmatpush2.msra.mxu0 0.0
        %3027 = vmatprep.subr.mxu0 0.0
        %3028 = vmatpush2.msra.mxu0 0.0
        %3029 = vmatprep.subr.mxu0 0.0
        %3030 = vmatpush2.msra.mxu0 0.0
        %3031 = vmatprep.subr.mxu0 0.0
        %3032 = vmatpush2.msra.mxu0 0.0
        %3033 = vmatprep.subr.mxu0 0.0
        %3034 = vmatpush2.msra.mxu0 0.0
        %3035 = vmatprep.subr.mxu0 0.0
        %3036 = vmatpush2.msra.mxu0 0.0
        %3037 = vmatprep.subr.mxu0 0.0
        %3038 = vmatpush2.msra.mxu0 0.0
        %3039 = vmatprep.subr.mxu0 0.0
        %3040 = vmatpush2.msra.mxu0 0.0
        %3041 = vmatprep.subr.mxu0 0.0
        %3042 = vmatpush2.msra.mxu0 0.0
        %3043 = vmatprep.subr.mxu0 0.0
        %3044 = vmatpush2.msra.mxu0 0.0
        %3045 = vmatprep.subr.mxu0 0.0
        %3046 = vmatpush2.msra.mxu0 0.0
        %3047 = vmatprep.subr.mxu0 0.0
        %3048 = vmatpush2.msra.mxu0 0.0
        %3049 = vmatprep.subr.mxu0 0.0
        %3050 = vmatpush2.msra.mxu0 0.0
        %3051 = vmatprep.subr.mxu0 0.0
        %3052 = vmatpush2.msra.mxu0 0.0
        %3053 = vmatprep.mubr.f32.mxu0 0.0
        %3054 = vmatmul.mubr.f32.gmra.mxu0 %v2973
        %v3055 = vpop.f32.mrf.mxu0
        %v3056 = vadd.f32 0.0, %v3055
        %v3057 = vpop.f32.mrf.mxu0
        %3058 = vmatprep.mubr.f32.mxu0 0.0
        %3059 = vmatmul.mubr.f32.gmra.mxu0 %v2975
        %v3060 = vpop.f32.mrf.mxu0
        %v3061 = vadd.f32 0.0, %v3060
        %v3062 = vpop.f32.mrf.mxu0
        %3063 = vmatprep.mubr.f32.mxu0 0.0
        %3064 = vmatmul.mubr.f32.gmra.mxu0 %v2977
        %v3065 = vpop.f32.mrf.mxu0
        %v3066 = vadd.f32 0.0, %v3065
        %v3067 = vpop.f32.mrf.mxu0
        %3068 = vmatprep.mubr.f32.mxu0 0.0
        %3069 = vmatmul.mubr.f32.gmra.mxu0 %v2979
        %v3070 = vpop.f32.mrf.mxu0
        %v3071 = vadd.f32 0.0, %v3070
        %v3072 = vpop.f32.mrf.mxu0
        %3073 = vmatprep.mubr.f32.mxu0 0.0
        %3074 = vmatmul.mubr.f32.gmra.mxu0 %v2981
        %v3075 = vpop.f32.mrf.mxu0
        %v3076 = vadd.f32 0.0, %v3075
        %v3077 = vpop.f32.mrf.mxu0
        %3078 = vmatprep.mubr.f32.mxu0 0.0
        %3079 = vmatmul.mubr.f32.gmra.mxu0 %v2983
        %v3080 = vpop.f32.mrf.mxu0
        %v3081 = vadd.f32 0.0, %v3080
        %v3082 = vpop.f32.mrf.mxu0
        %3083 = vmatprep.mubr.f32.mxu0 0.0
        %3084 = vmatmul.mubr.f32.gmra.mxu0 %v2985
        %v3085 = vpop.f32.mrf.mxu0
        %v3086 = vadd.f32 0.0, %v3085
        %v3087 = vpop.f32.mrf.mxu0
        %3088 = vmatprep.mubr.f32.mxu0 0.0
        %3089 = vmatmul.mubr.f32.gmra.mxu0 %v2987
        %v3090 = vpop.f32.mrf.mxu0
        %v3091 = vadd.f32 0.0, %v3090
        %v3092 = vpop.f32.mrf.mxu0
        %3093 = vdwg.mxu0
        %v3094 = vadd.f32 %v2933, %v3056
        %v3095 = vadd.f32 %v2934, %v3061
        %v3096 = vadd.f32 %v2935, %v3066
        %v3097 = vadd.f32 %v2936, %v3071
        %v3098 = vadd.f32 %v2937, %v3076
        %v3099 = vadd.f32 %v2938, %v3081
        %v3100 = vadd.f32 %v2939, %v3086
        %v3101 = vadd.f32 %v2940, %v3091
        %v3102 = vrot.slane %v2784, 2
        %v3103 = vrot.slane %v2785, 2
        %v3104 = vsel %vm747, %v3102, %v3103
        %v3105 = vrot.slane %v2786, 2
        %v3106 = vrot.slane %v2787, 2
        %v3107 = vsel %vm747, %v3105, %v3106
        %v3108 = vrot.slane %v2788, 2
        %v3109 = vrot.slane %v2789, 2
        %v3110 = vsel %vm747, %v3108, %v3109
        %v3111 = vrot.slane %v2790, 2
        %v3112 = vrot.slane %v2791, 2
        %v3113 = vsel %vm747, %v3111, %v3112
        %v3114 = vrot.slane %v2792, 2
        %v3115 = vrot.slane %v2793, 2
        %v3116 = vsel %vm747, %v3114, %v3115
        %v3117 = vrot.slane %v2794, 2
        %v3118 = vrot.slane %v2795, 2
        %v3119 = vsel %vm747, %v3117, %v3118
        %v3120 = vrot.slane %v2796, 2
        %v3121 = vrot.slane %v2797, 2
        %v3122 = vsel %vm747, %v3120, %v3121
        %v3123 = vrot.slane %v2798, 2
        %v3124 = vrot.slane %v2799, 2
        %v3125 = vsel %vm747, %v3123, %v3124
        %v3126 = vsel %vm504, %v3104, 0
        %v3128 = vsel %vm504, %v3107, 0
        %v3130 = vsel %vm504, %v3110, 0
        %v3132 = vsel %vm504, %v3113, 0
        %v3134 = vsel %vm504, %v3116, 0
        %v3136 = vsel %vm504, %v3119, 0
        %v3138 = vsel %vm504, %v3122, 0
        %v3140 = vsel %vm504, %v3125, 0
        %3142 = vmatprep.subr.mxu0 0.0
        %3143 = vmatpush1.msra.mxu0 0.0
        %3144 = vmatprep.subr.mxu0 0.0
        %3145 = vmatpush1.msra.mxu0 0.0
        %3146 = vmatprep.subr.mxu0 0.0
        %3147 = vmatpush1.msra.mxu0 0.0
        %3148 = vmatprep.subr.mxu0 0.0
        %3149 = vmatpush1.msra.mxu0 0.0
        %3150 = vmatprep.subr.mxu0 0.0
        %3151 = vmatpush1.msra.mxu0 0.0
        %3152 = vmatprep.subr.mxu0 0.0
        %3153 = vmatpush1.msra.mxu0 0.0
        %3154 = vmatprep.subr.mxu0 0.0
        %3155 = vmatpush1.msra.mxu0 0.0
        %3156 = vmatprep.subr.mxu0 0.0
        %3157 = vmatpush1.msra.mxu0 0.0
        %3158 = vmatprep.subr.mxu0 0.0
        %3159 = vmatpush1.msra.mxu0 0.0
        %3160 = vmatprep.subr.mxu0 0.0
        %3161 = vmatpush1.msra.mxu0 0.0
        %3162 = vmatprep.subr.mxu0 0.0
        %3163 = vmatpush1.msra.mxu0 0.0
        %3164 = vmatprep.subr.mxu0 0.0
        %3165 = vmatpush1.msra.mxu0 0.0
        %3166 = vmatprep.subr.mxu0 0.0
        %3167 = vmatpush1.msra.mxu0 0.0
        %3168 = vmatprep.subr.mxu0 0.0
        %3169 = vmatpush1.msra.mxu0 0.0
        %3170 = vmatprep.subr.mxu0 0.0
        %3171 = vmatpush1.msra.mxu0 0.0
        %3172 = vmatprep.subr.mxu0 0.0
        %3173 = vmatpush1.msra.mxu0 %v436
        %3174 = vmatprep.subr.mxu0 0.0
        %3175 = vmatpush2.msra.mxu0 0.0
        %3176 = vmatprep.subr.mxu0 0.0
        %3177 = vmatpush2.msra.mxu0 0.0
        %3178 = vmatprep.subr.mxu0 0.0
        %3179 = vmatpush2.msra.mxu0 0.0
        %3180 = vmatprep.subr.mxu0 0.0
        %3181 = vmatpush2.msra.mxu0 0.0
        %3182 = vmatprep.subr.mxu0 0.0
        %3183 = vmatpush2.msra.mxu0 0.0
        %3184 = vmatprep.subr.mxu0 0.0
        %3185 = vmatpush2.msra.mxu0 0.0
        %3186 = vmatprep.subr.mxu0 0.0
        %3187 = vmatpush2.msra.mxu0 0.0
        %3188 = vmatprep.subr.mxu0 0.0
        %3189 = vmatpush2.msra.mxu0 0.0
        %3190 = vmatprep.subr.mxu0 0.0
        %3191 = vmatpush2.msra.mxu0 0.0
        %3192 = vmatprep.subr.mxu0 0.0
        %3193 = vmatpush2.msra.mxu0 0.0
        %3194 = vmatprep.subr.mxu0 0.0
        %3195 = vmatpush2.msra.mxu0 0.0
        %3196 = vmatprep.subr.mxu0 0.0
        %3197 = vmatpush2.msra.mxu0 0.0
        %3198 = vmatprep.subr.mxu0 0.0
        %3199 = vmatpush2.msra.mxu0 0.0
        %3200 = vmatprep.subr.mxu0 0.0
        %3201 = vmatpush2.msra.mxu0 0.0
        %3202 = vmatprep.subr.mxu0 0.0
        %3203 = vmatpush2.msra.mxu0 0.0
        %3204 = vmatprep.subr.mxu0 0.0
        %3205 = vmatpush2.msra.mxu0 0.0
        %3206 = vmatprep.mubr.f32.mxu0 0.0
        %3207 = vmatmul.mubr.f32.gmra.mxu0 %v3126
        %v3208 = vpop.f32.mrf.mxu0
        %v3209 = vadd.f32 0.0, %v3208
        %v3210 = vpop.f32.mrf.mxu0
        %3211 = vmatprep.mubr.f32.mxu0 0.0
        %3212 = vmatmul.mubr.f32.gmra.mxu0 %v3128
        %v3213 = vpop.f32.mrf.mxu0
        %v3214 = vadd.f32 0.0, %v3213
        %v3215 = vpop.f32.mrf.mxu0
        %3216 = vmatprep.mubr.f32.mxu0 0.0
        %3217 = vmatmul.mubr.f32.gmra.mxu0 %v3130
        %v3218 = vpop.f32.mrf.mxu0
        %v3219 = vadd.f32 0.0, %v3218
        %v3220 = vpop.f32.mrf.mxu0
        %3221 = vmatprep.mubr.f32.mxu0 0.0
        %3222 = vmatmul.mubr.f32.gmra.mxu0 %v3132
        %v3223 = vpop.f32.mrf.mxu0
        %v3224 = vadd.f32 0.0, %v3223
        %v3225 = vpop.f32.mrf.mxu0
        %3226 = vmatprep.mubr.f32.mxu0 0.0
        %3227 = vmatmul.mubr.f32.gmra.mxu0 %v3134
        %v3228 = vpop.f32.mrf.mxu0
        %v3229 = vadd.f32 0.0, %v3228
        %v3230 = vpop.f32.mrf.mxu0
        %3231 = vmatprep.mubr.f32.mxu0 0.0
        %3232 = vmatmul.mubr.f32.gmra.mxu0 %v3136
        %v3233 = vpop.f32.mrf.mxu0
        %v3234 = vadd.f32 0.0, %v3233
        %v3235 = vpop.f32.mrf.mxu0
        %3236 = vmatprep.mubr.f32.mxu0 0.0
        %3237 = vmatmul.mubr.f32.gmra.mxu0 %v3138
        %v3238 = vpop.f32.mrf.mxu0
        %v3239 = vadd.f32 0.0, %v3238
        %v3240 = vpop.f32.mrf.mxu0
        %3241 = vmatprep.mubr.f32.mxu0 0.0
        %3242 = vmatmul.mubr.f32.gmra.mxu0 %v3140
        %v3243 = vpop.f32.mrf.mxu0
        %v3244 = vadd.f32 0.0, %v3243
        %v3245 = vpop.f32.mrf.mxu0
        %3246 = vdwg.mxu0
        %v3247 = vadd.f32 %v3094, %v3209
        %v3248 = vadd.f32 %v3095, %v3214
        %v3249 = vadd.f32 %v3096, %v3219
        %v3250 = vadd.f32 %v3097, %v3224
        %v3251 = vadd.f32 %v3098, %v3229
        %v3252 = vadd.f32 %v3099, %v3234
        %v3253 = vadd.f32 %v3100, %v3239
        %v3254 = vadd.f32 %v3101, %v3244
        %v3256 = vsel %vm504, %v2800, 0
        %3258 = vmatprep.subr.mxu0 0.0
        %3259 = vmatpush1.msra.mxu0 0.0
        %3260 = vmatprep.subr.mxu0 0.0
        %3261 = vmatpush1.msra.mxu0 0.0
        %3262 = vmatprep.subr.mxu0 0.0
        %3263 = vmatpush1.msra.mxu0 0.0
        %3264 = vmatprep.subr.mxu0 0.0
        %3265 = vmatpush1.msra.mxu0 0.0
        %3266 = vmatprep.subr.mxu0 0.0
        %3267 = vmatpush1.msra.mxu0 0.0
        %3268 = vmatprep.subr.mxu0 0.0
        %3269 = vmatpush1.msra.mxu0 0.0
        %3270 = vmatprep.subr.mxu0 0.0
        %3271 = vmatpush1.msra.mxu0 0.0
        %3272 = vmatprep.subr.mxu0 0.0
        %3273 = vmatpush1.msra.mxu0 0.0
        %3274 = vmatprep.subr.mxu0 0.0
        %3275 = vmatpush1.msra.mxu0 0.0
        %3276 = vmatprep.subr.mxu0 0.0
        %3277 = vmatpush1.msra.mxu0 0.0
        %3278 = vmatprep.subr.mxu0 0.0
        %3279 = vmatpush1.msra.mxu0 0.0
        %3280 = vmatprep.subr.mxu0 0.0
        %3281 = vmatpush1.msra.mxu0 0.0
        %3282 = vmatprep.subr.mxu0 0.0
        %3283 = vmatpush1.msra.mxu0 0.0
        %3284 = vmatprep.subr.mxu0 0.0
        %3285 = vmatpush1.msra.mxu0 0.0
        %3286 = vmatprep.subr.mxu0 0.0
        %3287 = vmatpush1.msra.mxu0 0.0
        %3288 = vmatprep.subr.mxu0 0.0
        %3289 = vmatpush1.msra.mxu0 %v437
        %3290 = vmatprep.subr.mxu0 0.0
        %3291 = vmatpush2.msra.mxu0 0.0
        %3292 = vmatprep.subr.mxu0 0.0
        %3293 = vmatpush2.msra.mxu0 0.0
        %3294 = vmatprep.subr.mxu0 0.0
        %3295 = vmatpush2.msra.mxu0 0.0
        %3296 = vmatprep.subr.mxu0 0.0
        %3297 = vmatpush2.msra.mxu0 0.0
        %3298 = vmatprep.subr.mxu0 0.0
        %3299 = vmatpush2.msra.mxu0 0.0
        %3300 = vmatprep.subr.mxu0 0.0
        %3301 = vmatpush2.msra.mxu0 0.0
        %3302 = vmatprep.subr.mxu0 0.0
        %3303 = vmatpush2.msra.mxu0 0.0
        %3304 = vmatprep.subr.mxu0 0.0
        %3305 = vmatpush2.msra.mxu0 0.0
        %3306 = vmatprep.subr.mxu0 0.0
        %3307 = vmatpush2.msra.mxu0 0.0
        %3308 = vmatprep.subr.mxu0 0.0
        %3309 = vmatpush2.msra.mxu0 0.0
        %3310 = vmatprep.subr.mxu0 0.0
        %3311 = vmatpush2.msra.mxu0 0.0
        %3312 = vmatprep.subr.mxu0 0.0
        %3313 = vmatpush2.msra.mxu0 0.0
        %3314 = vmatprep.subr.mxu0 0.0
        %3315 = vmatpush2.msra.mxu0 0.0
        %3316 = vmatprep.subr.mxu0 0.0
        %3317 = vmatpush2.msra.mxu0 0.0
        %3318 = vmatprep.subr.mxu0 0.0
        %3319 = vmatpush2.msra.mxu0 0.0
        %3320 = vmatprep.subr.mxu0 0.0
        %3321 = vmatpush2.msra.mxu0 0.0
        %3322 = vmatprep.mubr.f32.mxu0 0.0
        %3323 = vmatmul.mubr.f32.gmra.mxu0 %v2808
        %v3324 = vpop.f32.mrf.mxu0
        %v3325 = vadd.f32 0.0, %v3324
        %v3326 = vpop.f32.mrf.mxu0
        %3327 = vmatprep.mubr.f32.mxu0 0.0
        %3328 = vmatmul.mubr.f32.gmra.mxu0 %v2811
        %v3329 = vpop.f32.mrf.mxu0
        %v3330 = vadd.f32 0.0, %v3329
        %v3331 = vpop.f32.mrf.mxu0
        %3332 = vmatprep.mubr.f32.mxu0 0.0
        %3333 = vmatmul.mubr.f32.gmra.mxu0 %v2814
        %v3334 = vpop.f32.mrf.mxu0
        %v3335 = vadd.f32 0.0, %v3334
        %v3336 = vpop.f32.mrf.mxu0
        %3337 = vmatprep.mubr.f32.mxu0 0.0
        %3338 = vmatmul.mubr.f32.gmra.mxu0 %v2817
        %v3339 = vpop.f32.mrf.mxu0
        %v3340 = vadd.f32 0.0, %v3339
        %v3341 = vpop.f32.mrf.mxu0
        %3342 = vmatprep.mubr.f32.mxu0 0.0
        %3343 = vmatmul.mubr.f32.gmra.mxu0 %v2820
        %v3344 = vpop.f32.mrf.mxu0
        %v3345 = vadd.f32 0.0, %v3344
        %v3346 = vpop.f32.mrf.mxu0
        %3347 = vmatprep.mubr.f32.mxu0 0.0
        %3348 = vmatmul.mubr.f32.gmra.mxu0 %v2823
        %v3349 = vpop.f32.mrf.mxu0
        %v3350 = vadd.f32 0.0, %v3349
        %v3351 = vpop.f32.mrf.mxu0
        %3352 = vmatprep.mubr.f32.mxu0 0.0
        %3353 = vmatmul.mubr.f32.gmra.mxu0 %v2826
        %v3354 = vpop.f32.mrf.mxu0
        %v3355 = vadd.f32 0.0, %v3354
        %v3356 = vpop.f32.mrf.mxu0
        %3357 = vmatprep.mubr.f32.mxu0 0.0
        %3358 = vmatmul.mubr.f32.gmra.mxu0 %v3256
        %v3359 = vpop.f32.mrf.mxu0
        %v3360 = vadd.f32 0.0, %v3359
        %v3361 = vpop.f32.mrf.mxu0
        %3362 = vdwg.mxu0
        %v3363 = vadd.f32 %v3247, %v3325
        %v3364 = vadd.f32 %v3248, %v3330
        %v3365 = vadd.f32 %v3249, %v3335
        %v3366 = vadd.f32 %v3250, %v3340
        %v3367 = vadd.f32 %v3251, %v3345
        %v3368 = vadd.f32 %v3252, %v3350
        %v3369 = vadd.f32 %v3253, %v3355
        %v3370 = vadd.f32 %v3254, %v3360
        %v3372 = vrot.slane %v2800, 1
        %v3373 = vrot.slane %v2801, 1
        %v3374 = vsel %vm479, %v3372, %v3373
        %v3375 = vsel %vm504, %v3374, 0
        %3377 = vmatprep.subr.mxu0 0.0
        %3378 = vmatpush1.msra.mxu0 0.0
        %3379 = vmatprep.subr.mxu0 0.0
        %3380 = vmatpush1.msra.mxu0 0.0
        %3381 = vmatprep.subr.mxu0 0.0
        %3382 = vmatpush1.msra.mxu0 0.0
        %3383 = vmatprep.subr.mxu0 0.0
        %3384 = vmatpush1.msra.mxu0 0.0
        %3385 = vmatprep.subr.mxu0 0.0
        %3386 = vmatpush1.msra.mxu0 0.0
        %3387 = vmatprep.subr.mxu0 0.0
        %3388 = vmatpush1.msra.mxu0 0.0
        %3389 = vmatprep.subr.mxu0 0.0
        %3390 = vmatpush1.msra.mxu0 0.0
        %3391 = vmatprep.subr.mxu0 0.0
        %3392 = vmatpush1.msra.mxu0 0.0
        %3393 = vmatprep.subr.mxu0 0.0
        %3394 = vmatpush1.msra.mxu0 0.0
        %3395 = vmatprep.subr.mxu0 0.0
        %3396 = vmatpush1.msra.mxu0 0.0
        %3397 = vmatprep.subr.mxu0 0.0
        %3398 = vmatpush1.msra.mxu0 0.0
        %3399 = vmatprep.subr.mxu0 0.0
        %3400 = vmatpush1.msra.mxu0 0.0
        %3401 = vmatprep.subr.mxu0 0.0
        %3402 = vmatpush1.msra.mxu0 0.0
        %3403 = vmatprep.subr.mxu0 0.0
        %3404 = vmatpush1.msra.mxu0 0.0
        %3405 = vmatprep.subr.mxu0 0.0
        %3406 = vmatpush1.msra.mxu0 0.0
        %3407 = vmatprep.subr.mxu0 0.0
        %3408 = vmatpush1.msra.mxu0 %v438
        %3409 = vmatprep.subr.mxu0 0.0
        %3410 = vmatpush2.msra.mxu0 0.0
        %3411 = vmatprep.subr.mxu0 0.0
        %3412 = vmatpush2.msra.mxu0 0.0
        %3413 = vmatprep.subr.mxu0 0.0
        %3414 = vmatpush2.msra.mxu0 0.0
        %3415 = vmatprep.subr.mxu0 0.0
        %3416 = vmatpush2.msra.mxu0 0.0
        %3417 = vmatprep.subr.mxu0 0.0
        %3418 = vmatpush2.msra.mxu0 0.0
        %3419 = vmatprep.subr.mxu0 0.0
        %3420 = vmatpush2.msra.mxu0 0.0
        %3421 = vmatprep.subr.mxu0 0.0
        %3422 = vmatpush2.msra.mxu0 0.0
        %3423 = vmatprep.subr.mxu0 0.0
        %3424 = vmatpush2.msra.mxu0 0.0
        %3425 = vmatprep.subr.mxu0 0.0
        %3426 = vmatpush2.msra.mxu0 0.0
        %3427 = vmatprep.subr.mxu0 0.0
        %3428 = vmatpush2.msra.mxu0 0.0
        %3429 = vmatprep.subr.mxu0 0.0
        %3430 = vmatpush2.msra.mxu0 0.0
        %3431 = vmatprep.subr.mxu0 0.0
        %3432 = vmatpush2.msra.mxu0 0.0
        %3433 = vmatprep.subr.mxu0 0.0
        %3434 = vmatpush2.msra.mxu0 0.0
        %3435 = vmatprep.subr.mxu0 0.0
        %3436 = vmatpush2.msra.mxu0 0.0
        %3437 = vmatprep.subr.mxu0 0.0
        %3438 = vmatpush2.msra.mxu0 0.0
        %3439 = vmatprep.subr.mxu0 0.0
        %3440 = vmatpush2.msra.mxu0 0.0
        %3441 = vmatprep.mubr.f32.mxu0 0.0
        %3442 = vmatmul.mubr.f32.gmra.mxu0 %v2975
        %v3443 = vpop.f32.mrf.mxu0
        %v3444 = vadd.f32 0.0, %v3443
        %v3445 = vpop.f32.mrf.mxu0
        %3446 = vmatprep.mubr.f32.mxu0 0.0
        %3447 = vmatmul.mubr.f32.gmra.mxu0 %v2977
        %v3448 = vpop.f32.mrf.mxu0
        %v3449 = vadd.f32 0.0, %v3448
        %v3450 = vpop.f32.mrf.mxu0
        %3451 = vmatprep.mubr.f32.mxu0 0.0
        %3452 = vmatmul.mubr.f32.gmra.mxu0 %v2979
        %v3453 = vpop.f32.mrf.mxu0
        %v3454 = vadd.f32 0.0, %v3453
        %v3455 = vpop.f32.mrf.mxu0
        %3456 = vmatprep.mubr.f32.mxu0 0.0
        %3457 = vmatmul.mubr.f32.gmra.mxu0 %v2981
        %v3458 = vpop.f32.mrf.mxu0
        %v3459 = vadd.f32 0.0, %v3458
        %v3460 = vpop.f32.mrf.mxu0
        %3461 = vmatprep.mubr.f32.mxu0 0.0
        %3462 = vmatmul.mubr.f32.gmra.mxu0 %v2983
        %v3463 = vpop.f32.mrf.mxu0
        %v3464 = vadd.f32 0.0, %v3463
        %v3465 = vpop.f32.mrf.mxu0
        %3466 = vmatprep.mubr.f32.mxu0 0.0
        %3467 = vmatmul.mubr.f32.gmra.mxu0 %v2985
        %v3468 = vpop.f32.mrf.mxu0
        %v3469 = vadd.f32 0.0, %v3468
        %v3470 = vpop.f32.mrf.mxu0
        %3471 = vmatprep.mubr.f32.mxu0 0.0
        %3472 = vmatmul.mubr.f32.gmra.mxu0 %v2987
        %v3473 = vpop.f32.mrf.mxu0
        %v3474 = vadd.f32 0.0, %v3473
        %v3475 = vpop.f32.mrf.mxu0
        %3476 = vmatprep.mubr.f32.mxu0 0.0
        %3477 = vmatmul.mubr.f32.gmra.mxu0 %v3375
        %v3478 = vpop.f32.mrf.mxu0
        %v3479 = vadd.f32 0.0, %v3478
        %v3480 = vpop.f32.mrf.mxu0
        %3481 = vdwg.mxu0
        %v3482 = vadd.f32 %v3363, %v3444
        %v3483 = vadd.f32 %v3364, %v3449
        %v3484 = vadd.f32 %v3365, %v3454
        %v3485 = vadd.f32 %v3366, %v3459
        %v3486 = vadd.f32 %v3367, %v3464
        %v3487 = vadd.f32 %v3368, %v3469
        %v3488 = vadd.f32 %v3369, %v3474
        %v3489 = vadd.f32 %v3370, %v3479
        %v3490 = vrot.slane %v2800, 2
        %v3491 = vrot.slane %v2801, 2
        %v3492 = vsel %vm747, %v3490, %v3491
        %v3493 = vsel %vm504, %v3492, 0
        %3495 = vmatprep.subr.mxu0 0.0
        %3496 = vmatpush1.msra.mxu0 0.0
        %3497 = vmatprep.subr.mxu0 0.0
        %3498 = vmatpush1.msra.mxu0 0.0
        %3499 = vmatprep.subr.mxu0 0.0
        %3500 = vmatpush1.msra.mxu0 0.0
        %3501 = vmatprep.subr.mxu0 0.0
        %3502 = vmatpush1.msra.mxu0 0.0
        %3503 = vmatprep.subr.mxu0 0.0
        %3504 = vmatpush1.msra.mxu0 0.0
        %3505 = vmatprep.subr.mxu0 0.0
        %3506 = vmatpush1.msra.mxu0 0.0
        %3507 = vmatprep.subr.mxu0 0.0
        %3508 = vmatpush1.msra.mxu0 0.0
        %3509 = vmatprep.subr.mxu0 0.0
        %3510 = vmatpush1.msra.mxu0 0.0
        %3511 = vmatprep.subr.mxu0 0.0
        %3512 = vmatpush1.msra.mxu0 0.0
        %3513 = vmatprep.subr.mxu0 0.0
        %3514 = vmatpush1.msra.mxu0 0.0
        %3515 = vmatprep.subr.mxu0 0.0
        %3516 = vmatpush1.msra.mxu0 0.0
        %3517 = vmatprep.subr.mxu0 0.0
        %3518 = vmatpush1.msra.mxu0 0.0
        %3519 = vmatprep.subr.mxu0 0.0
        %3520 = vmatpush1.msra.mxu0 0.0
        %3521 = vmatprep.subr.mxu0 0.0
        %3522 = vmatpush1.msra.mxu0 0.0
        %3523 = vmatprep.subr.mxu0 0.0
        %3524 = vmatpush1.msra.mxu0 0.0
        %3525 = vmatprep.subr.mxu0 0.0
        %3526 = vmatpush1.msra.mxu0 %v439
        %3527 = vmatprep.subr.mxu0 0.0
        %3528 = vmatpush2.msra.mxu0 0.0
        %3529 = vmatprep.subr.mxu0 0.0
        %3530 = vmatpush2.msra.mxu0 0.0
        %3531 = vmatprep.subr.mxu0 0.0
        %3532 = vmatpush2.msra.mxu0 0.0
        %3533 = vmatprep.subr.mxu0 0.0
        %3534 = vmatpush2.msra.mxu0 0.0
        %3535 = vmatprep.subr.mxu0 0.0
        %3536 = vmatpush2.msra.mxu0 0.0
        %3537 = vmatprep.subr.mxu0 0.0
        %3538 = vmatpush2.msra.mxu0 0.0
        %3539 = vmatprep.subr.mxu0 0.0
        %3540 = vmatpush2.msra.mxu0 0.0
        %3541 = vmatprep.subr.mxu0 0.0
        %3542 = vmatpush2.msra.mxu0 0.0
        %3543 = vmatprep.subr.mxu0 0.0
        %3544 = vmatpush2.msra.mxu0 0.0
        %3545 = vmatprep.subr.mxu0 0.0
        %3546 = vmatpush2.msra.mxu0 0.0
        %3547 = vmatprep.subr.mxu0 0.0
        %3548 = vmatpush2.msra.mxu0 0.0
        %3549 = vmatprep.subr.mxu0 0.0
        %3550 = vmatpush2.msra.mxu0 0.0
        %3551 = vmatprep.subr.mxu0 0.0
        %3552 = vmatpush2.msra.mxu0 0.0
        %3553 = vmatprep.subr.mxu0 0.0
        %3554 = vmatpush2.msra.mxu0 0.0
        %3555 = vmatprep.subr.mxu0 0.0
        %3556 = vmatpush2.msra.mxu0 0.0
        %3557 = vmatprep.subr.mxu0 0.0
        %3558 = vmatpush2.msra.mxu0 0.0
        %3559 = vmatprep.mubr.f32.mxu0 0.0
        %3560 = vmatmul.mubr.f32.gmra.mxu0 %v3128
        %v3561 = vpop.f32.mrf.mxu0
        %v3562 = vadd.f32 0.0, %v3561
        %v3563 = vpop.f32.mrf.mxu0
        %3564 = vmatprep.mubr.f32.mxu0 0.0
        %3565 = vmatmul.mubr.f32.gmra.mxu0 %v3130
        %v3566 = vpop.f32.mrf.mxu0
        %v3567 = vadd.f32 0.0, %v3566
        %v3568 = vpop.f32.mrf.mxu0
        %3569 = vmatprep.mubr.f32.mxu0 0.0
        %3570 = vmatmul.mubr.f32.gmra.mxu0 %v3132
        %v3571 = vpop.f32.mrf.mxu0
        %v3572 = vadd.f32 0.0, %v3571
        %v3573 = vpop.f32.mrf.mxu0
        %3574 = vmatprep.mubr.f32.mxu0 0.0
        %3575 = vmatmul.mubr.f32.gmra.mxu0 %v3134
        %v3576 = vpop.f32.mrf.mxu0
        %v3577 = vadd.f32 0.0, %v3576
        %v3578 = vpop.f32.mrf.mxu0
        %3579 = vmatprep.mubr.f32.mxu0 0.0
        %3580 = vmatmul.mubr.f32.gmra.mxu0 %v3136
        %v3581 = vpop.f32.mrf.mxu0
        %v3582 = vadd.f32 0.0, %v3581
        %v3583 = vpop.f32.mrf.mxu0
        %3584 = vmatprep.mubr.f32.mxu0 0.0
        %3585 = vmatmul.mubr.f32.gmra.mxu0 %v3138
        %v3586 = vpop.f32.mrf.mxu0
        %v3587 = vadd.f32 0.0, %v3586
        %v3588 = vpop.f32.mrf.mxu0
        %3589 = vmatprep.mubr.f32.mxu0 0.0
        %3590 = vmatmul.mubr.f32.gmra.mxu0 %v3140
        %v3591 = vpop.f32.mrf.mxu0
        %v3592 = vadd.f32 0.0, %v3591
        %v3593 = vpop.f32.mrf.mxu0
        %3594 = vmatprep.mubr.f32.mxu0 0.0
        %3595 = vmatmul.mubr.f32.gmra.mxu0 %v3493
        %v3596 = vpop.f32.mrf.mxu0
        %v3597 = vadd.f32 0.0, %v3596
        %v3598 = vpop.f32.mrf.mxu0
        %3599 = vdwg.mxu0
        %v3600 = vadd.f32 %v3482, %v3562
        %v3601 = vadd.f32 %v3483, %v3567
        %v3602 = vadd.f32 %v3484, %v3572
        %v3603 = vadd.f32 %v3485, %v3577
        %v3604 = vadd.f32 %v3486, %v3582
        %v3605 = vadd.f32 %v3487, %v3587
        %v3606 = vadd.f32 %v3488, %v3592
        %v3607 = vadd.f32 %v3489, %v3597
        %v3609 = vsel %vm504, %v2802, 0
        %3611 = vmatprep.subr.mxu0 0.0
        %3612 = vmatpush1.msra.mxu0 0.0
        %3613 = vmatprep.subr.mxu0 0.0
        %3614 = vmatpush1.msra.mxu0 0.0
        %3615 = vmatprep.subr.mxu0 0.0
        %3616 = vmatpush1.msra.mxu0 0.0
        %3617 = vmatprep.subr.mxu0 0.0
        %3618 = vmatpush1.msra.mxu0 0.0
        %3619 = vmatprep.subr.mxu0 0.0
        %3620 = vmatpush1.msra.mxu0 0.0
        %3621 = vmatprep.subr.mxu0 0.0
        %3622 = vmatpush1.msra.mxu0 0.0
        %3623 = vmatprep.subr.mxu0 0.0
        %3624 = vmatpush1.msra.mxu0 0.0
        %3625 = vmatprep.subr.mxu0 0.0
        %3626 = vmatpush1.msra.mxu0 0.0
        %3627 = vmatprep.subr.mxu0 0.0
        %3628 = vmatpush1.msra.mxu0 0.0
        %3629 = vmatprep.subr.mxu0 0.0
        %3630 = vmatpush1.msra.mxu0 0.0
        %3631 = vmatprep.subr.mxu0 0.0
        %3632 = vmatpush1.msra.mxu0 0.0
        %3633 = vmatprep.subr.mxu0 0.0
        %3634 = vmatpush1.msra.mxu0 0.0
        %3635 = vmatprep.subr.mxu0 0.0
        %3636 = vmatpush1.msra.mxu0 0.0
        %3637 = vmatprep.subr.mxu0 0.0
        %3638 = vmatpush1.msra.mxu0 0.0
        %3639 = vmatprep.subr.mxu0 0.0
        %3640 = vmatpush1.msra.mxu0 0.0
        %3641 = vmatprep.subr.mxu0 0.0
        %3642 = vmatpush1.msra.mxu0 %v440
        %3643 = vmatprep.subr.mxu0 0.0
        %3644 = vmatpush2.msra.mxu0 0.0
        %3645 = vmatprep.subr.mxu0 0.0
        %3646 = vmatpush2.msra.mxu0 0.0
        %3647 = vmatprep.subr.mxu0 0.0
        %3648 = vmatpush2.msra.mxu0 0.0
        %3649 = vmatprep.subr.mxu0 0.0
        %3650 = vmatpush2.msra.mxu0 0.0
        %3651 = vmatprep.subr.mxu0 0.0
        %3652 = vmatpush2.msra.mxu0 0.0
        %3653 = vmatprep.subr.mxu0 0.0
        %3654 = vmatpush2.msra.mxu0 0.0
        %3655 = vmatprep.subr.mxu0 0.0
        %3656 = vmatpush2.msra.mxu0 0.0
        %3657 = vmatprep.subr.mxu0 0.0
        %3658 = vmatpush2.msra.mxu0 0.0
        %3659 = vmatprep.subr.mxu0 0.0
        %3660 = vmatpush2.msra.mxu0 0.0
        %3661 = vmatprep.subr.mxu0 0.0
        %3662 = vmatpush2.msra.mxu0 0.0
        %3663 = vmatprep.subr.mxu0 0.0
        %3664 = vmatpush2.msra.mxu0 0.0
        %3665 = vmatprep.subr.mxu0 0.0
        %3666 = vmatpush2.msra.mxu0 0.0
        %3667 = vmatprep.subr.mxu0 0.0
        %3668 = vmatpush2.msra.mxu0 0.0
        %3669 = vmatprep.subr.mxu0 0.0
        %3670 = vmatpush2.msra.mxu0 0.0
        %3671 = vmatprep.subr.mxu0 0.0
        %3672 = vmatpush2.msra.mxu0 0.0
        %3673 = vmatprep.subr.mxu0 0.0
        %3674 = vmatpush2.msra.mxu0 0.0
        %3675 = vmatprep.mubr.f32.mxu0 0.0
        %3676 = vmatmul.mubr.f32.gmra.mxu0 %v2811
        %v3677 = vpop.f32.mrf.mxu0
        %v3678 = vadd.f32 0.0, %v3677
        %v3679 = vpop.f32.mrf.mxu0
        %3680 = vmatprep.mubr.f32.mxu0 0.0
        %3681 = vmatmul.mubr.f32.gmra.mxu0 %v2814
        %v3682 = vpop.f32.mrf.mxu0
        %v3683 = vadd.f32 0.0, %v3682
        %v3684 = vpop.f32.mrf.mxu0
        %3685 = vmatprep.mubr.f32.mxu0 0.0
        %3686 = vmatmul.mubr.f32.gmra.mxu0 %v2817
        %v3687 = vpop.f32.mrf.mxu0
        %v3688 = vadd.f32 0.0, %v3687
        %v3689 = vpop.f32.mrf.mxu0
        %3690 = vmatprep.mubr.f32.mxu0 0.0
        %3691 = vmatmul.mubr.f32.gmra.mxu0 %v2820
        %v3692 = vpop.f32.mrf.mxu0
        %v3693 = vadd.f32 0.0, %v3692
        %v3694 = vpop.f32.mrf.mxu0
        %3695 = vmatprep.mubr.f32.mxu0 0.0
        %3696 = vmatmul.mubr.f32.gmra.mxu0 %v2823
        %v3697 = vpop.f32.mrf.mxu0
        %v3698 = vadd.f32 0.0, %v3697
        %v3699 = vpop.f32.mrf.mxu0
        %3700 = vmatprep.mubr.f32.mxu0 0.0
        %3701 = vmatmul.mubr.f32.gmra.mxu0 %v2826
        %v3702 = vpop.f32.mrf.mxu0
        %v3703 = vadd.f32 0.0, %v3702
        %v3704 = vpop.f32.mrf.mxu0
        %3705 = vmatprep.mubr.f32.mxu0 0.0
        %3706 = vmatmul.mubr.f32.gmra.mxu0 %v3256
        %v3707 = vpop.f32.mrf.mxu0
        %v3708 = vadd.f32 0.0, %v3707
        %v3709 = vpop.f32.mrf.mxu0
        %3710 = vmatprep.mubr.f32.mxu0 0.0
        %3711 = vmatmul.mubr.f32.gmra.mxu0 %v3609
        %v3712 = vpop.f32.mrf.mxu0
        %v3713 = vadd.f32 0.0, %v3712
        %v3714 = vpop.f32.mrf.mxu0
        %3715 = vdwg.mxu0
        %v3716 = vadd.f32 %v3600, %v3678
        %v3717 = vadd.f32 %v3601, %v3683
        %v3718 = vadd.f32 %v3602, %v3688
        %v3719 = vadd.f32 %v3603, %v3693
        %v3720 = vadd.f32 %v3604, %v3698
        %v3721 = vadd.f32 %v3605, %v3703
        %v3722 = vadd.f32 %v3606, %v3708
        %v3723 = vadd.f32 %v3607, %v3713
        %v3725 = vrot.slane %v2802, 1
        %v3726 = vrot.slane %v2803, 1
        %v3727 = vsel %vm479, %v3725, %v3726
        %v3728 = vsel %vm504, %v3727, 0
        %3730 = vmatprep.subr.mxu0 0.0
        %3731 = vmatpush1.msra.mxu0 0.0
        %3732 = vmatprep.subr.mxu0 0.0
        %3733 = vmatpush1.msra.mxu0 0.0
        %3734 = vmatprep.subr.mxu0 0.0
        %3735 = vmatpush1.msra.mxu0 0.0
        %3736 = vmatprep.subr.mxu0 0.0
        %3737 = vmatpush1.msra.mxu0 0.0
        %3738 = vmatprep.subr.mxu0 0.0
        %3739 = vmatpush1.msra.mxu0 0.0
        %3740 = vmatprep.subr.mxu0 0.0
        %3741 = vmatpush1.msra.mxu0 0.0
        %3742 = vmatprep.subr.mxu0 0.0
        %3743 = vmatpush1.msra.mxu0 0.0
        %3744 = vmatprep.subr.mxu0 0.0
        %3745 = vmatpush1.msra.mxu0 0.0
        %3746 = vmatprep.subr.mxu0 0.0
        %3747 = vmatpush1.msra.mxu0 0.0
        %3748 = vmatprep.subr.mxu0 0.0
        %3749 = vmatpush1.msra.mxu0 0.0
        %3750 = vmatprep.subr.mxu0 0.0
        %3751 = vmatpush1.msra.mxu0 0.0
        %3752 = vmatprep.subr.mxu0 0.0
        %3753 = vmatpush1.msra.mxu0 0.0
        %3754 = vmatprep.subr.mxu0 0.0
        %3755 = vmatpush1.msra.mxu0 0.0
        %3756 = vmatprep.subr.mxu0 0.0
        %3757 = vmatpush1.msra.mxu0 0.0
        %3758 = vmatprep.subr.mxu0 0.0
        %3759 = vmatpush1.msra.mxu0 0.0
        %3760 = vmatprep.subr.mxu0 0.0
        %3761 = vmatpush1.msra.mxu0 %v441
        %3762 = vmatprep.subr.mxu0 0.0
        %3763 = vmatpush2.msra.mxu0 0.0
        %3764 = vmatprep.subr.mxu0 0.0
        %3765 = vmatpush2.msra.mxu0 0.0
        %3766 = vmatprep.subr.mxu0 0.0
        %3767 = vmatpush2.msra.mxu0 0.0
        %3768 = vmatprep.subr.mxu0 0.0
        %3769 = vmatpush2.msra.mxu0 0.0
        %3770 = vmatprep.subr.mxu0 0.0
        %3771 = vmatpush2.msra.mxu0 0.0
        %3772 = vmatprep.subr.mxu0 0.0
        %3773 = vmatpush2.msra.mxu0 0.0
        %3774 = vmatprep.subr.mxu0 0.0
        %3775 = vmatpush2.msra.mxu0 0.0
        %3776 = vmatprep.subr.mxu0 0.0
        %3777 = vmatpush2.msra.mxu0 0.0
        %3778 = vmatprep.subr.mxu0 0.0
        %3779 = vmatpush2.msra.mxu0 0.0
        %3780 = vmatprep.subr.mxu0 0.0
        %3781 = vmatpush2.msra.mxu0 0.0
        %3782 = vmatprep.subr.mxu0 0.0
        %3783 = vmatpush2.msra.mxu0 0.0
        %3784 = vmatprep.subr.mxu0 0.0
        %3785 = vmatpush2.msra.mxu0 0.0
        %3786 = vmatprep.subr.mxu0 0.0
        %3787 = vmatpush2.msra.mxu0 0.0
        %3788 = vmatprep.subr.mxu0 0.0
        %3789 = vmatpush2.msra.mxu0 0.0
        %3790 = vmatprep.subr.mxu0 0.0
        %3791 = vmatpush2.msra.mxu0 0.0
        %3792 = vmatprep.subr.mxu0 0.0
        %3793 = vmatpush2.msra.mxu0 0.0
        %3794 = vmatprep.mubr.f32.mxu0 0.0
        %3795 = vmatmul.mubr.f32.gmra.mxu0 %v2977
        %v3796 = vpop.f32.mrf.mxu0
        %v3797 = vadd.f32 0.0, %v3796
        %v3798 = vpop.f32.mrf.mxu0
        %3799 = vmatprep.mubr.f32.mxu0 0.0
        %3800 = vmatmul.mubr.f32.gmra.mxu0 %v2979
        %v3801 = vpop.f32.mrf.mxu0
        %v3802 = vadd.f32 0.0, %v3801
        %v3803 = vpop.f32.mrf.mxu0
        %3804 = vmatprep.mubr.f32.mxu0 0.0
        %3805 = vmatmul.mubr.f32.gmra.mxu0 %v2981
        %v3806 = vpop.f32.mrf.mxu0
        %v3807 = vadd.f32 0.0, %v3806
        %v3808 = vpop.f32.mrf.mxu0
        %3809 = vmatprep.mubr.f32.mxu0 0.0
        %3810 = vmatmul.mubr.f32.gmra.mxu0 %v2983
        %v3811 = vpop.f32.mrf.mxu0
        %v3812 = vadd.f32 0.0, %v3811
        %v3813 = vpop.f32.mrf.mxu0
        %3814 = vmatprep.mubr.f32.mxu0 0.0
        %3815 = vmatmul.mubr.f32.gmra.mxu0 %v2985
        %v3816 = vpop.f32.mrf.mxu0
        %v3817 = vadd.f32 0.0, %v3816
        %v3818 = vpop.f32.mrf.mxu0
        %3819 = vmatprep.mubr.f32.mxu0 0.0
        %3820 = vmatmul.mubr.f32.gmra.mxu0 %v2987
        %v3821 = vpop.f32.mrf.mxu0
        %v3822 = vadd.f32 0.0, %v3821
        %v3823 = vpop.f32.mrf.mxu0
        %3824 = vmatprep.mubr.f32.mxu0 0.0
        %3825 = vmatmul.mubr.f32.gmra.mxu0 %v3375
        %v3826 = vpop.f32.mrf.mxu0
        %v3827 = vadd.f32 0.0, %v3826
        %v3828 = vpop.f32.mrf.mxu0
        %3829 = vmatprep.mubr.f32.mxu0 0.0
        %3830 = vmatmul.mubr.f32.gmra.mxu0 %v3728
        %v3831 = vpop.f32.mrf.mxu0
        %v3832 = vadd.f32 0.0, %v3831
        %v3833 = vpop.f32.mrf.mxu0
        %3834 = vdwg.mxu0
        %v3835 = vadd.f32 %v3716, %v3797
        %v3836 = vadd.f32 %v3717, %v3802
        %v3837 = vadd.f32 %v3718, %v3807
        %v3838 = vadd.f32 %v3719, %v3812
        %v3839 = vadd.f32 %v3720, %v3817
        %v3840 = vadd.f32 %v3721, %v3822
        %v3841 = vadd.f32 %v3722, %v3827
        %v3842 = vadd.f32 %v3723, %v3832
        %v3843 = vrot.slane %v2802, 2
        %v3844 = vrot.slane %v2803, 2
        %v3845 = vsel %vm747, %v3843, %v3844
        %v3846 = vsel %vm504, %v3845, 0
        %3848 = vmatprep.subr.mxu0 0.0
        %3849 = vmatpush1.msra.mxu0 0.0
        %3850 = vmatprep.subr.mxu0 0.0
        %3851 = vmatpush1.msra.mxu0 0.0
        %3852 = vmatprep.subr.mxu0 0.0
        %3853 = vmatpush1.msra.mxu0 0.0
        %3854 = vmatprep.subr.mxu0 0.0
        %3855 = vmatpush1.msra.mxu0 0.0
        %3856 = vmatprep.subr.mxu0 0.0
        %3857 = vmatpush1.msra.mxu0 0.0
        %3858 = vmatprep.subr.mxu0 0.0
        %3859 = vmatpush1.msra.mxu0 0.0
        %3860 = vmatprep.subr.mxu0 0.0
        %3861 = vmatpush1.msra.mxu0 0.0
        %3862 = vmatprep.subr.mxu0 0.0
        %3863 = vmatpush1.msra.mxu0 0.0
        %3864 = vmatprep.subr.mxu0 0.0
        %3865 = vmatpush1.msra.mxu0 0.0
        %3866 = vmatprep.subr.mxu0 0.0
        %3867 = vmatpush1.msra.mxu0 0.0
        %3868 = vmatprep.subr.mxu0 0.0
        %3869 = vmatpush1.msra.mxu0 0.0
        %3870 = vmatprep.subr.mxu0 0.0
        %3871 = vmatpush1.msra.mxu0 0.0
        %3872 = vmatprep.subr.mxu0 0.0
        %3873 = vmatpush1.msra.mxu0 0.0
        %3874 = vmatprep.subr.mxu0 0.0
        %3875 = vmatpush1.msra.mxu0 0.0
        %3876 = vmatprep.subr.mxu0 0.0
        %3877 = vmatpush1.msra.mxu0 0.0
        %3878 = vmatprep.subr.mxu0 0.0
        %3879 = vmatpush1.msra.mxu0 %v442
        %3880 = vmatprep.subr.mxu0 0.0
        %3881 = vmatpush2.msra.mxu0 0.0
        %3882 = vmatprep.subr.mxu0 0.0
        %3883 = vmatpush2.msra.mxu0 0.0
        %3884 = vmatprep.subr.mxu0 0.0
        %3885 = vmatpush2.msra.mxu0 0.0
        %3886 = vmatprep.subr.mxu0 0.0
        %3887 = vmatpush2.msra.mxu0 0.0
        %3888 = vmatprep.subr.mxu0 0.0
        %3889 = vmatpush2.msra.mxu0 0.0
        %3890 = vmatprep.subr.mxu0 0.0
        %3891 = vmatpush2.msra.mxu0 0.0
        %3892 = vmatprep.subr.mxu0 0.0
        %3893 = vmatpush2.msra.mxu0 0.0
        %3894 = vmatprep.subr.mxu0 0.0
        %3895 = vmatpush2.msra.mxu0 0.0
        %3896 = vmatprep.subr.mxu0 0.0
        %3897 = vmatpush2.msra.mxu0 0.0
        %3898 = vmatprep.subr.mxu0 0.0
        %3899 = vmatpush2.msra.mxu0 0.0
        %3900 = vmatprep.subr.mxu0 0.0
        %3901 = vmatpush2.msra.mxu0 0.0
        %3902 = vmatprep.subr.mxu0 0.0
        %3903 = vmatpush2.msra.mxu0 0.0
        %3904 = vmatprep.subr.mxu0 0.0
        %3905 = vmatpush2.msra.mxu0 0.0
        %3906 = vmatprep.subr.mxu0 0.0
        %3907 = vmatpush2.msra.mxu0 0.0
        %3908 = vmatprep.subr.mxu0 0.0
        %3909 = vmatpush2.msra.mxu0 0.0
        %3910 = vmatprep.subr.mxu0 0.0
        %3911 = vmatpush2.msra.mxu0 0.0
        %3912 = vmatprep.mubr.f32.mxu0 0.0
        %3913 = vmatmul.mubr.f32.gmra.mxu0 %v3130
        %v3914 = vpop.f32.mrf.mxu0
        %v3915 = vadd.f32 0.0, %v3914
        %v3916 = vpop.f32.mrf.mxu0
        %3917 = vmatprep.mubr.f32.mxu0 0.0
        %3918 = vmatmul.mubr.f32.gmra.mxu0 %v3132
        %v3919 = vpop.f32.mrf.mxu0
        %v3920 = vadd.f32 0.0, %v3919
        %v3921 = vpop.f32.mrf.mxu0
        %3922 = vmatprep.mubr.f32.mxu0 0.0
        %3923 = vmatmul.mubr.f32.gmra.mxu0 %v3134
        %v3924 = vpop.f32.mrf.mxu0
        %v3925 = vadd.f32 0.0, %v3924
        %v3926 = vpop.f32.mrf.mxu0
        %3927 = vmatprep.mubr.f32.mxu0 0.0
        %3928 = vmatmul.mubr.f32.gmra.mxu0 %v3136
        %v3929 = vpop.f32.mrf.mxu0
        %v3930 = vadd.f32 0.0, %v3929
        %v3931 = vpop.f32.mrf.mxu0
        %3932 = vmatprep.mubr.f32.mxu0 0.0
        %3933 = vmatmul.mubr.f32.gmra.mxu0 %v3138
        %v3934 = vpop.f32.mrf.mxu0
        %v3935 = vadd.f32 0.0, %v3934
        %v3936 = vpop.f32.mrf.mxu0
        %3937 = vmatprep.mubr.f32.mxu0 0.0
        %3938 = vmatmul.mubr.f32.gmra.mxu0 %v3140
        %v3939 = vpop.f32.mrf.mxu0
        %v3940 = vadd.f32 0.0, %v3939
        %v3941 = vpop.f32.mrf.mxu0
        %3942 = vmatprep.mubr.f32.mxu0 0.0
        %3943 = vmatmul.mubr.f32.gmra.mxu0 %v3493
        %v3944 = vpop.f32.mrf.mxu0
        %v3945 = vadd.f32 0.0, %v3944
        %v3946 = vpop.f32.mrf.mxu0
        %3947 = vmatprep.mubr.f32.mxu0 0.0
        %3948 = vmatmul.mubr.f32.gmra.mxu0 %v3846
        %v3949 = vpop.f32.mrf.mxu0
        %v3950 = vadd.f32 0.0, %v3949
        %v3951 = vpop.f32.mrf.mxu0
        %3952 = vdwg.mxu0
        %v3953 = vadd.f32 %v3835, %v3915
        %v3954 = vadd.f32 %v3836, %v3920
        %v3955 = vadd.f32 %v3837, %v3925
        %v3956 = vadd.f32 %v3838, %v3930
        %v3957 = vadd.f32 %v3839, %v3935
        %v3958 = vadd.f32 %v3840, %v3940
        %v3959 = vadd.f32 %v3841, %v3945
        %v3960 = vadd.f32 %v3842, %v3950
        %v3961 = vld [vmem:[%s4] sm:$0x1]
        %v3963 = vlaneseq
        %v3964 = vshrl.u32 %v3963, 7
        %v3965 = vsub.s32 0, %v3964
        %v3966 = vrot.slane %v3961, %v3965
        %v3968 = vadd.f32 %v3953, %v3966
        %v3969 = vadd.f32 %v3954, %v3966
        %v3970 = vadd.f32 %v3955, %v3966
        %v3971 = vadd.f32 %v3956, %v3966
        %v3972 = vadd.f32 %v3957, %v3966
        %v3973 = vadd.f32 %v3958, %v3966
        %v3974 = vadd.f32 %v3959, %v3966
        %v3975 = vadd.f32 %v3960, %v3966
        %vm3976 = vcmask 130048
        %3977 = vst.msk [vmem:[%s415] sm:$0xff] %vm3976, %v3968
        %3978 = vst.msk [vmem:[%s415 + $0x8] sm:$0xff] %vm3976, %v3969
        %3979 = vst.msk [vmem:[%s415 + $0x10] sm:$0xff] %vm3976, %v3970
        %3980 = vst.msk [vmem:[%s415 + $0x18] sm:$0xff] %vm3976, %v3971
        %3981 = vst.msk [vmem:[%s415 + $0x20] sm:$0xff] %vm3976, %v3972
        %3982 = vst.msk [vmem:[%s415 + $0x28] sm:$0xff] %vm3976, %v3973
        %3983 = vst.msk [vmem:[%s415 + $0x30] sm:$0xff] %vm3976, %v3974
        %3984 = vst.msk [vmem:[%s415 + $0x38] sm:$0xff] %vm3976, %v3975
        %p3985 = scmp.eq.s32.totalorder %s30, 0
        // Predicated region
        $region41: #{tpu_custom_call.1} parent=39 // pred_check
          %p3986 = pneg %p3985
        $region42: #{tpu_custom_call.1} parent=39 // pred_check_branch
          %3988 = sbr.rel (%p3986) target = $region44
        $region43: #{tpu_custom_call.1} parent=39 // pred_region
          %vm3989 = vcmask 122880
          %3990 = vst.msk [vmem:[%s369] sm:$0x1] %vm3989, 0.0
          %3991 = vst.msk [vmem:[%s375] sm:$0x1] %vm3989, 0.0
        $region44: #{tpu_custom_call.1} parent=39 // pred_fallthru
          _
        %v3992 = vld [vmem:[%s369] sm:$0x1]
        %v3993 = vsel %vm3976, %v3968, 0.0
        %v3994 = vsel %vm3976, %v3969, 0.0
        %v3995 = vadd.f32 %v3993, %v3994
        %v3996 = vsel %vm3976, %v3970, 0.0
        %v3997 = vadd.f32 %v3995, %v3996
        %v3998 = vsel %vm3976, %v3971, 0.0
        %v3999 = vadd.f32 %v3997, %v3998
        %v4000 = vsel %vm3976, %v3972, 0.0
        %v4001 = vadd.f32 %v3999, %v4000
        %v4002 = vsel %vm3976, %v3973, 0.0
        %v4003 = vadd.f32 %v4001, %v4002
        %v4004 = vsel %vm3976, %v3974, 0.0
        %v4005 = vadd.f32 %v4003, %v4004
        %v4006 = vsel %vm3976, %v3975, 0.0
        %v4007 = vadd.f32 %v4005, %v4006
        %v4008 = vrot.slane %v4007, 4
        %v4009 = vadd.f32 %v4007, %v4008
        %v4010 = vrot.slane %v4009, 2
        %v4011 = vadd.f32 %v4009, %v4010
        %v4012 = vrot.slane %v4011, 1
        %v4013 = vadd.f32 %v4011, %v4012
        %v4014 = vadd.f32 %v3992, %v4013
        %vm4015 = vcmask 122880
        %4016 = vst.msk [vmem:[%s369] sm:$0x1] %vm4015, %v4014
        %v4017 = vld [vmem:[%s375] sm:$0x1]
        %v4018 = vmul.f32 %v3968, %v3968
        %v4019 = vmul.f32 %v3969, %v3969
        %v4020 = vmul.f32 %v3970, %v3970
        %v4021 = vmul.f32 %v3971, %v3971
        %v4022 = vmul.f32 %v3972, %v3972
        %v4023 = vmul.f32 %v3973, %v3973
        %v4024 = vmul.f32 %v3974, %v3974
        %v4025 = vmul.f32 %v3975, %v3975
        %v4026 = vsel %vm3976, %v4018, 0.0
        %v4027 = vsel %vm3976, %v4019, 0.0
        %v4028 = vadd.f32 %v4026, %v4027
        %v4029 = vsel %vm3976, %v4020, 0.0
        %v4030 = vadd.f32 %v4028, %v4029
        %v4031 = vsel %vm3976, %v4021, 0.0
        %v4032 = vadd.f32 %v4030, %v4031
        %v4033 = vsel %vm3976, %v4022, 0.0
        %v4034 = vadd.f32 %v4032, %v4033
        %v4035 = vsel %vm3976, %v4023, 0.0
        %v4036 = vadd.f32 %v4034, %v4035
        %v4037 = vsel %vm3976, %v4024, 0.0
        %v4038 = vadd.f32 %v4036, %v4037
        %v4039 = vsel %vm3976, %v4025, 0.0
        %v4040 = vadd.f32 %v4038, %v4039
        %v4041 = vrot.slane %v4040, 4
        %v4042 = vadd.f32 %v4040, %v4041
        %v4043 = vrot.slane %v4042, 2
        %v4044 = vadd.f32 %v4042, %v4043
        %v4045 = vrot.slane %v4044, 1
        %v4046 = vadd.f32 %v4044, %v4045
        %v4047 = vadd.f32 %v4017, %v4046
        %4048 = vst.msk [vmem:[%s375] sm:$0x1] %vm4015, %v4047
        %p4049 = scmp.lt.s32.totalorder %s29, 1
        %s4050 = scalar_select %p4049, %s29, 1
        %p4051 = scmp.lt.s32.totalorder %s30, 7
        %s4052 = scalar_select %p4051, %s30, 7
        %s4053 = smul.addr %s4052, 8
        %s4054 = smul.addr %s4050, 64
        %s4055 = sadd.s32 %s4053, %s4054
        %s4056 = smul.addr %s4055, 8
        %s4057 = scalar_lea.vmem %s5, %s4056
        %s4058 = sand.u32 %s203, 1
        %s4059 = scalar_lea.sflag [#allocation3], %s4058
        %s4060 = sand.u32 %s203, 1
        %s4061 = scalar_lea.vmem [#allocation2], %s4060
        %s4062 = sand.u32 %s229, 1
        %s4063 = scalar_lea.sflag [#allocation5], %s4062
        %s4064 = sand.u32 %s229, 1
        %s4065 = scalar_lea.vmem [#allocation4], %s4064
        // Predicated region
        $region45: #{tpu_custom_call.1} parent=39 // pred_check
          %p4066 = pneg %p187
        $region46: #{tpu_custom_call.1} parent=39 // pred_check_branch
          %4068 = sbr.rel (%p4066) target = $region48
        $region47: #{tpu_custom_call.1} parent=39 // pred_region
          _
        $region48: #{tpu_custom_call.1} parent=39 // pred_fallthru
          _
        // Predicated region
        $region49: #{tpu_custom_call.1} parent=39 // pred_check
          %p4069 = pneg %p213
        $region50: #{tpu_custom_call.1} parent=39 // pred_check_branch
          %4071 = sbr.rel (%p4069) target = $region52
        $region51: #{tpu_custom_call.1} parent=39 // pred_region
          %s4073 = ssub.s32 16, 16
          %4074 = vsyncadd %s4059, %s4073
          %s4075 = smul.addr %s29, 16
          %s4076 = scalar_lea.hbm %s6, %s4075
          %s4078 = sshll.u32 %s4061, 4
          %s4079 = int_to_ptr.vmem [resolvable:$true] %s4078
          %4081 = dma.vmem_to_hbm [thread:$0]  %s4079, 16, %s4076, %s4059
        $region52: #{tpu_custom_call.1} parent=39 // pred_fallthru
          _
        // Predicated region
        $region53: #{tpu_custom_call.1} parent=39 // pred_check
          %p4082 = pneg %p239
        $region54: #{tpu_custom_call.1} parent=39 // pred_check_branch
          %4084 = sbr.rel (%p4082) target = $region56
        $region55: #{tpu_custom_call.1} parent=39 // pred_region
          %s4086 = ssub.s32 16, 16
          %4087 = vsyncadd %s4063, %s4086
          %s4088 = smul.addr %s29, 16
          %s4089 = scalar_lea.hbm %s7, %s4088
          %s4091 = sshll.u32 %s4065, 4
          %s4092 = int_to_ptr.vmem [resolvable:$true] %s4091
          %4094 = dma.vmem_to_hbm [thread:$0]  %s4092, 16, %s4089, %s4063
        $region56: #{tpu_custom_call.1} parent=39 // pred_fallthru
          _
      $region40: #{tpu_custom_call.1} parent=5 // pred_fallthru
        _
      %p4095 = scmp.le.s32.totalorder 2, %s20
      // Predicated region
      $region57: #{tpu_custom_call.1} parent=5 // pred_check
        %p4096 = pneg %p4095
      $region58: #{tpu_custom_call.1} parent=5 // pred_check_branch
        %4098 = sbr.rel (%p4096) target = $region60
      $region59: #{tpu_custom_call.1} parent=5 // pred_region
        %s4099 = ssub.s32 %s20, 2
        // Predicated region
        $region61: #{tpu_custom_call.1} parent=59 // pred_check
          %p4100 = pneg %p193
        $region62: #{tpu_custom_call.1} parent=59 // pred_check_branch
          %4102 = sbr.rel (%p4100) target = $region64
        $region63: #{tpu_custom_call.1} parent=59 // pred_region
          %p4103 = scmp.lt.s32.totalorder %s31, 1
          %s4104 = scalar_select %p4103, %s31, 1
          %p4105 = scmp.lt.s32.totalorder %s32, 7
          %s4106 = scalar_select %p4105, %s32, 7
          %s4107 = smul.addr %s4106, 8
          %s4108 = smul.addr %s4104, 64
          %s4109 = sadd.s32 %s4107, %s4108
          %s4110 = smul.addr %s4109, 8
          %s4111 = scalar_lea.vmem %s5, %s4110
        $region64: #{tpu_custom_call.1} parent=59 // pred_fallthru
          _
        // Predicated region
        $region65: #{tpu_custom_call.1} parent=59 // pred_check
          %p4112 = pneg %p219
        $region66: #{tpu_custom_call.1} parent=59 // pred_check_branch
          %4114 = sbr.rel (%p4112) target = $region68
        $region67: #{tpu_custom_call.1} parent=59 // pred_region
          %s4115 = sand.u32 %s204, 1
          %s4116 = scalar_lea.sflag [#allocation3], %s4115
          %s4117 = sand.u32 %s204, 1
          %s4118 = scalar_lea.vmem [#allocation2], %s4117
          %4119 = dma.done %s4116, 16
        $region68: #{tpu_custom_call.1} parent=59 // pred_fallthru
          _
        // Predicated region
        $region69: #{tpu_custom_call.1} parent=59 // pred_check
          %p4120 = pneg %p245
        $region70: #{tpu_custom_call.1} parent=59 // pred_check_branch
          %4122 = sbr.rel (%p4120) target = $region72
        $region71: #{tpu_custom_call.1} parent=59 // pred_region
          %s4123 = sand.u32 %s230, 1
          %s4124 = scalar_lea.sflag [#allocation5], %s4123
          %s4125 = sand.u32 %s230, 1
          %s4126 = scalar_lea.vmem [#allocation4], %s4125
          %4127 = dma.done %s4124, 16
        $region72: #{tpu_custom_call.1} parent=59 // pred_fallthru
          _
      $region60: #{tpu_custom_call.1} parent=5 // pred_fallthru
        _
    $region6: #{tpu_custom_call.1} parent=1 // loop_footer
      %s24 = sadd.s32 1, %s20
    $region7: #{tpu_custom_call.1} parent=1 // loop_footer_branch
      %19 = sbr.rel target = $region3
    $region8: #{tpu_custom_call.1} parent=1 // loop_exit
      _
    %4128 = vsyncpa [#allocation3], 1
    %s4129 = scalar_lea.sflag [#allocation3], 1
    %4130 = vsyncpa %s4129, 1
    %4131 = vsyncpa [#allocation5], 1
    %s4132 = scalar_lea.sflag [#allocation5], 1
    %4133 = vsyncpa %s4132, 1

</llo_original>
